<compile_context>
chip_gen: v7x
topology: tpu7x:2x2x1
jax: 0.10.0
libtpu: 0.0.40
codegen_flags: <defaults>
</compile_context>

<pallas_src>
import math
from functools import partial

import jax
import jax.numpy as jnp
from jax.experimental import pallas as pl
from jax.experimental.pallas import tpu as pltpu

LN_EPS = 1e-5                      # torch.nn.LayerNorm default
MXU_DTYPE = jnp.bfloat16           # feed the MXU bf16, accumulate in f32
NEG_INF = -1e30                    # finite causal-mask value (safe in f32 softmax)


def _vmem_limit_bytes():
    """Device-aware scoped-VMEM request (64 MiB on 128 MiB parts, 32 MiB on v7x)."""
    try:
        cap = pltpu.get_tpu_info().vmem_capacity_bytes
    except Exception:
        return 32 * 1024 * 1024
    return int(min(cap // 2, 64 * 1024 * 1024))


VMEM_LIMIT = _vmem_limit_bytes()


def _pick_tile(dim, target, mult):
    """Largest tile <= target that divides `dim` and is a multiple of `mult`,
    falling back to the full dimension (always a legal block shape)."""
    if dim <= target:
        return dim
    t = (target // mult) * mult
    while t >= mult:
        if dim % t == 0:
            return t
        t -= mult
    return dim


# --------------------- fused (LN ->) matmul (-> GELU/residual) --------------------- #

def _fused_linear_kernel(*refs, nk, has_ln, has_res, activation, transpose_rhs):
    it = iter(refs)
    x_ref, w_ref, b_ref = next(it), next(it), next(it)
    g_ref = next(it) if has_ln else None
    bt_ref = next(it) if has_ln else None
    r_ref = next(it) if has_res else None
    o_ref = next(it)
    acc_ref = next(it) if nk > 1 else None
    xln_ref = next(it) if has_ln else None

    k = pl.program_id(2)

    if has_ln:
        # LayerNorm prologue computed ONCE per row tile (j == 0, tk == K) and cached
        # as bf16 in VMEM; reused for every N tile of the same row tile.  Requires
        # the j axis to be "arbitrary" (sequential per core) — set by the wrapper.
        j = pl.program_id(1)

        @pl.when(j == 0)
        def _():
            xf = x_ref[...].astype(jnp.float32)
            mu = jnp.mean(xf, axis=-1, keepdims=True)
            var = jnp.mean(jnp.square(xf - mu), axis=-1, keepdims=True)
            xn = (xf - mu) * jax.lax.rsqrt(var + LN_EPS)
            xn = xn * g_ref[...].astype(jnp.float32) + bt_ref[...].astype(jnp.float32)
            xln_ref[...] = xn.astype(MXU_DTYPE)

        xm = xln_ref[...]
    else:
        xm = x_ref[...].astype(MXU_DTYPE)

    wm = w_ref[...].astype(MXU_DTYPE)          # weights already bf16 in HBM (no-op)
    if transpose_rhs:                           # x @ w.T without materializing w.T
        part = jax.lax.dot_general(xm, wm, (((1,), (1,)), ((), ())),
                                   preferred_element_type=jnp.float32)
    else:
        part = jnp.dot(xm, wm, preferred_element_type=jnp.float32)

    def finalize(y):
        y = y + b_ref[...].astype(jnp.float32)
        if activation == "gelu":                # GELU(approximate='tanh') epilogue
            c = math.sqrt(2.0 / math.pi)
            y = 0.5 * y * (1.0 + jnp.tanh(c * (y + 0.044715 * y * y * y)))
        if has_res:                             # residual-add epilogue
            y = y + r_ref[...].astype(jnp.float32)
        o_ref[...] = y.astype(o_ref.dtype)

    if nk == 1:
        # Single K pass: skip the f32 accumulator scratch round-trip entirely.
        finalize(part)
    else:
        @pl.when(k == 0)
        def _():
            acc_ref[...] = jnp.zeros_like(acc_ref)

        acc_ref[...] += part

        @pl.when(k == nk - 1)
        def _():
            finalize(acc_ref[...])


def fused_linear(x, w, b=None, *, ln_g=None, ln_b=None, activation=None,
                 residual=None, transpose_rhs=False,
                 tm_target=256, tn_target=512, tk_target=512):
    M, K = x.shape
    N = w.shape[0] if transpose_rhs else w.shape[1]
    has_ln = ln_g is not None
    has_res = residual is not None
    if b is None:
        b = jnp.zeros((N,), jnp.float32)

    tm = _pick_tile(M, tm_target, 8)
    tn = _pick_tile(N, tn_target, 128)
    # Only the LN prologue needs full rows; residual is finalize-only -> K-tiled.
    tk = K if has_ln else _pick_tile(K, tk_target, 128)
    nk = K // tk
    grid = (M // tm, N // tn, nk)

    in_specs = [pl.BlockSpec((tm, tk), lambda i, j, k: (i, k))]
    if transpose_rhs:
        in_specs.append(pl.BlockSpec((tn, tk), lambda i, j, k: (j, k)))
    else:
        in_specs.append(pl.BlockSpec((tk, tn), lambda i, j, k: (k, j)))
    in_specs.append(pl.BlockSpec((1, tn), lambda i, j, k: (0, j)))
    args = [x, w, b.reshape(1, N)]
    if has_ln:
        in_specs += [pl.BlockSpec((1, tk), lambda i, j, k: (0, k)),
                     pl.BlockSpec((1, tk), lambda i, j, k: (0, k))]
        args += [ln_g.reshape(1, K), ln_b.reshape(1, K)]
    if has_res:
        in_specs.append(pl.BlockSpec((tm, tn), lambda i, j, k: (i, j)))
        args.append(residual)

    scratch = []
    if nk > 1:
        scratch.append(pltpu.VMEM((tm, tn), jnp.float32))
    if has_ln:
        scratch.append(pltpu.VMEM((tm, tk), MXU_DTYPE))

    # LN cache relies on j == 0 being executed before j > 0 on the same core, so the
    # j axis must be "arbitrary" (no megacore split of j) in that case.
    if has_ln:
        dims = ("parallel", "arbitrary", "arbitrary")
    else:
        dims = ("parallel", "parallel", "arbitrary")

    w_bytes = 2 if w.dtype == MXU_DTYPE else 4
    cost = pl.CostEstimate(
        flops=2 * M * N * K,
        transcendentals=M * N if activation == "gelu" else 0,
        bytes_accessed=int(4 * M * K + (M // tm) * K * N * w_bytes
                           + 4 * M * N * (2 if has_res else 1)))

    kernel = partial(_fused_linear_kernel, nk=nk, has_ln=has_ln, has_res=has_res,
                     activation=activation, transpose_rhs=transpose_rhs)
    return pl.pallas_call(
        kernel,
        out_shape=jax.ShapeDtypeStruct((M, N), x.dtype),
        grid=grid,
        in_specs=in_specs,
        out_specs=pl.BlockSpec((tm, tn), lambda i, j, k: (i, j)),
        scratch_shapes=scratch,
        compiler_params=pltpu.CompilerParams(
            dimension_semantics=dims,
            vmem_limit_bytes=VMEM_LIMIT),
        cost_estimate=cost,
    )(*args)


# ----------------------------- flash causal attention ----------------------------- #

def _flash_attn_kernel(q_ref, k_ref, v_ref, o_ref, m_sc, l_sc, acc_sc, *, nk):
    qi = pl.program_id(1)
    ki = pl.program_id(2)

    @pl.when(ki == 0)
    def _():
        m_sc[...] = jnp.full_like(m_sc, -jnp.inf)
        l_sc[...] = jnp.zeros_like(l_sc)
        acc_sc[...] = jnp.zeros_like(acc_sc)

    def update(masked):
        # 1/sqrt(hd) is pre-folded into the Q projection weights at prep time.
        q = q_ref[...].astype(MXU_DTYPE)                                  # (hb,tq,hd)
        k = k_ref[...].astype(MXU_DTYPE)                                  # (hb,tk,hd)
        s = jax.lax.dot_general(q, k, (((2,), (2,)), ((0,), (0,))),
                                preferred_element_type=jnp.float32)       # (hb,tq,tk)
        if masked:
            # Diagonal block only (qi == ki, tq == tk): mask reduces to col <= row.
            row = jax.lax.broadcasted_iota(jnp.int32, s.shape, 1)
            col = jax.lax.broadcasted_iota(jnp.int32, s.shape, 2)
            s = jnp.where(col <= row, s, NEG_INF)

        m_prev = m_sc[...]
        m_new = jnp.maximum(m_prev, jnp.max(s, axis=-1, keepdims=True))
        alpha = jnp.exp(m_prev - m_new)
        p = jnp.exp(s - m_new)
        l_sc[...] = alpha * l_sc[...] + jnp.sum(p, axis=-1, keepdims=True)
        pv = jax.lax.dot_general(p.astype(MXU_DTYPE), v_ref[...].astype(MXU_DTYPE),
                                 (((2,), (1,)), ((0,), (0,))),
                                 preferred_element_type=jnp.float32)      # (hb,tq,hd)
        acc_sc[...] = alpha * acc_sc[...] + pv
        m_sc[...] = m_new

    # Fully-visible blocks: no mask work at all.
    @pl.when(ki < qi)
    def _():
        update(False)

    # Diagonal block: apply the causal mask.
    @pl.when(ki == qi)
    def _():
        update(True)

    # Blocks with ki > qi are skipped entirely (and not re-fetched, see index_map).

    @pl.when(ki == nk - 1)
    def _():
        # Exact normalization, runs once per output tile.
        o_ref[...] = (acc_sc[...] / l_sc[...]).astype(o_ref.dtype)


def _pick_heads_per_block(bh, hd, target=256):
    """Smallest divisor of bh whose fused (heads*hd) width reaches `target` lanes."""
    best = 1
    for d in range(1, bh + 1):
        if bh % d:
            continue
        best = d
        if d * hd >= target:
            break
    return best


def pallas_flash_attention(q, k, v):
    # q, k, v: (B*H, T, hd); q is already scaled by 1/sqrt(hd) via the folded weights.
    BH, T, hd = q.shape
    hb = _pick_heads_per_block(BH, hd)
    tq = _pick_tile(T, 512, 8)
    tk = _pick_tile(T, 512, 8)
    assert tq == tk, "causal block skipping/masking assumes tq == tk"
    nk = T // tk
    grid = (BH // hb, T // tq, nk)

    q_spec = pl.BlockSpec((hb, tq, hd), lambda b, i, j: (b, i, 0))
    # Clamp the K/V block index to the causal diagonal: above-diagonal steps keep the
    # same block index, so Pallas skips the HBM fetch for blocks we never compute.
    kv_spec = pl.BlockSpec((hb, tk, hd), lambda b, i, j: (b, jnp.minimum(j, i), 0))
    o_spec = pl.BlockSpec((hb, tq, hd), lambda b, i, j: (b, i, 0))

    cost = pl.CostEstimate(flops=2 * BH * T * T * hd,          # ~causal-halved 2 matmuls
                           transcendentals=BH * T * T // 2,
                           bytes_accessed=4 * 4 * BH * T * hd)
    kernel = partial(_flash_attn_kernel, nk=nk)
    return pl.pallas_call(
        kernel,
        out_shape=jax.ShapeDtypeStruct((BH, T, hd), q.dtype),
        grid=grid,
        in_specs=[q_spec, kv_spec, kv_spec],
        out_specs=o_spec,
        scratch_shapes=[pltpu.VMEM((hb, tq, 1), jnp.float32),
                        pltpu.VMEM((hb, tq, 1), jnp.float32),
                        pltpu.VMEM((hb, tq, hd), jnp.float32)],
        compiler_params=pltpu.CompilerParams(
            dimension_semantics=("parallel", "parallel", "arbitrary"),
            vmem_limit_bytes=VMEM_LIMIT),
        cost_estimate=cost,
    )(q, k, v)


# ------------------------------- model glue (JAX) --------------------------------- #

def transformer_block(x, p, n_head):
    B, T, C = x.shape
    hd = C // n_head
    x2 = x.reshape(B * T, C)

    # attention branch: LN1 fused into the QKV projection (Q columns pre-scaled)
    qkv = fused_linear(x2, p["attn_w"], p["attn_b"],
                       ln_g=p["ln1_g"], ln_b=p["ln1_b"])                # (B*T, 3C)
    # TODO(synk): the per-head split/merge transposes below are still XLA HBM copies;
    # wiring q/k/v + the attention output through BlockSpecs would remove them.
    qkv = qkv.reshape(B, T, 3, n_head, hd).transpose(2, 0, 3, 1, 4)     # (3,B,H,T,hd)
    q = qkv[0].reshape(B * n_head, T, hd)
    k = qkv[1].reshape(B * n_head, T, hd)
    v = qkv[2].reshape(B * n_head, T, hd)
    y = pallas_flash_attention(q, k, v)                                 # (B*H, T, hd)
    y = y.reshape(B, n_head, T, hd).transpose(0, 2, 1, 3).reshape(B * T, C)
    # output projection with the residual add fused into the epilogue (K-tiled)
    x2 = fused_linear(y, p["proj_w"], p["proj_b"], residual=x2)

    # MLP branch: LN2 fused prologue + GELU fused epilogue; residual fused into mproj
    h = fused_linear(x2, p["fc_w"], p["fc_b"],
                     ln_g=p["ln2_g"], ln_b=p["ln2_b"], activation="gelu")
    x2 = fused_linear(h, p["mproj_w"], p["mproj_b"], residual=x2)
    return x2.reshape(B, T, C)


def gpt_forward(params, idx, n_head):
    # mirrors GPT.forward(idx, targets=None) -> (logits, None); takes PREPARED params
    B, T = idx.shape
    wte, wpe = params["wte"], params["wpe"]
    V, C = wte.shape
    assert T <= wpe.shape[0]

    tok_emb = jnp.take(wte, idx, axis=0).astype(jnp.float32)   # embedding gather (XLA)
    x = tok_emb + wpe[:T][None, :, :]

    for blk in params["blocks"]:
        x = transformer_block(x, blk, n_head)

    # ln_f fused into the weight-tied lm_head; contracts against wte (V, C) directly.
    # TODO(synk): a non-128-divisible vocab (e.g. 50257) falls back to a full-V tile;
    # pad the vocab (as GPT-2 training setups do) for production sizes.
    logits = fused_linear(x.reshape(B * T, C), wte, None,
                          ln_g=params["ln_f_g"], ln_b=params["ln_f_b"],
                          transpose_rhs=True)
    logits = logits.reshape(B, T, V)
    # TODO(synk): cross-entropy loss path (targets is not None) not implemented.
    return logits, None


def init_params(key, cfg):
    V, BS, L, C = cfg["vocab_size"], cfg["block_size"], cfg["n_layer"], cfg["n_embd"]
    std = 0.02
    proj_std = 0.02 * (2 * L) ** (-0.5)   # NANOGPT_SCALE_INIT
    keys = jax.random.split(key, 2 + L)
    wte = std * jax.random.normal(keys[0], (V, C), jnp.float32)
    wpe = std * jax.random.normal(keys[1], (BS, C), jnp.float32)
    blocks = []
    for l in range(L):
        ks = jax.random.split(keys[2 + l], 4)
        blocks.append(dict(
            ln1_g=jnp.ones((C,), jnp.float32), ln1_b=jnp.zeros((C,), jnp.float32),
            attn_w=std * jax.random.normal(ks[0], (C, 3 * C), jnp.float32),
            attn_b=jnp.zeros((3 * C,), jnp.float32),
            proj_w=proj_std * jax.random.normal(ks[1], (C, C), jnp.float32),
            proj_b=jnp.zeros((C,), jnp.float32),
            ln2_g=jnp.ones((C,), jnp.float32), ln2_b=jnp.zeros((C,), jnp.float32),
            fc_w=std * jax.random.normal(ks[2], (C, 4 * C), jnp.float32),
            fc_b=jnp.zeros((4 * C,), jnp.float32),
            mproj_w=proj_std * jax.random.normal(ks[3], (4 * C, C), jnp.float32),
            mproj_b=jnp.zeros((C,), jnp.float32),
        ))
    return dict(wte=wte, wpe=wpe, blocks=blocks,
                ln_f_g=jnp.ones((C,), jnp.float32),
                ln_f_b=jnp.zeros((C,), jnp.float32))


def prepare_params(params, n_head):
    """Kernel-ready params: bf16 weights in HBM, 1/sqrt(hd) folded into Q columns."""
    C = params["wte"].shape[1]
    hd = C // n_head
    scale = 1.0 / math.sqrt(hd)
    blocks = []
    for p in params["blocks"]:
        attn_w = jnp.concatenate([p["attn_w"][:, :C] * scale, p["attn_w"][:, C:]], axis=1)
        attn_b = jnp.concatenate([p["attn_b"][:C] * scale, p["attn_b"][C:]], axis=0)
        blocks.append(dict(
            ln1_g=p["ln1_g"], ln1_b=p["ln1_b"],
            attn_w=attn_w.astype(MXU_DTYPE), attn_b=attn_b,
            proj_w=p["proj_w"].astype(MXU_DTYPE), proj_b=p["proj_b"],
            ln2_g=p["ln2_g"], ln2_b=p["ln2_b"],
            fc_w=p["fc_w"].astype(MXU_DTYPE), fc_b=p["fc_b"],
            mproj_w=p["mproj_w"].astype(MXU_DTYPE), mproj_b=p["mproj_b"],
        ))
    return dict(wte=params["wte"].astype(MXU_DTYPE), wpe=params["wpe"], blocks=blocks,
                ln_f_g=params["ln_f_g"], ln_f_b=params["ln_f_b"])


def _reference_forward(params, idx, n_head):
    # pure-JAX (f32) reference of the same forward pass, for a sanity check
    def ln(x, g, b):
        mu = x.mean(-1, keepdims=True)
        var = ((x - mu) ** 2).mean(-1, keepdims=True)
        return (x - mu) * jax.lax.rsqrt(var + LN_EPS) * g + b

    B, T = idx.shape
    wte, wpe = params["wte"], params["wpe"]
    C = wte.shape[1]
    hd = C // n_head
    x = jnp.take(wte, idx, axis=0) + wpe[:T][None]
    for p in params["blocks"]:
        h = ln(x, p["ln1_g"], p["ln1_b"])
        qkv = h @ p["attn_w"] + p["attn_b"]
        q, k, v = jnp.split(qkv, 3, axis=-1)
        split = lambda t: t.reshape(B, T, n_head, hd).transpose(0, 2, 1, 3)
        q, k, v = split(q), split(k), split(v)
        s = (q @ k.transpose(0, 1, 3, 2)) / math.sqrt(hd)
        mask = jnp.tril(jnp.ones((T, T), bool))
        s = jnp.where(mask[None, None], s, -jnp.inf)
        a = jax.nn.softmax(s, axis=-1)
        y = (a @ v).transpose(0, 2, 1, 3).reshape(B, T, C)
        x = x + y @ p["proj_w"] + p["proj_b"]
        h = ln(x, p["ln2_g"], p["ln2_b"])
        h = h @ p["fc_w"] + p["fc_b"]
        h = 0.5 * h * (1.0 + jnp.tanh(math.sqrt(2.0 / math.pi) * (h + 0.044715 * h ** 3)))
        x = x + h @ p["mproj_w"] + p["mproj_b"]
    x = ln(x, params["ln_f_g"], params["ln_f_b"])
    return x @ wte.T


if __name__ == "__main__":
    cfg = dict(vocab_size=256, block_size=16, n_layer=2, n_head=4, n_embd=32)
    key = jax.random.PRNGKey(0)
    pkey, ikey = jax.random.split(key)
    params = init_params(pkey, cfg)
    prepared = prepare_params(params, cfg["n_head"])

    B, T = 2, 8
    idx = jax.random.randint(ikey, (B, T), 0, cfg["vocab_size"], dtype=jnp.int32)

    fwd = jax.jit(partial(gpt_forward, n_head=cfg["n_head"]))
    logits, loss = fwd(prepared, idx)
    logits = jax.block_until_ready(logits)

    assert logits.shape == (B, T, cfg["vocab_size"])
    assert logits.dtype == jnp.float32
    assert loss is None
    assert bool(jnp.all(jnp.isfinite(logits)))

    ref = _reference_forward(params, idx, cfg["n_head"])
    # bf16 weights + bf16 MXU inputs (f32 accumulation) -> loose but meaningful tolerance
    assert bool(jnp.allclose(logits, ref, atol=2e-2, rtol=2e-2))
    print("KERNEL_OK")
</pallas_src>

<mosaic_0001>
module attributes {stable_mosaic.version = 11 : i64} {
  func.func @_fused_linear_kernel(%arg0: i32, %arg1: i32, %arg2: i32, %arg3: memref<16x32xf32, #tpu.memory_space<vmem>>, %arg4: memref<32x96xbf16, #tpu.memory_space<vmem>>, %arg5: memref<1x96xf32, #tpu.memory_space<vmem>>, %arg6: memref<1x32xf32, #tpu.memory_space<vmem>>, %arg7: memref<1x32xf32, #tpu.memory_space<vmem>>, %arg8: memref<16x96xf32, #tpu.memory_space<vmem>>, %arg9: memref<16x32xbf16, #tpu.memory_space<vmem>>) attributes {dimension_semantics = [#tpu.dimension_semantics<parallel>, #tpu.dimension_semantics<arbitrary>, #tpu.dimension_semantics<arbitrary>], iteration_bounds = array<i64: 1, 1, 1>, scalar_prefetch = 0 : i64, scratch_operands = 1 : i64, tpu.core_type = #tpu.core_type<tc>, window_params = [{transform_indices = @transform_0, window_bounds = array<i64: 16, 32>}, {transform_indices = @transform_1, window_bounds = array<i64: 32, 96>}, {transform_indices = @transform_2, window_bounds = array<i64: 1, 96>}, {transform_indices = @transform_3, window_bounds = array<i64: 1, 32>}, {transform_indices = @transform_4, window_bounds = array<i64: 1, 32>}, {transform_indices = @transform_5, window_bounds = array<i64: 16, 96>}]} {
    %c0_i32 = arith.constant 0 : i32
    %0 = arith.cmpi eq, %arg1, %c0_i32 : i32
    %1 = arith.extui %0 : i1 to i32
    %c0_i32_0 = arith.constant 0 : i32
    %2 = arith.cmpi ne, %1, %c0_i32_0 : i32
    scf.if %2 {
      %c0_8 = arith.constant 0 : index
      %c0_9 = arith.constant 0 : index
      %10 = vector.load %arg3[%c0_8, %c0_9] : memref<16x32xf32, #tpu.memory_space<vmem>>, vector<16x32xf32>
      %cst_10 = arith.constant dense<0.000000e+00> : vector<16xf32>
      %11 = vector.multi_reduction <add>, %10, %cst_10 [1] : vector<16x32xf32> to vector<16xf32>
      %12 = vector.shape_cast %11 : vector<16xf32> to vector<16x1xf32>
      %cst_11 = arith.constant 3.200000e+01 : f32
      %13 = vector.broadcast %cst_11 : f32 to vector<16x1xf32>
      %14 = arith.divf %12, %13 : vector<16x1xf32>
      %15 = vector.broadcast %14 : vector<16x1xf32> to vector<16x32xf32>
      %16 = arith.subf %10, %15 : vector<16x32xf32>
      %17 = arith.mulf %16, %16 : vector<16x32xf32>
      %cst_12 = arith.constant dense<0.000000e+00> : vector<16xf32>
      %18 = vector.multi_reduction <add>, %17, %cst_12 [1] : vector<16x32xf32> to vector<16xf32>
      %19 = vector.shape_cast %18 : vector<16xf32> to vector<16x1xf32>
      %cst_13 = arith.constant 3.200000e+01 : f32
      %20 = vector.broadcast %cst_13 : f32 to vector<16x1xf32>
      %21 = arith.divf %19, %20 : vector<16x1xf32>
      %22 = vector.broadcast %14 : vector<16x1xf32> to vector<16x32xf32>
      %23 = arith.subf %10, %22 : vector<16x32xf32>
      %cst_14 = arith.constant 9.99999974E-6 : f32
      %24 = vector.broadcast %cst_14 : f32 to vector<16x1xf32>
      %25 = arith.addf %21, %24 : vector<16x1xf32>
      %26 = math.rsqrt %25 : vector<16x1xf32>
      %27 = vector.broadcast %26 : vector<16x1xf32> to vector<16x32xf32>
      %28 = arith.mulf %23, %27 : vector<16x32xf32>
      %c0_15 = arith.constant 0 : index
      %c0_16 = arith.constant 0 : index
      %29 = vector.load %arg6[%c0_15, %c0_16] : memref<1x32xf32, #tpu.memory_space<vmem>>, vector<1x32xf32>
      %30 = vector.broadcast %29 : vector<1x32xf32> to vector<16x32xf32>
      %31 = arith.mulf %28, %30 : vector<16x32xf32>
      %c0_17 = arith.constant 0 : index
      %c0_18 = arith.constant 0 : index
      %32 = vector.load %arg7[%c0_17, %c0_18] : memref<1x32xf32, #tpu.memory_space<vmem>>, vector<1x32xf32>
      %33 = vector.broadcast %32 : vector<1x32xf32> to vector<16x32xf32>
      %34 = arith.addf %31, %33 : vector<16x32xf32>
      %35 = arith.truncf %34 : vector<16x32xf32> to vector<16x32xbf16>
      %c0_19 = arith.constant 0 : index
      %c0_20 = arith.constant 0 : index
      %36 = vector.load %arg9[%c0_19, %c0_20] : memref<16x32xbf16, #tpu.memory_space<vmem>>, vector<16x32xbf16>
      tpu.vector_store %arg9[%c0_19, %c0_20], %35 {strides = array<i32>} : memref<16x32xbf16, #tpu.memory_space<vmem>>, vector<16x32xbf16>,
    } else {
    }
    %c0 = arith.constant 0 : index
    %c0_1 = arith.constant 0 : index
    %3 = vector.load %arg9[%c0, %c0_1] : memref<16x32xbf16, #tpu.memory_space<vmem>>, vector<16x32xbf16>
    %c0_2 = arith.constant 0 : index
    %c0_3 = arith.constant 0 : index
    %4 = vector.load %arg4[%c0_2, %c0_3] : memref<32x96xbf16, #tpu.memory_space<vmem>>, vector<32x96xbf16>
    %cst = arith.constant dense<0.000000e+00> : vector<16x96xf32>
    %5 = tpu.matmul %3, %4, %cst {dimension_numbers = #tpu.dot_dimension_numbers<[1], [0], [0], [1], [0, 0, 1, 1], [], []>} : vector<16x32xbf16>, vector<32x96xbf16>, vector<16x96xf32> -> vector<16x96xf32>
    %c0_4 = arith.constant 0 : index
    %c0_5 = arith.constant 0 : index
    %6 = vector.load %arg5[%c0_4, %c0_5] : memref<1x96xf32, #tpu.memory_space<vmem>>, vector<1x96xf32>
    %7 = vector.broadcast %6 : vector<1x96xf32> to vector<16x96xf32>
    %8 = arith.addf %5, %7 : vector<16x96xf32>
    %c0_6 = arith.constant 0 : index
    %c0_7 = arith.constant 0 : index
    %9 = vector.load %arg8[%c0_6, %c0_7] : memref<16x96xf32, #tpu.memory_space<vmem>>, vector<16x96xf32>
    tpu.vector_store %arg8[%c0_6, %c0_7], %8 {strides = array<i32>} : memref<16x96xf32, #tpu.memory_space<vmem>>, vector<16x96xf32>,
    return
  }
  func.func @transform_0(%arg0: i32, %arg1: i32, %arg2: i32) -> (i32, i32) {
    %c0_i32 = arith.constant 0 : i32
    return %arg0, %arg2 : i32, i32
  }
  func.func @transform_1(%arg0: i32, %arg1: i32, %arg2: i32) -> (i32, i32) {
    %c0_i32 = arith.constant 0 : i32
    return %arg2, %arg1 : i32, i32
  }
  func.func @transform_2(%arg0: i32, %arg1: i32, %arg2: i32) -> (i32, i32) {
    %c0_i32 = arith.constant 0 : i32
    %c0_i32_0 = arith.constant 0 : i32
    return %c0_i32, %arg1 : i32, i32
  }
  func.func @transform_3(%arg0: i32, %arg1: i32, %arg2: i32) -> (i32, i32) {
    %c0_i32 = arith.constant 0 : i32
    %c0_i32_0 = arith.constant 0 : i32
    return %c0_i32, %arg2 : i32, i32
  }
  func.func @transform_4(%arg0: i32, %arg1: i32, %arg2: i32) -> (i32, i32) {
    %c0_i32 = arith.constant 0 : i32
    %c0_i32_0 = arith.constant 0 : i32
    return %c0_i32, %arg2 : i32, i32
  }
  func.func @transform_5(%arg0: i32, %arg1: i32, %arg2: i32) -> (i32, i32) {
    %c0_i32 = arith.constant 0 : i32
    return %arg0, %arg1 : i32, i32
  }
}

module attributes {stable_mosaic.version = 11 : i64} {
  func.func @_flash_attn_kernel(%arg0: i32, %arg1: i32, %arg2: i32, %arg3: memref<8x8x8xf32, #tpu.memory_space<vmem>>, %arg4: memref<8x8x8xf32, #tpu.memory_space<vmem>>, %arg5: memref<8x8x8xf32, #tpu.memory_space<vmem>>, %arg6: memref<8x8x8xf32, #tpu.memory_space<vmem>>, %arg7: memref<8x8x1xf32, #tpu.memory_space<vmem>>, %arg8: memref<8x8x1xf32, #tpu.memory_space<vmem>>, %arg9: memref<8x8x8xf32, #tpu.memory_space<vmem>>) attributes {dimension_semantics = [#tpu.dimension_semantics<parallel>, #tpu.dimension_semantics<parallel>, #tpu.dimension_semantics<arbitrary>], iteration_bounds = array<i64: 1, 1, 1>, scalar_prefetch = 0 : i64, scratch_operands = 3 : i64, tpu.core_type = #tpu.core_type<tc>, window_params = [{transform_indices = @transform_0, window_bounds = array<i64: 8, 8, 8>}, {transform_indices = @transform_1, window_bounds = array<i64: 8, 8, 8>}, {transform_indices = @transform_2, window_bounds = array<i64: 8, 8, 8>}, {transform_indices = @transform_3, window_bounds = array<i64: 8, 8, 8>}]} {
    %c0_i32 = arith.constant 0 : i32
    %0 = arith.cmpi eq, %arg2, %c0_i32 : i32
    %1 = arith.extui %0 : i1 to i32
    %c0_i32_0 = arith.constant 0 : i32
    %2 = arith.cmpi ne, %1, %c0_i32_0 : i32
    scf.if %2 {
      %cst = arith.constant 0xFF800000 : f32
      %12 = vector.broadcast %cst : f32 to vector<8x8x1xf32>
      %c0 = arith.constant 0 : index
      %c0_5 = arith.constant 0 : index
      %c0_6 = arith.constant 0 : index
      %13 = vector.load %arg7[%c0, %c0_5, %c0_6] : memref<8x8x1xf32, #tpu.memory_space<vmem>>, vector<8x8x1xf32>
      tpu.vector_store %arg7[%c0, %c0_5, %c0_6], %12 {strides = array<i32>} : memref<8x8x1xf32, #tpu.memory_space<vmem>>, vector<8x8x1xf32>,
      %cst_7 = arith.constant 0.000000e+00 : f32
      %14 = vector.broadcast %cst_7 : f32 to vector<8x8x1xf32>
      %c0_8 = arith.constant 0 : index
      %c0_9 = arith.constant 0 : index
      %c0_10 = arith.constant 0 : index
      %15 = vector.load %arg8[%c0_8, %c0_9, %c0_10] : memref<8x8x1xf32, #tpu.memory_space<vmem>>, vector<8x8x1xf32>
      tpu.vector_store %arg8[%c0_8, %c0_9, %c0_10], %14 {strides = array<i32>} : memref<8x8x1xf32, #tpu.memory_space<vmem>>, vector<8x8x1xf32>,
      %cst_11 = arith.constant 0.000000e+00 : f32
      %16 = vector.broadcast %cst_11 : f32 to vector<8x8x8xf32>
      %c0_12 = arith.constant 0 : index
      %c0_13 = arith.constant 0 : index
      %c0_14 = arith.constant 0 : index
      %17 = vector.load %arg9[%c0_12, %c0_13, %c0_14] : memref<8x8x8xf32, #tpu.memory_space<vmem>>, vector<8x8x8xf32>
      tpu.vector_store %arg9[%c0_12, %c0_13, %c0_14], %16 {strides = array<i32>} : memref<8x8x8xf32, #tpu.memory_space<vmem>>, vector<8x8x8xf32>,
    } else {
    }
    %3 = arith.cmpi slt, %arg2, %arg1 : i32
    %4 = arith.extui %3 : i1 to i32
    %c0_i32_1 = arith.constant 0 : i32
    %5 = arith.cmpi ne, %4, %c0_i32_1 : i32
    scf.if %5 {
      %c0 = arith.constant 0 : index
      %c0_5 = arith.constant 0 : index
      %c0_6 = arith.constant 0 : index
      %12 = vector.load %arg3[%c0, %c0_5, %c0_6] : memref<8x8x8xf32, #tpu.memory_space<vmem>>, vector<8x8x8xf32>
      %13 = arith.truncf %12 : vector<8x8x8xf32> to vector<8x8x8xbf16>
      %c0_7 = arith.constant 0 : index
      %c0_8 = arith.constant 0 : index
      %c0_9 = arith.constant 0 : index
      %14 = vector.load %arg4[%c0_7, %c0_8, %c0_9] : memref<8x8x8xf32, #tpu.memory_space<vmem>>, vector<8x8x8xf32>
      %15 = arith.truncf %14 : vector<8x8x8xf32> to vector<8x8x8xbf16>
      %cst = arith.constant dense<0.000000e+00> : vector<8x8x8xf32>
      %16 = tpu.matmul %13, %15, %cst {dimension_numbers = #tpu.dot_dimension_numbers<[2], [2], [1], [1], [0, 0, 0, 1, 1, 1], [0], [0]>} : vector<8x8x8xbf16>, vector<8x8x8xbf16>, vector<8x8x8xf32> -> vector<8x8x8xf32>
      %c0_10 = arith.constant 0 : index
      %c0_11 = arith.constant 0 : index
      %c0_12 = arith.constant 0 : index
      %17 = vector.load %arg7[%c0_10, %c0_11, %c0_12] : memref<8x8x1xf32, #tpu.memory_space<vmem>>, vector<8x8x1xf32>
      %cst_13 = arith.constant dense<0xFF800000> : vector<8x8xf32>
      %18 = vector.multi_reduction <maximumf>, %16, %cst_13 [2] : vector<8x8x8xf32> to vector<8x8xf32>
      %19 = vector.shape_cast %18 : vector<8x8xf32> to vector<8x8x1xf32>
      %20 = arith.maximumf %17, %19 : vector<8x8x1xf32>
      %21 = arith.subf %17, %20 : vector<8x8x1xf32>
      %22 = math.exp %21 : vector<8x8x1xf32>
      %23 = vector.broadcast %20 : vector<8x8x1xf32> to vector<8x8x8xf32>
      %24 = arith.subf %16, %23 : vector<8x8x8xf32>
      %25 = math.exp %24 : vector<8x8x8xf32>
      %c0_14 = arith.constant 0 : index
      %c0_15 = arith.constant 0 : index
      %c0_16 = arith.constant 0 : index
      %26 = vector.load %arg8[%c0_14, %c0_15, %c0_16] : memref<8x8x1xf32, #tpu.memory_space<vmem>>, vector<8x8x1xf32>
      %27 = arith.mulf %22, %26 : vector<8x8x1xf32>
      %cst_17 = arith.constant dense<0.000000e+00> : vector<8x8xf32>
      %28 = vector.multi_reduction <add>, %25, %cst_17 [2] : vector<8x8x8xf32> to vector<8x8xf32>
      %29 = vector.shape_cast %28 : vector<8x8xf32> to vector<8x8x1xf32>
      %30 = arith.addf %27, %29 : vector<8x8x1xf32>
      %c0_18 = arith.constant 0 : index
      %c0_19 = arith.constant 0 : index
      %c0_20 = arith.constant 0 : index
      %31 = vector.load %arg8[%c0_18, %c0_19, %c0_20] : memref<8x8x1xf32, #tpu.memory_space<vmem>>, vector<8x8x1xf32>
      tpu.vector_store %arg8[%c0_18, %c0_19, %c0_20], %30 {strides = array<i32>} : memref<8x8x1xf32, #tpu.memory_space<vmem>>, vector<8x8x1xf32>,
      %32 = arith.truncf %25 : vector<8x8x8xf32> to vector<8x8x8xbf16>
      %c0_21 = arith.constant 0 : index
      %c0_22 = arith.constant 0 : index
      %c0_23 = arith.constant 0 : index
      %33 = vector.load %arg5[%c0_21, %c0_22, %c0_23] : memref<8x8x8xf32, #tpu.memory_space<vmem>>, vector<8x8x8xf32>
      %34 = arith.truncf %33 : vector<8x8x8xf32> to vector<8x8x8xbf16>
      %cst_24 = arith.constant dense<0.000000e+00> : vector<8x8x8xf32>
      %35 = tpu.matmul %32, %34, %cst_24 {dimension_numbers = #tpu.dot_dimension_numbers<[2], [1], [1], [2], [0, 0, 0, 1, 1, 2], [0], [0]>} : vector<8x8x8xbf16>, vector<8x8x8xbf16>, vector<8x8x8xf32> -> vector<8x8x8xf32>
      %c0_25 = arith.constant 0 : index
      %c0_26 = arith.constant 0 : index
      %c0_27 = arith.constant 0 : index
      %36 = vector.load %arg9[%c0_25, %c0_26, %c0_27] : memref<8x8x8xf32, #tpu.memory_space<vmem>>, vector<8x8x8xf32>
      %37 = vector.broadcast %22 : vector<8x8x1xf32> to vector<8x8x8xf32>
      %38 = arith.mulf %37, %36 : vector<8x8x8xf32>
      %39 = arith.addf %38, %35 : vector<8x8x8xf32>
      %c0_28 = arith.constant 0 : index
      %c0_29 = arith.constant 0 : index
      %c0_30 = arith.constant 0 : index
      %40 = vector.load %arg9[%c0_28, %c0_29, %c0_30] : memref<8x8x8xf32, #tpu.memory_space<vmem>>, vector<8x8x8xf32>
      tpu.vector_store %arg9[%c0_28, %c0_29, %c0_30], %39 {strides = array<i32>} : memref<8x8x8xf32, #tpu.memory_space<vmem>>, vector<8x8x8xf32>,
      %c0_31 = arith.constant 0 : index
      %c0_32 = arith.constant 0 : index
      %c0_33 = arith.constant 0 : index
      %41 = vector.load %arg7[%c0_31, %c0_32, %c0_33] : memref<8x8x1xf32, #tpu.memory_space<vmem>>, vector<8x8x1xf32>
      tpu.vector_store %arg7[%c0_31, %c0_32, %c0_33], %20 {strides = array<i32>} : memref<8x8x1xf32, #tpu.memory_space<vmem>>, vector<8x8x1xf32>,
    } else {
    }
    %6 = arith.cmpi eq, %arg2, %arg1 : i32
    %7 = arith.extui %6 : i1 to i32
    %c0_i32_2 = arith.constant 0 : i32
    %8 = arith.cmpi ne, %7, %c0_i32_2 : i32
    scf.if %8 {
      %c0 = arith.constant 0 : index
      %c0_5 = arith.constant 0 : index
      %c0_6 = arith.constant 0 : index
      %12 = vector.load %arg3[%c0, %c0_5, %c0_6] : memref<8x8x8xf32, #tpu.memory_space<vmem>>, vector<8x8x8xf32>
      %13 = arith.truncf %12 : vector<8x8x8xf32> to vector<8x8x8xbf16>
      %c0_7 = arith.constant 0 : index
      %c0_8 = arith.constant 0 : index
      %c0_9 = arith.constant 0 : index
      %14 = vector.load %arg4[%c0_7, %c0_8, %c0_9] : memref<8x8x8xf32, #tpu.memory_space<vmem>>, vector<8x8x8xf32>
      %15 = arith.truncf %14 : vector<8x8x8xf32> to vector<8x8x8xbf16>
      %cst = arith.constant dense<0.000000e+00> : vector<8x8x8xf32>
      %16 = tpu.matmul %13, %15, %cst {dimension_numbers = #tpu.dot_dimension_numbers<[2], [2], [1], [1], [0, 0, 0, 1, 1, 1], [0], [0]>} : vector<8x8x8xbf16>, vector<8x8x8xbf16>, vector<8x8x8xf32> -> vector<8x8x8xf32>
      %17 = tpu.iota {dimensions = array<i32: 1>} : vector<8x8x8xi32>
      %18 = tpu.iota {dimensions = array<i32: 2>} : vector<8x8x8xi32>
      %19 = arith.cmpi sle, %18, %17 : vector<8x8x8xi32>
      %cst_10 = arith.constant -1.000000e+30 : f32
      %20 = vector.broadcast %cst_10 : f32 to vector<8x8x8xf32>
      %21 = arith.select %19, %16, %20 : vector<8x8x8xi1>, vector<8x8x8xf32>
      %c0_11 = arith.constant 0 : index
      %c0_12 = arith.constant 0 : index
      %c0_13 = arith.constant 0 : index
      %22 = vector.load %arg7[%c0_11, %c0_12, %c0_13] : memref<8x8x1xf32, #tpu.memory_space<vmem>>, vector<8x8x1xf32>
      %cst_14 = arith.constant dense<0xFF800000> : vector<8x8xf32>
      %23 = vector.multi_reduction <maximumf>, %21, %cst_14 [2] : vector<8x8x8xf32> to vector<8x8xf32>
      %24 = vector.shape_cast %23 : vector<8x8xf32> to vector<8x8x1xf32>
      %25 = arith.maximumf %22, %24 : vector<8x8x1xf32>
      %26 = arith.subf %22, %25 : vector<8x8x1xf32>
      %27 = math.exp %26 : vector<8x8x1xf32>
      %28 = vector.broadcast %25 : vector<8x8x1xf32> to vector<8x8x8xf32>
      %29 = arith.subf %21, %28 : vector<8x8x8xf32>
      %30 = math.exp %29 : vector<8x8x8xf32>
      %c0_15 = arith.constant 0 : index
      %c0_16 = arith.constant 0 : index
      %c0_17 = arith.constant 0 : index
      %31 = vector.load %arg8[%c0_15, %c0_16, %c0_17] : memref<8x8x1xf32, #tpu.memory_space<vmem>>, vector<8x8x1xf32>
      %32 = arith.mulf %27, %31 : vector<8x8x1xf32>
      %cst_18 = arith.constant dense<0.000000e+00> : vector<8x8xf32>
      %33 = vector.multi_reduction <add>, %30, %cst_18 [2] : vector<8x8x8xf32> to vector<8x8xf32>
      %34 = vector.shape_cast %33 : vector<8x8xf32> to vector<8x8x1xf32>
      %35 = arith.addf %32, %34 : vector<8x8x1xf32>
      %c0_19 = arith.constant 0 : index
      %c0_20 = arith.constant 0 : index
      %c0_21 = arith.constant 0 : index
      %36 = vector.load %arg8[%c0_19, %c0_20, %c0_21] : memref<8x8x1xf32, #tpu.memory_space<vmem>>, vector<8x8x1xf32>
      tpu.vector_store %arg8[%c0_19, %c0_20, %c0_21], %35 {strides = array<i32>} : memref<8x8x1xf32, #tpu.memory_space<vmem>>, vector<8x8x1xf32>,
      %37 = arith.truncf %30 : vector<8x8x8xf32> to vector<8x8x8xbf16>
      %c0_22 = arith.constant 0 : index
      %c0_23 = arith.constant 0 : index
      %c0_24 = arith.constant 0 : index
      %38 = vector.load %arg5[%c0_22, %c0_23, %c0_24] : memref<8x8x8xf32, #tpu.memory_space<vmem>>, vector<8x8x8xf32>
      %39 = arith.truncf %38 : vector<8x8x8xf32> to vector<8x8x8xbf16>
      %cst_25 = arith.constant dense<0.000000e+00> : vector<8x8x8xf32>
      %40 = tpu.matmul %37, %39, %cst_25 {dimension_numbers = #tpu.dot_dimension_numbers<[2], [1], [1], [2], [0, 0, 0, 1, 1, 2], [0], [0]>} : vector<8x8x8xbf16>, vector<8x8x8xbf16>, vector<8x8x8xf32> -> vector<8x8x8xf32>
      %c0_26 = arith.constant 0 : index
      %c0_27 = arith.constant 0 : index
      %c0_28 = arith.constant 0 : index
      %41 = vector.load %arg9[%c0_26, %c0_27, %c0_28] : memref<8x8x8xf32, #tpu.memory_space<vmem>>, vector<8x8x8xf32>
      %42 = vector.broadcast %27 : vector<8x8x1xf32> to vector<8x8x8xf32>
      %43 = arith.mulf %42, %41 : vector<8x8x8xf32>
      %44 = arith.addf %43, %40 : vector<8x8x8xf32>
      %c0_29 = arith.constant 0 : index
      %c0_30 = arith.constant 0 : index
      %c0_31 = arith.constant 0 : index
      %45 = vector.load %arg9[%c0_29, %c0_30, %c0_31] : memref<8x8x8xf32, #tpu.memory_space<vmem>>, vector<8x8x8xf32>
      tpu.vector_store %arg9[%c0_29, %c0_30, %c0_31], %44 {strides = array<i32>} : memref<8x8x8xf32, #tpu.memory_space<vmem>>, vector<8x8x8xf32>,
      %c0_32 = arith.constant 0 : index
      %c0_33 = arith.constant 0 : index
      %c0_34 = arith.constant 0 : index
      %46 = vector.load %arg7[%c0_32, %c0_33, %c0_34] : memref<8x8x1xf32, #tpu.memory_space<vmem>>, vector<8x8x1xf32>
      tpu.vector_store %arg7[%c0_32, %c0_33, %c0_34], %25 {strides = array<i32>} : memref<8x8x1xf32, #tpu.memory_space<vmem>>, vector<8x8x1xf32>,
    } else {
    }
    %c0_i32_3 = arith.constant 0 : i32
    %9 = arith.cmpi eq, %arg2, %c0_i32_3 : i32
    %10 = arith.extui %9 : i1 to i32
    %c0_i32_4 = arith.constant 0 : i32
    %11 = arith.cmpi ne, %10, %c0_i32_4 : i32
    scf.if %11 {
      %c0 = arith.constant 0 : index
      %c0_5 = arith.constant 0 : index
      %c0_6 = arith.constant 0 : index
      %12 = vector.load %arg9[%c0, %c0_5, %c0_6] : memref<8x8x8xf32, #tpu.memory_space<vmem>>, vector<8x8x8xf32>
      %c0_7 = arith.constant 0 : index
      %c0_8 = arith.constant 0 : index
      %c0_9 = arith.constant 0 : index
      %13 = vector.load %arg8[%c0_7, %c0_8, %c0_9] : memref<8x8x1xf32, #tpu.memory_space<vmem>>, vector<8x8x1xf32>
      %14 = vector.broadcast %13 : vector<8x8x1xf32> to vector<8x8x8xf32>
      %15 = arith.divf %12, %14 : vector<8x8x8xf32>
      %c0_10 = arith.constant 0 : index
      %c0_11 = arith.constant 0 : index
      %c0_12 = arith.constant 0 : index
      %16 = vector.load %arg6[%c0_10, %c0_11, %c0_12] : memref<8x8x8xf32, #tpu.memory_space<vmem>>, vector<8x8x8xf32>
      tpu.vector_store %arg6[%c0_10, %c0_11, %c0_12], %15 {strides = array<i32>} : memref<8x8x8xf32, #tpu.memory_space<vmem>>, vector<8x8x8xf32>,
    } else {
    }
    return
  }
  func.func @transform_0(%arg0: i32, %arg1: i32, %arg2: i32) -> (i32, i32, i32) {
    %c0_i32 = arith.constant 0 : i32
    %c0_i32_0 = arith.constant 0 : i32
    return %arg0, %arg1, %c0_i32 : i32, i32, i32
  }
  func.func @transform_1(%arg0: i32, %arg1: i32, %arg2: i32) -> (i32, i32, i32) {
    %0 = arith.minsi %arg2, %arg1 : i32
    %c0_i32 = arith.constant 0 : i32
    %c0_i32_0 = arith.constant 0 : i32
    return %arg0, %0, %c0_i32 : i32, i32, i32
  }
  func.func @transform_2(%arg0: i32, %arg1: i32, %arg2: i32) -> (i32, i32, i32) {
    %0 = arith.minsi %arg2, %arg1 : i32
    %c0_i32 = arith.constant 0 : i32
    %c0_i32_0 = arith.constant 0 : i32
    return %arg0, %0, %c0_i32 : i32, i32, i32
  }
  func.func @transform_3(%arg0: i32, %arg1: i32, %arg2: i32) -> (i32, i32, i32) {
    %c0_i32 = arith.constant 0 : i32
    %c0_i32_0 = arith.constant 0 : i32
    return %arg0, %arg1, %c0_i32 : i32, i32, i32
  }
}

module attributes {stable_mosaic.version = 11 : i64} {
  func.func @_fused_linear_kernel(%arg0: i32, %arg1: i32, %arg2: i32, %arg3: memref<16x32xf32, #tpu.memory_space<vmem>>, %arg4: memref<32x128xbf16, #tpu.memory_space<vmem>>, %arg5: memref<1x128xf32, #tpu.memory_space<vmem>>, %arg6: memref<1x32xf32, #tpu.memory_space<vmem>>, %arg7: memref<1x32xf32, #tpu.memory_space<vmem>>, %arg8: memref<16x128xf32, #tpu.memory_space<vmem>>, %arg9: memref<16x32xbf16, #tpu.memory_space<vmem>>) attributes {dimension_semantics = [#tpu.dimension_semantics<parallel>, #tpu.dimension_semantics<arbitrary>, #tpu.dimension_semantics<arbitrary>], iteration_bounds = array<i64: 1, 1, 1>, scalar_prefetch = 0 : i64, scratch_operands = 1 : i64, tpu.core_type = #tpu.core_type<tc>, window_params = [{transform_indices = @transform_0, window_bounds = array<i64: 16, 32>}, {transform_indices = @transform_1, window_bounds = array<i64: 32, 128>}, {transform_indices = @transform_2, window_bounds = array<i64: 1, 128>}, {transform_indices = @transform_3, window_bounds = array<i64: 1, 32>}, {transform_indices = @transform_4, window_bounds = array<i64: 1, 32>}, {transform_indices = @transform_5, window_bounds = array<i64: 16, 128>}]} {
    %c0_i32 = arith.constant 0 : i32
    %0 = arith.cmpi eq, %arg1, %c0_i32 : i32
    %1 = arith.extui %0 : i1 to i32
    %c0_i32_0 = arith.constant 0 : i32
    %2 = arith.cmpi ne, %1, %c0_i32_0 : i32
    scf.if %2 {
      %c0_12 = arith.constant 0 : index
      %c0_13 = arith.constant 0 : index
      %23 = vector.load %arg3[%c0_12, %c0_13] : memref<16x32xf32, #tpu.memory_space<vmem>>, vector<16x32xf32>
      %cst_14 = arith.constant dense<0.000000e+00> : vector<16xf32>
      %24 = vector.multi_reduction <add>, %23, %cst_14 [1] : vector<16x32xf32> to vector<16xf32>
      %25 = vector.shape_cast %24 : vector<16xf32> to vector<16x1xf32>
      %cst_15 = arith.constant 3.200000e+01 : f32
      %26 = vector.broadcast %cst_15 : f32 to vector<16x1xf32>
      %27 = arith.divf %25, %26 : vector<16x1xf32>
      %28 = vector.broadcast %27 : vector<16x1xf32> to vector<16x32xf32>
      %29 = arith.subf %23, %28 : vector<16x32xf32>
      %30 = arith.mulf %29, %29 : vector<16x32xf32>
      %cst_16 = arith.constant dense<0.000000e+00> : vector<16xf32>
      %31 = vector.multi_reduction <add>, %30, %cst_16 [1] : vector<16x32xf32> to vector<16xf32>
      %32 = vector.shape_cast %31 : vector<16xf32> to vector<16x1xf32>
      %cst_17 = arith.constant 3.200000e+01 : f32
      %33 = vector.broadcast %cst_17 : f32 to vector<16x1xf32>
      %34 = arith.divf %32, %33 : vector<16x1xf32>
      %35 = vector.broadcast %27 : vector<16x1xf32> to vector<16x32xf32>
      %36 = arith.subf %23, %35 : vector<16x32xf32>
      %cst_18 = arith.constant 9.99999974E-6 : f32
      %37 = vector.broadcast %cst_18 : f32 to vector<16x1xf32>
      %38 = arith.addf %34, %37 : vector<16x1xf32>
      %39 = math.rsqrt %38 : vector<16x1xf32>
      %40 = vector.broadcast %39 : vector<16x1xf32> to vector<16x32xf32>
      %41 = arith.mulf %36, %40 : vector<16x32xf32>
      %c0_19 = arith.constant 0 : index
      %c0_20 = arith.constant 0 : index
      %42 = vector.load %arg6[%c0_19, %c0_20] : memref<1x32xf32, #tpu.memory_space<vmem>>, vector<1x32xf32>
      %43 = vector.broadcast %42 : vector<1x32xf32> to vector<16x32xf32>
      %44 = arith.mulf %41, %43 : vector<16x32xf32>
      %c0_21 = arith.constant 0 : index
      %c0_22 = arith.constant 0 : index
      %45 = vector.load %arg7[%c0_21, %c0_22] : memref<1x32xf32, #tpu.memory_space<vmem>>, vector<1x32xf32>
      %46 = vector.broadcast %45 : vector<1x32xf32> to vector<16x32xf32>
      %47 = arith.addf %44, %46 : vector<16x32xf32>
      %48 = arith.truncf %47 : vector<16x32xf32> to vector<16x32xbf16>
      %c0_23 = arith.constant 0 : index
      %c0_24 = arith.constant 0 : index
      %49 = vector.load %arg9[%c0_23, %c0_24] : memref<16x32xbf16, #tpu.memory_space<vmem>>, vector<16x32xbf16>
      tpu.vector_store %arg9[%c0_23, %c0_24], %48 {strides = array<i32>} : memref<16x32xbf16, #tpu.memory_space<vmem>>, vector<16x32xbf16>,
    } else {
    }
    %c0 = arith.constant 0 : index
    %c0_1 = arith.constant 0 : index
    %3 = vector.load %arg9[%c0, %c0_1] : memref<16x32xbf16, #tpu.memory_space<vmem>>, vector<16x32xbf16>
    %c0_2 = arith.constant 0 : index
    %c0_3 = arith.constant 0 : index
    %4 = vector.load %arg4[%c0_2, %c0_3] : memref<32x128xbf16, #tpu.memory_space<vmem>>, vector<32x128xbf16>
    %cst = arith.constant dense<0.000000e+00> : vector<16x128xf32>
    %5 = tpu.matmul %3, %4, %cst {dimension_numbers = #tpu.dot_dimension_numbers<[1], [0], [0], [1], [0, 0, 1, 1], [], []>} : vector<16x32xbf16>, vector<32x128xbf16>, vector<16x128xf32> -> vector<16x128xf32>
    %c0_4 = arith.constant 0 : index
    %c0_5 = arith.constant 0 : index
    %6 = vector.load %arg5[%c0_4, %c0_5] : memref<1x128xf32, #tpu.memory_space<vmem>>, vector<1x128xf32>
    %7 = vector.broadcast %6 : vector<1x128xf32> to vector<16x128xf32>
    %8 = arith.addf %5, %7 : vector<16x128xf32>
    %cst_6 = arith.constant 5.000000e-01 : f32
    %9 = vector.broadcast %cst_6 : f32 to vector<16x128xf32>
    %10 = arith.mulf %9, %8 : vector<16x128xf32>
    %cst_7 = arith.constant 4.471500e-02 : f32
    %11 = vector.broadcast %cst_7 : f32 to vector<16x128xf32>
    %12 = arith.mulf %11, %8 : vector<16x128xf32>
    %13 = arith.mulf %12, %8 : vector<16x128xf32>
    %14 = arith.mulf %13, %8 : vector<16x128xf32>
    %15 = arith.addf %8, %14 : vector<16x128xf32>
    %cst_8 = arith.constant 0.797884583 : f32
    %16 = vector.broadcast %cst_8 : f32 to vector<16x128xf32>
    %17 = arith.mulf %16, %15 : vector<16x128xf32>
    %18 = math.tanh %17 : vector<16x128xf32>
    %cst_9 = arith.constant 1.000000e+00 : f32
    %19 = vector.broadcast %cst_9 : f32 to vector<16x128xf32>
    %20 = arith.addf %19, %18 : vector<16x128xf32>
    %21 = arith.mulf %10, %20 : vector<16x128xf32>
    %c0_10 = arith.constant 0 : index
    %c0_11 = arith.constant 0 : index
    %22 = vector.load %arg8[%c0_10, %c0_11] : memref<16x128xf32, #tpu.memory_space<vmem>>, vector<16x128xf32>
    tpu.vector_store %arg8[%c0_10, %c0_11], %21 {strides = array<i32>} : memref<16x128xf32, #tpu.memory_space<vmem>>, vector<16x128xf32>,
    return
  }
  func.func @transform_0(%arg0: i32, %arg1: i32, %arg2: i32) -> (i32, i32) {
    %c0_i32 = arith.constant 0 : i32
    return %arg0, %arg2 : i32, i32
  }
  func.func @transform_1(%arg0: i32, %arg1: i32, %arg2: i32) -> (i32, i32) {
    %c0_i32 = arith.constant 0 : i32
    return %arg2, %arg1 : i32, i32
  }
  func.func @transform_2(%arg0: i32, %arg1: i32, %arg2: i32) -> (i32, i32) {
    %c0_i32 = arith.constant 0 : i32
    %c0_i32_0 = arith.constant 0 : i32
    return %c0_i32, %arg1 : i32, i32
  }
  func.func @transform_3(%arg0: i32, %arg1: i32, %arg2: i32) -> (i32, i32) {
    %c0_i32 = arith.constant 0 : i32
    %c0_i32_0 = arith.constant 0 : i32
    return %c0_i32, %arg2 : i32, i32
  }
  func.func @transform_4(%arg0: i32, %arg1: i32, %arg2: i32) -> (i32, i32) {
    %c0_i32 = arith.constant 0 : i32
    %c0_i32_0 = arith.constant 0 : i32
    return %c0_i32, %arg2 : i32, i32
  }
  func.func @transform_5(%arg0: i32, %arg1: i32, %arg2: i32) -> (i32, i32) {
    %c0_i32 = arith.constant 0 : i32
    return %arg0, %arg1 : i32, i32
  }
}

module attributes {stable_mosaic.version = 11 : i64} {
  func.func @_fused_linear_kernel(%arg0: i32, %arg1: i32, %arg2: i32, %arg3: memref<16x32xf32, #tpu.memory_space<vmem>>, %arg4: memref<32x32xbf16, #tpu.memory_space<vmem>>, %arg5: memref<1x32xf32, #tpu.memory_space<vmem>>, %arg6: memref<16x32xf32, #tpu.memory_space<vmem>>, %arg7: memref<16x32xf32, #tpu.memory_space<vmem>>) attributes {dimension_semantics = [#tpu.dimension_semantics<parallel>, #tpu.dimension_semantics<parallel>, #tpu.dimension_semantics<arbitrary>], iteration_bounds = array<i64: 1, 1, 1>, scalar_prefetch = 0 : i64, scratch_operands = 0 : i64, tpu.core_type = #tpu.core_type<tc>, window_params = [{transform_indices = @transform_0, window_bounds = array<i64: 16, 32>}, {transform_indices = @transform_1, window_bounds = array<i64: 32, 32>}, {transform_indices = @transform_2, window_bounds = array<i64: 1, 32>}, {transform_indices = @transform_3, window_bounds = array<i64: 16, 32>}, {transform_indices = @transform_4, window_bounds = array<i64: 16, 32>}]} {
    %c0 = arith.constant 0 : index
    %c0_0 = arith.constant 0 : index
    %0 = vector.load %arg3[%c0, %c0_0] : memref<16x32xf32, #tpu.memory_space<vmem>>, vector<16x32xf32>
    %1 = arith.truncf %0 : vector<16x32xf32> to vector<16x32xbf16>
    %c0_1 = arith.constant 0 : index
    %c0_2 = arith.constant 0 : index
    %2 = vector.load %arg4[%c0_1, %c0_2] : memref<32x32xbf16, #tpu.memory_space<vmem>>, vector<32x32xbf16>
    %cst = arith.constant dense<0.000000e+00> : vector<16x32xf32>
    %3 = tpu.matmul %1, %2, %cst {dimension_numbers = #tpu.dot_dimension_numbers<[1], [0], [0], [1], [0, 0, 1, 1], [], []>} : vector<16x32xbf16>, vector<32x32xbf16>, vector<16x32xf32> -> vector<16x32xf32>
    %c0_3 = arith.constant 0 : index
    %c0_4 = arith.constant 0 : index
    %4 = vector.load %arg5[%c0_3, %c0_4] : memref<1x32xf32, #tpu.memory_space<vmem>>, vector<1x32xf32>
    %5 = vector.broadcast %4 : vector<1x32xf32> to vector<16x32xf32>
    %6 = arith.addf %3, %5 : vector<16x32xf32>
    %c0_5 = arith.constant 0 : index
    %c0_6 = arith.constant 0 : index
    %7 = vector.load %arg6[%c0_5, %c0_6] : memref<16x32xf32, #tpu.memory_space<vmem>>, vector<16x32xf32>
    %8 = arith.addf %6, %7 : vector<16x32xf32>
    %c0_7 = arith.constant 0 : index
    %c0_8 = arith.constant 0 : index
    %9 = vector.load %arg7[%c0_7, %c0_8] : memref<16x32xf32, #tpu.memory_space<vmem>>, vector<16x32xf32>
    tpu.vector_store %arg7[%c0_7, %c0_8], %8 {strides = array<i32>} : memref<16x32xf32, #tpu.memory_space<vmem>>, vector<16x32xf32>,
    return
  }
  func.func @transform_0(%arg0: i32, %arg1: i32, %arg2: i32) -> (i32, i32) {
    %c0_i32 = arith.constant 0 : i32
    return %arg0, %arg2 : i32, i32
  }
  func.func @transform_1(%arg0: i32, %arg1: i32, %arg2: i32) -> (i32, i32) {
    %c0_i32 = arith.constant 0 : i32
    return %arg2, %arg1 : i32, i32
  }
  func.func @transform_2(%arg0: i32, %arg1: i32, %arg2: i32) -> (i32, i32) {
    %c0_i32 = arith.constant 0 : i32
    %c0_i32_0 = arith.constant 0 : i32
    return %c0_i32, %arg1 : i32, i32
  }
  func.func @transform_3(%arg0: i32, %arg1: i32, %arg2: i32) -> (i32, i32) {
    %c0_i32 = arith.constant 0 : i32
    return %arg0, %arg1 : i32, i32
  }
  func.func @transform_4(%arg0: i32, %arg1: i32, %arg2: i32) -> (i32, i32) {
    %c0_i32 = arith.constant 0 : i32
    return %arg0, %arg1 : i32, i32
  }
}

module attributes {stable_mosaic.version = 11 : i64} {
  func.func @_fused_linear_kernel(%arg0: i32, %arg1: i32, %arg2: i32, %arg3: memref<16x128xf32, #tpu.memory_space<vmem>>, %arg4: memref<128x32xbf16, #tpu.memory_space<vmem>>, %arg5: memref<1x32xf32, #tpu.memory_space<vmem>>, %arg6: memref<16x32xf32, #tpu.memory_space<vmem>>, %arg7: memref<16x32xf32, #tpu.memory_space<vmem>>) attributes {dimension_semantics = [#tpu.dimension_semantics<parallel>, #tpu.dimension_semantics<parallel>, #tpu.dimension_semantics<arbitrary>], iteration_bounds = array<i64: 1, 1, 1>, scalar_prefetch = 0 : i64, scratch_operands = 0 : i64, tpu.core_type = #tpu.core_type<tc>, window_params = [{transform_indices = @transform_0, window_bounds = array<i64: 16, 128>}, {transform_indices = @transform_1, window_bounds = array<i64: 128, 32>}, {transform_indices = @transform_2, window_bounds = array<i64: 1, 32>}, {transform_indices = @transform_3, window_bounds = array<i64: 16, 32>}, {transform_indices = @transform_4, window_bounds = array<i64: 16, 32>}]} {
    %c0 = arith.constant 0 : index
    %c0_0 = arith.constant 0 : index
    %0 = vector.load %arg3[%c0, %c0_0] : memref<16x128xf32, #tpu.memory_space<vmem>>, vector<16x128xf32>
    %1 = arith.truncf %0 : vector<16x128xf32> to vector<16x128xbf16>
    %c0_1 = arith.constant 0 : index
    %c0_2 = arith.constant 0 : index
    %2 = vector.load %arg4[%c0_1, %c0_2] : memref<128x32xbf16, #tpu.memory_space<vmem>>, vector<128x32xbf16>
    %cst = arith.constant dense<0.000000e+00> : vector<16x32xf32>
    %3 = tpu.matmul %1, %2, %cst {dimension_numbers = #tpu.dot_dimension_numbers<[1], [0], [0], [1], [0, 0, 1, 1], [], []>} : vector<16x128xbf16>, vector<128x32xbf16>, vector<16x32xf32> -> vector<16x32xf32>
    %c0_3 = arith.constant 0 : index
    %c0_4 = arith.constant 0 : index
    %4 = vector.load %arg5[%c0_3, %c0_4] : memref<1x32xf32, #tpu.memory_space<vmem>>, vector<1x32xf32>
    %5 = vector.broadcast %4 : vector<1x32xf32> to vector<16x32xf32>
    %6 = arith.addf %3, %5 : vector<16x32xf32>
    %c0_5 = arith.constant 0 : index
    %c0_6 = arith.constant 0 : index
    %7 = vector.load %arg6[%c0_5, %c0_6] : memref<16x32xf32, #tpu.memory_space<vmem>>, vector<16x32xf32>
    %8 = arith.addf %6, %7 : vector<16x32xf32>
    %c0_7 = arith.constant 0 : index
    %c0_8 = arith.constant 0 : index
    %9 = vector.load %arg7[%c0_7, %c0_8] : memref<16x32xf32, #tpu.memory_space<vmem>>, vector<16x32xf32>
    tpu.vector_store %arg7[%c0_7, %c0_8], %8 {strides = array<i32>} : memref<16x32xf32, #tpu.memory_space<vmem>>, vector<16x32xf32>,
    return
  }
  func.func @transform_0(%arg0: i32, %arg1: i32, %arg2: i32) -> (i32, i32) {
    %c0_i32 = arith.constant 0 : i32
    return %arg0, %arg2 : i32, i32
  }
  func.func @transform_1(%arg0: i32, %arg1: i32, %arg2: i32) -> (i32, i32) {
    %c0_i32 = arith.constant 0 : i32
    return %arg2, %arg1 : i32, i32
  }
  func.func @transform_2(%arg0: i32, %arg1: i32, %arg2: i32) -> (i32, i32) {
    %c0_i32 = arith.constant 0 : i32
    %c0_i32_0 = arith.constant 0 : i32
    return %c0_i32, %arg1 : i32, i32
  }
  func.func @transform_3(%arg0: i32, %arg1: i32, %arg2: i32) -> (i32, i32) {
    %c0_i32 = arith.constant 0 : i32
    return %arg0, %arg1 : i32, i32
  }
  func.func @transform_4(%arg0: i32, %arg1: i32, %arg2: i32) -> (i32, i32) {
    %c0_i32 = arith.constant 0 : i32
    return %arg0, %arg1 : i32, i32
  }
}

module attributes {stable_mosaic.version = 11 : i64} {
  func.func @_fused_linear_kernel(%arg0: i32, %arg1: i32, %arg2: i32, %arg3: memref<16x32xf32, #tpu.memory_space<vmem>>, %arg4: memref<256x32xbf16, #tpu.memory_space<vmem>>, %arg5: memref<1x256xf32, #tpu.memory_space<vmem>>, %arg6: memref<1x32xf32, #tpu.memory_space<vmem>>, %arg7: memref<1x32xf32, #tpu.memory_space<vmem>>, %arg8: memref<16x256xf32, #tpu.memory_space<vmem>>, %arg9: memref<16x32xbf16, #tpu.memory_space<vmem>>) attributes {dimension_semantics = [#tpu.dimension_semantics<parallel>, #tpu.dimension_semantics<arbitrary>, #tpu.dimension_semantics<arbitrary>], iteration_bounds = array<i64: 1, 1, 1>, scalar_prefetch = 0 : i64, scratch_operands = 1 : i64, tpu.core_type = #tpu.core_type<tc>, window_params = [{transform_indices = @transform_0, window_bounds = array<i64: 16, 32>}, {transform_indices = @transform_1, window_bounds = array<i64: 256, 32>}, {transform_indices = @transform_2, window_bounds = array<i64: 1, 256>}, {transform_indices = @transform_3, window_bounds = array<i64: 1, 32>}, {transform_indices = @transform_4, window_bounds = array<i64: 1, 32>}, {transform_indices = @transform_5, window_bounds = array<i64: 16, 256>}]} {
    %c0_i32 = arith.constant 0 : i32
    %0 = arith.cmpi eq, %arg1, %c0_i32 : i32
    %1 = arith.extui %0 : i1 to i32
    %c0_i32_0 = arith.constant 0 : i32
    %2 = arith.cmpi ne, %1, %c0_i32_0 : i32
    scf.if %2 {
      %c0_8 = arith.constant 0 : index
      %c0_9 = arith.constant 0 : index
      %10 = vector.load %arg3[%c0_8, %c0_9] : memref<16x32xf32, #tpu.memory_space<vmem>>, vector<16x32xf32>
      %cst_10 = arith.constant dense<0.000000e+00> : vector<16xf32>
      %11 = vector.multi_reduction <add>, %10, %cst_10 [1] : vector<16x32xf32> to vector<16xf32>
      %12 = vector.shape_cast %11 : vector<16xf32> to vector<16x1xf32>
      %cst_11 = arith.constant 3.200000e+01 : f32
      %13 = vector.broadcast %cst_11 : f32 to vector<16x1xf32>
      %14 = arith.divf %12, %13 : vector<16x1xf32>
      %15 = vector.broadcast %14 : vector<16x1xf32> to vector<16x32xf32>
      %16 = arith.subf %10, %15 : vector<16x32xf32>
      %17 = arith.mulf %16, %16 : vector<16x32xf32>
      %cst_12 = arith.constant dense<0.000000e+00> : vector<16xf32>
      %18 = vector.multi_reduction <add>, %17, %cst_12 [1] : vector<16x32xf32> to vector<16xf32>
      %19 = vector.shape_cast %18 : vector<16xf32> to vector<16x1xf32>
      %cst_13 = arith.constant 3.200000e+01 : f32
      %20 = vector.broadcast %cst_13 : f32 to vector<16x1xf32>
      %21 = arith.divf %19, %20 : vector<16x1xf32>
      %22 = vector.broadcast %14 : vector<16x1xf32> to vector<16x32xf32>
      %23 = arith.subf %10, %22 : vector<16x32xf32>
      %cst_14 = arith.constant 9.99999974E-6 : f32
      %24 = vector.broadcast %cst_14 : f32 to vector<16x1xf32>
      %25 = arith.addf %21, %24 : vector<16x1xf32>
      %26 = math.rsqrt %25 : vector<16x1xf32>
      %27 = vector.broadcast %26 : vector<16x1xf32> to vector<16x32xf32>
      %28 = arith.mulf %23, %27 : vector<16x32xf32>
      %c0_15 = arith.constant 0 : index
      %c0_16 = arith.constant 0 : index
      %29 = vector.load %arg6[%c0_15, %c0_16] : memref<1x32xf32, #tpu.memory_space<vmem>>, vector<1x32xf32>
      %30 = vector.broadcast %29 : vector<1x32xf32> to vector<16x32xf32>
      %31 = arith.mulf %28, %30 : vector<16x32xf32>
      %c0_17 = arith.constant 0 : index
      %c0_18 = arith.constant 0 : index
      %32 = vector.load %arg7[%c0_17, %c0_18] : memref<1x32xf32, #tpu.memory_space<vmem>>, vector<1x32xf32>
      %33 = vector.broadcast %32 : vector<1x32xf32> to vector<16x32xf32>
      %34 = arith.addf %31, %33 : vector<16x32xf32>
      %35 = arith.truncf %34 : vector<16x32xf32> to vector<16x32xbf16>
      %c0_19 = arith.constant 0 : index
      %c0_20 = arith.constant 0 : index
      %36 = vector.load %arg9[%c0_19, %c0_20] : memref<16x32xbf16, #tpu.memory_space<vmem>>, vector<16x32xbf16>
      tpu.vector_store %arg9[%c0_19, %c0_20], %35 {strides = array<i32>} : memref<16x32xbf16, #tpu.memory_space<vmem>>, vector<16x32xbf16>,
    } else {
    }
    %c0 = arith.constant 0 : index
    %c0_1 = arith.constant 0 : index
    %3 = vector.load %arg9[%c0, %c0_1] : memref<16x32xbf16, #tpu.memory_space<vmem>>, vector<16x32xbf16>
    %c0_2 = arith.constant 0 : index
    %c0_3 = arith.constant 0 : index
    %4 = vector.load %arg4[%c0_2, %c0_3] : memref<256x32xbf16, #tpu.memory_space<vmem>>, vector<256x32xbf16>
    %cst = arith.constant dense<0.000000e+00> : vector<16x256xf32>
    %5 = tpu.matmul %3, %4, %cst {dimension_numbers = #tpu.dot_dimension_numbers<[1], [1], [0], [0], [0, 0, 1, 0], [], []>} : vector<16x32xbf16>, vector<256x32xbf16>, vector<16x256xf32> -> vector<16x256xf32>
    %c0_4 = arith.constant 0 : index
    %c0_5 = arith.constant 0 : index
    %6 = vector.load %arg5[%c0_4, %c0_5] : memref<1x256xf32, #tpu.memory_space<vmem>>, vector<1x256xf32>
    %7 = vector.broadcast %6 : vector<1x256xf32> to vector<16x256xf32>
    %8 = arith.addf %5, %7 : vector<16x256xf32>
    %c0_6 = arith.constant 0 : index
    %c0_7 = arith.constant 0 : index
    %9 = vector.load %arg8[%c0_6, %c0_7] : memref<16x256xf32, #tpu.memory_space<vmem>>, vector<16x256xf32>
    tpu.vector_store %arg8[%c0_6, %c0_7], %8 {strides = array<i32>} : memref<16x256xf32, #tpu.memory_space<vmem>>, vector<16x256xf32>,
    return
  }
  func.func @transform_0(%arg0: i32, %arg1: i32, %arg2: i32) -> (i32, i32) {
    %c0_i32 = arith.constant 0 : i32
    return %arg0, %arg2 : i32, i32
  }
  func.func @transform_1(%arg0: i32, %arg1: i32, %arg2: i32) -> (i32, i32) {
    %c0_i32 = arith.constant 0 : i32
    return %arg1, %arg2 : i32, i32
  }
  func.func @transform_2(%arg0: i32, %arg1: i32, %arg2: i32) -> (i32, i32) {
    %c0_i32 = arith.constant 0 : i32
    %c0_i32_0 = arith.constant 0 : i32
    return %c0_i32, %arg1 : i32, i32
  }
  func.func @transform_3(%arg0: i32, %arg1: i32, %arg2: i32) -> (i32, i32) {
    %c0_i32 = arith.constant 0 : i32
    %c0_i32_0 = arith.constant 0 : i32
    return %c0_i32, %arg2 : i32, i32
  }
  func.func @transform_4(%arg0: i32, %arg1: i32, %arg2: i32) -> (i32, i32) {
    %c0_i32 = arith.constant 0 : i32
    %c0_i32_0 = arith.constant 0 : i32
    return %c0_i32, %arg2 : i32, i32
  }
  func.func @transform_5(%arg0: i32, %arg1: i32, %arg2: i32) -> (i32, i32) {
    %c0_i32 = arith.constant 0 : i32
    return %arg0, %arg1 : i32, i32
  }
}

</mosaic_0001>

<llo_original>
// kernel: gpt_forward.13
$region0: #{gpt_forward.13}
  #allocation0 [shape = 'u32[]', space=smem, size = 0x4, offset = 0x4, fixed_abs, tag = 'smem constant byte address 0x4 - core index']
  #allocation1 [shape = 'u32[144,128]{1,0:T(1,128)}', space=vmem, size = 0x12000, scoped, tag = 'internal scratch']
  %s0 = inlined_call_operand.vmem [shape: f32[16,32], index: 0, kind: input, shape index: {}]
  %s1 = inlined_call_operand.vmem [shape: bf16[32,32], index: 1, kind: input, shape index: {}]
  %s2 = inlined_call_operand.vmem [shape: f32[1,32], index: 2, kind: input, shape index: {}]
  %s3 = inlined_call_operand.vmem [shape: f32[16,32], index: 3, kind: input, shape index: {}]
  %s4 = inlined_call_operand.vmem [shape: f32[16,32], index: 4, kind: output, shape index: {}]
  %s5 = sld [smem:[#allocation0]]
  $region26: #{gpt_forward.13} parent=0
    _
  %s7 = ssub.s32 1, %s5
  %s8 = scalar_select 0, %s7, %s5
  // Predicated region
  $region2: #{gpt_forward.13} parent=0 // pred_check
    _
  $region3: #{gpt_forward.13} parent=0 // pred_check_branch
    %10 = sbr.rel (0) target = $region5
  $region4: #{gpt_forward.13} parent=0 // pred_region
    _
  $region5: #{gpt_forward.13} parent=0 // pred_fallthru
    _
  // Predicated region
  $region6: #{gpt_forward.13} parent=0 // pred_check
    _
  $region7: #{gpt_forward.13} parent=0 // pred_check_branch
    %12 = sbr.rel (0) target = $region9
  $region8: #{gpt_forward.13} parent=0 // pred_region
    _
  $region9: #{gpt_forward.13} parent=0 // pred_fallthru
    _
  // Predicated region
  $region10: #{gpt_forward.13} parent=0 // pred_check
    _
  $region11: #{gpt_forward.13} parent=0 // pred_check_branch
    %14 = sbr.rel (0) target = $region13
  $region12: #{gpt_forward.13} parent=0 // pred_region
    _
  $region13: #{gpt_forward.13} parent=0 // pred_fallthru
    _
  // Predicated region
  $region14: #{gpt_forward.13} parent=0 // pred_check
    _
  $region15: #{gpt_forward.13} parent=0 // pred_check_branch
    %16 = sbr.rel (0) target = $region17
  $region16: #{gpt_forward.13} parent=0 // pred_region
    _
  $region17: #{gpt_forward.13} parent=0 // pred_fallthru
    _
  %v18 = vld [vmem:[%s0] sm:$0xff]
  %v19 = vld [vmem:[%s0 + $0x8] sm:$0xff]
  %v20 = vpack.c.bf16 %v19, %v18
  %v21 = vld [vmem:[%s1] sm:$0xf]
  %v22 = vld [vmem:[%s1 + $0x4] sm:$0xf]
  %v23 = vld [vmem:[%s1 + $0x8] sm:$0xf]
  %v24 = vld [vmem:[%s1 + $0xc] sm:$0xf]
  %v25 = vld [vmem:[%s2] sm:$0x1]
  %v27 = vlaneseq
  %v28 = vshrl.u32 %v27, 7
  %v29 = vsub.s32 0, %v28
  %v30 = vrot.slane %v25, %v29
  %v36 = vunpack.c.l.b16 %v21
  %v37 = vunpack.c.l.b16 %v22
  %v38 = vunpack.c.l.b16 %v23
  %v39 = vunpack.c.l.b16 %v24
  %v40 = vpack.c.b16 %v37, %v36
  %v41 = vpack.c.b16 %v39, %v38
  %vm44 = vcmask 261120
  %v46 = vsel %vm44, %v20, 0
  %48 = vmatprep.subr.bf16.mxu0 0
  %49 = vmatpush1.bf16.msra.mxu0 %v40
  %50 = vmatprep.subr.bf16.mxu0 0
  %51 = vmatpush1.bf16.msra.mxu0 %v41
  %52 = vmatprep.subr.bf16.mxu0 0
  %53 = vmatpush1.bf16.msra.mxu0 0
  %54 = vmatprep.subr.bf16.mxu0 0
  %55 = vmatpush1.bf16.msra.mxu0 0
  %56 = vmatprep.subr.bf16.mxu0 0
  %57 = vmatpush1.bf16.msra.mxu0 0
  %58 = vmatprep.subr.bf16.mxu0 0
  %59 = vmatpush1.bf16.msra.mxu0 0
  %60 = vmatprep.subr.bf16.mxu0 0
  %61 = vmatpush1.bf16.msra.mxu0 0
  %62 = vmatprep.subr.bf16.mxu0 0
  %63 = vmatpush1.bf16.msra.mxu0 0
  %64 = vmatprep.subr.bf16.mxu0 0
  %65 = vmatpush1.bf16.msra.mxu0 0
  %66 = vmatprep.subr.bf16.mxu0 0
  %67 = vmatpush1.bf16.msra.mxu0 0
  %68 = vmatprep.subr.bf16.mxu0 0
  %69 = vmatpush1.bf16.msra.mxu0 0
  %70 = vmatprep.subr.bf16.mxu0 0
  %71 = vmatpush1.bf16.msra.mxu0 0
  %72 = vmatprep.subr.bf16.mxu0 0
  %73 = vmatpush1.bf16.msra.mxu0 0
  %74 = vmatprep.subr.bf16.mxu0 0
  %75 = vmatpush1.bf16.msra.mxu0 0
  %76 = vmatprep.subr.bf16.mxu0 0
  %77 = vmatpush1.bf16.msra.mxu0 0
  %78 = vmatprep.subr.bf16.mxu0 0
  %79 = vmatpush1.bf16.msra.mxu0 0
  %80 = vmatprep.mubr.bf16.mxu0 0
  %81 = vmatmul.mubr.bf16.gmra.mrb[0].mxu0 %v46
  %v82 = vpop.f32.mrb[0].mxu0
  %v83 = vadd.f32 %v30, %v82
  %v84 = vpop.f32.mrb[0].mxu0
  %v85 = vpop.f32.mrb[0].mxu0
  %v86 = vadd.f32 %v30, %v85
  %v87 = vpop.f32.mrb[0].mxu0
  %88 = vdwg.mxu0
  %v89 = vld [vmem:[%s3] sm:$0xff]
  %v90 = vld [vmem:[%s3 + $0x8] sm:$0xff]
  %v91 = vadd.f32 %v83, %v89
  %v92 = vadd.f32 %v86, %v90
  %93 = vst.msk [vmem:[%s4] sm:$0xff] %vm44, %v91
  %94 = vst.msk [vmem:[%s4 + $0x8] sm:$0xff] %vm44, %v92
  // Predicated region
  $region18: #{gpt_forward.13} parent=0 // pred_check
    _
  $region19: #{gpt_forward.13} parent=0 // pred_check_branch
    %96 = sbr.rel (0) target = $region21
  $region20: #{gpt_forward.13} parent=0 // pred_region
    _
  $region21: #{gpt_forward.13} parent=0 // pred_fallthru
    _
  // Predicated region
  $region22: #{gpt_forward.13} parent=0 // pred_check
    _
  $region23: #{gpt_forward.13} parent=0 // pred_check_branch
    %98 = sbr.rel (0) target = $region25
  $region24: #{gpt_forward.13} parent=0 // pred_region
    _
  $region25: #{gpt_forward.13} parent=0 // pred_fallthru
    _

// kernel: gpt_forward.14
$region0: #{gpt_forward.14}
  #allocation0 [shape = 'u32[]', space=smem, size = 0x4, offset = 0x4, fixed_abs, tag = 'smem constant byte address 0x4 - core index']
  #allocation1 [shape = 'u32[144,128]{1,0:T(1,128)}', space=vmem, size = 0x12000, scoped, tag = 'internal scratch']
  #allocation2 [shape = 'bf16[16,32]{1,0:T(16,128)(2,1)}', space=vmem, size = 0x1000, scoped, tag = 'scratch operand']
  %s0 = inlined_call_operand.vmem [shape: f32[16,32], index: 0, kind: input, shape index: {}]
  %s1 = inlined_call_operand.vmem [shape: bf16[32,128], index: 1, kind: input, shape index: {}]
  %s2 = inlined_call_operand.vmem [shape: f32[1,128], index: 2, kind: input, shape index: {}]
  %s3 = inlined_call_operand.vmem [shape: f32[1,32], index: 3, kind: input, shape index: {}]
  %s4 = inlined_call_operand.vmem [shape: f32[1,32], index: 4, kind: input, shape index: {}]
  %s5 = inlined_call_operand.vmem [shape: f32[16,128], index: 5, kind: output, shape index: {}]
  %s6 = sld [smem:[#allocation0]]
  $region34: #{gpt_forward.14} parent=0
    _
  %s8 = ssub.s32 1, %s6
  %s9 = scalar_select 0, %s8, %s6
  // Predicated region
  $region2: #{gpt_forward.14} parent=0 // pred_check
    _
  $region3: #{gpt_forward.14} parent=0 // pred_check_branch
    %11 = sbr.rel (0) target = $region5
  $region4: #{gpt_forward.14} parent=0 // pred_region
    _
  $region5: #{gpt_forward.14} parent=0 // pred_fallthru
    _
  // Predicated region
  $region6: #{gpt_forward.14} parent=0 // pred_check
    _
  $region7: #{gpt_forward.14} parent=0 // pred_check_branch
    %13 = sbr.rel (0) target = $region9
  $region8: #{gpt_forward.14} parent=0 // pred_region
    _
  $region9: #{gpt_forward.14} parent=0 // pred_fallthru
    _
  // Predicated region
  $region10: #{gpt_forward.14} parent=0 // pred_check
    _
  $region11: #{gpt_forward.14} parent=0 // pred_check_branch
    %15 = sbr.rel (0) target = $region13
  $region12: #{gpt_forward.14} parent=0 // pred_region
    _
  $region13: #{gpt_forward.14} parent=0 // pred_fallthru
    _
  // Predicated region
  $region14: #{gpt_forward.14} parent=0 // pred_check
    _
  $region15: #{gpt_forward.14} parent=0 // pred_check_branch
    %17 = sbr.rel (0) target = $region17
  $region16: #{gpt_forward.14} parent=0 // pred_region
    _
  $region17: #{gpt_forward.14} parent=0 // pred_fallthru
    _
  // Predicated region
  $region18: #{gpt_forward.14} parent=0 // pred_check
    _
  $region19: #{gpt_forward.14} parent=0 // pred_check_branch
    %19 = sbr.rel (0) target = $region21
  $region20: #{gpt_forward.14} parent=0 // pred_region
    _
  $region21: #{gpt_forward.14} parent=0 // pred_fallthru
    _
  %p21 = scmp.eq.s32.totalorder 0, 0
  // Predicated region
  $region22: #{gpt_forward.14} parent=0 // pred_check
    %p22 = pneg %p21
  $region23: #{gpt_forward.14} parent=0 // pred_check_branch
    %24 = sbr.rel (%p22) target = $region25
  $region24: #{gpt_forward.14} parent=0 // pred_region
    %v25 = vld [vmem:[%s0] sm:$0xff]
    %v26 = vld [vmem:[%s0 + $0x8] sm:$0xff]
    %vm27 = vcmask 261120
    %v28 = vsel %vm27, %v25, 0.0
    %29 = vadd.xlane.f32.xlu0 %v28
    %v30 = vpop.xlane.xlu0 %29
    %v31 = vsel %vm27, %v26, 0.0
    %32 = vadd.xlane.f32.xlu0 %v31
    %v33 = vpop.xlane.xlu0 %32
    %v34 = vrcp.pop 32.0
    %v35 = vmul.f32 %v30, %v34
    %v36 = vmul.f32 %v33, %v34
    %v37 = vsub.f32 %v25, %v35
    %v38 = vsub.f32 %v26, %v36
    %v39 = vmul.f32 %v37, %v37
    %v40 = vmul.f32 %v38, %v38
    %v41 = vsel %vm27, %v39, 0.0
    %42 = vadd.xlane.f32.xlu0 %v41
    %v43 = vpop.xlane.xlu0 %42
    %v44 = vsel %vm27, %v40, 0.0
    %45 = vadd.xlane.f32.xlu0 %v44
    %v46 = vpop.xlane.xlu0 %45
    %v47 = vmul.f32 %v43, %v34
    %v48 = vmul.f32 %v46, %v34
    %v49 = vadd.f32 %v47, 1e-05
    %v50 = vadd.f32 %v48, 1e-05
    %v51 = vrsqrt.pop %v49
    %v52 = vrsqrt.pop %v50
    %v53 = vmul.f32 %v37, %v51
    %v54 = vmul.f32 %v38, %v52
    %v55 = vld [vmem:[%s3] sm:$0x1]
    %v57 = vlaneseq
    %v58 = vshrl.u32 %v57, 7
    %v59 = vsub.s32 0, %v58
    %v60 = vrot.slane %v55, %v59
    %v62 = vmul.f32 %v53, %v60
    %v63 = vmul.f32 %v54, %v60
    %v64 = vld [vmem:[%s4] sm:$0x1]
    %v66 = vlaneseq
    %v67 = vshrl.u32 %v66, 7
    %v68 = vsub.s32 0, %v67
    %v69 = vrot.slane %v64, %v68
    %v71 = vadd.f32 %v62, %v69
    %v72 = vadd.f32 %v63, %v69
    %v73 = vpack.c.bf16 %v72, %v71
    %74 = vst.msk [vmem:[#allocation2] sm:$0xff] %vm27, %v73
  $region25: #{gpt_forward.14} parent=0 // pred_fallthru
    _
  %v75 = vld [vmem:[#allocation2] sm:$0xff]
  %v76 = vld [vmem:[%s1] sm:$0xf]
  %v77 = vld [vmem:[%s1 + $0x4] sm:$0xf]
  %v78 = vld [vmem:[%s1 + $0x8] sm:$0xf]
  %v79 = vld [vmem:[%s1 + $0xc] sm:$0xf]
  %v80 = vld [vmem:[%s2] sm:$0x1]
  %v82 = vlaneseq
  %v83 = vshrl.u32 %v82, 7
  %v84 = vsub.s32 0, %v83
  %v85 = vrot.slane %v80, %v84
  %v91 = vunpack.c.l.b16 %v76
  %v92 = vunpack.c.l.b16 %v77
  %v93 = vunpack.c.l.b16 %v78
  %v94 = vunpack.c.l.b16 %v79
  %v95 = vpack.c.b16 %v92, %v91
  %v96 = vpack.c.b16 %v94, %v93
  %vm99 = vcmask 261120
  %v101 = vsel %vm99, %v75, 0
  %103 = vmatprep.subr.bf16.mxu0 0
  %104 = vmatpush1.bf16.msra.mxu0 %v95
  %105 = vmatprep.subr.bf16.mxu0 0
  %106 = vmatpush1.bf16.msra.mxu0 %v96
  %107 = vmatprep.subr.bf16.mxu0 0
  %108 = vmatpush1.bf16.msra.mxu0 0
  %109 = vmatprep.subr.bf16.mxu0 0
  %110 = vmatpush1.bf16.msra.mxu0 0
  %111 = vmatprep.subr.bf16.mxu0 0
  %112 = vmatpush1.bf16.msra.mxu0 0
  %113 = vmatprep.subr.bf16.mxu0 0
  %114 = vmatpush1.bf16.msra.mxu0 0
  %115 = vmatprep.subr.bf16.mxu0 0
  %116 = vmatpush1.bf16.msra.mxu0 0
  %117 = vmatprep.subr.bf16.mxu0 0
  %118 = vmatpush1.bf16.msra.mxu0 0
  %119 = vmatprep.subr.bf16.mxu0 0
  %120 = vmatpush1.bf16.msra.mxu0 0
  %121 = vmatprep.subr.bf16.mxu0 0
  %122 = vmatpush1.bf16.msra.mxu0 0
  %123 = vmatprep.subr.bf16.mxu0 0
  %124 = vmatpush1.bf16.msra.mxu0 0
  %125 = vmatprep.subr.bf16.mxu0 0
  %126 = vmatpush1.bf16.msra.mxu0 0
  %127 = vmatprep.subr.bf16.mxu0 0
  %128 = vmatpush1.bf16.msra.mxu0 0
  %129 = vmatprep.subr.bf16.mxu0 0
  %130 = vmatpush1.bf16.msra.mxu0 0
  %131 = vmatprep.subr.bf16.mxu0 0
  %132 = vmatpush1.bf16.msra.mxu0 0
  %133 = vmatprep.subr.bf16.mxu0 0
  %134 = vmatpush1.bf16.msra.mxu0 0
  %135 = vmatprep.mubr.bf16.mxu0 0
  %136 = vmatmul.mubr.bf16.gmra.mrb[0].mxu0 %v101
  %v137 = vpop.f32.mrb[0].mxu0
  %v138 = vadd.f32 %v85, %v137
  %v139 = vpop.f32.mrb[0].mxu0
  %v140 = vpop.f32.mrb[0].mxu0
  %v141 = vadd.f32 %v85, %v140
  %v142 = vpop.f32.mrb[0].mxu0
  %143 = vdwg.mxu0
  %v144 = vmul.f32 %v138, 0.5
  %v145 = vmul.f32 %v141, 0.5
  %v146 = vmul.f32 %v138, 0.044715
  %v147 = vmul.f32 %v141, 0.044715
  %v148 = vmul.f32 %v146, %v138
  %v149 = vmul.f32 %v147, %v141
  %v150 = vmul.f32 %v148, %v138
  %v151 = vmul.f32 %v149, %v141
  %v152 = vadd.f32 %v138, %v150
  %v153 = vadd.f32 %v141, %v151
  %v154 = vmul.f32 %v152, 0.7978846
  %v155 = vmul.f32 %v153, 0.7978846
  %v156 = vtanh.pop %v154
  %v157 = vtanh.pop %v155
  %v158 = vadd.f32 %v156, 1.0
  %v159 = vadd.f32 %v157, 1.0
  %v160 = vmul.f32 %v144, %v158
  %v161 = vmul.f32 %v145, %v159
  %162 = vst [vmem:[%s5] sm:$0xff] %v160
  %163 = vst [vmem:[%s5 + $0x8] sm:$0xff] %v161
  // Predicated region
  $region26: #{gpt_forward.14} parent=0 // pred_check
    _
  $region27: #{gpt_forward.14} parent=0 // pred_check_branch
    %165 = sbr.rel (0) target = $region29
  $region28: #{gpt_forward.14} parent=0 // pred_region
    _
  $region29: #{gpt_forward.14} parent=0 // pred_fallthru
    _
  // Predicated region
  $region30: #{gpt_forward.14} parent=0 // pred_check
    _
  $region31: #{gpt_forward.14} parent=0 // pred_check_branch
    %167 = sbr.rel (0) target = $region33
  $region32: #{gpt_forward.14} parent=0 // pred_region
    _
  $region33: #{gpt_forward.14} parent=0 // pred_fallthru
    _

// kernel: gpt_forward.11
$region0: #{gpt_forward.11}
  #allocation0 [shape = 'u32[]', space=smem, size = 0x4, offset = 0x4, fixed_abs, tag = 'smem constant byte address 0x4 - core index']
  #allocation1 [shape = 'u32[144,128]{1,0:T(1,128)}', space=vmem, size = 0x12000, scoped, tag = 'internal scratch']
  #allocation2 [shape = 'bf16[16,32]{1,0:T(16,128)(2,1)}', space=vmem, size = 0x1000, scoped, tag = 'scratch operand']
  %s0 = inlined_call_operand.vmem [shape: f32[16,32], index: 0, kind: input, shape index: {}]
  %s1 = inlined_call_operand.vmem [shape: bf16[32,96], index: 1, kind: input, shape index: {}]
  %s2 = inlined_call_operand.vmem [shape: f32[1,96], index: 2, kind: input, shape index: {}]
  %s3 = inlined_call_operand.vmem [shape: f32[1,32], index: 3, kind: input, shape index: {}]
  %s4 = inlined_call_operand.vmem [shape: f32[1,32], index: 4, kind: input, shape index: {}]
  %s5 = inlined_call_operand.vmem [shape: f32[16,96], index: 5, kind: output, shape index: {}]
  %s6 = sld [smem:[#allocation0]]
  $region34: #{gpt_forward.11} parent=0
    _
  %s8 = ssub.s32 1, %s6
  %s9 = scalar_select 0, %s8, %s6
  // Predicated region
  $region2: #{gpt_forward.11} parent=0 // pred_check
    _
  $region3: #{gpt_forward.11} parent=0 // pred_check_branch
    %11 = sbr.rel (0) target = $region5
  $region4: #{gpt_forward.11} parent=0 // pred_region
    _
  $region5: #{gpt_forward.11} parent=0 // pred_fallthru
    _
  // Predicated region
  $region6: #{gpt_forward.11} parent=0 // pred_check
    _
  $region7: #{gpt_forward.11} parent=0 // pred_check_branch
    %13 = sbr.rel (0) target = $region9
  $region8: #{gpt_forward.11} parent=0 // pred_region
    _
  $region9: #{gpt_forward.11} parent=0 // pred_fallthru
    _
  // Predicated region
  $region10: #{gpt_forward.11} parent=0 // pred_check
    _
  $region11: #{gpt_forward.11} parent=0 // pred_check_branch
    %15 = sbr.rel (0) target = $region13
  $region12: #{gpt_forward.11} parent=0 // pred_region
    _
  $region13: #{gpt_forward.11} parent=0 // pred_fallthru
    _
  // Predicated region
  $region14: #{gpt_forward.11} parent=0 // pred_check
    _
  $region15: #{gpt_forward.11} parent=0 // pred_check_branch
    %17 = sbr.rel (0) target = $region17
  $region16: #{gpt_forward.11} parent=0 // pred_region
    _
  $region17: #{gpt_forward.11} parent=0 // pred_fallthru
    _
  // Predicated region
  $region18: #{gpt_forward.11} parent=0 // pred_check
    _
  $region19: #{gpt_forward.11} parent=0 // pred_check_branch
    %19 = sbr.rel (0) target = $region21
  $region20: #{gpt_forward.11} parent=0 // pred_region
    _
  $region21: #{gpt_forward.11} parent=0 // pred_fallthru
    _
  %p21 = scmp.eq.s32.totalorder 0, 0
  // Predicated region
  $region22: #{gpt_forward.11} parent=0 // pred_check
    %p22 = pneg %p21
  $region23: #{gpt_forward.11} parent=0 // pred_check_branch
    %24 = sbr.rel (%p22) target = $region25
  $region24: #{gpt_forward.11} parent=0 // pred_region
    %v25 = vld [vmem:[%s0] sm:$0xff]
    %v26 = vld [vmem:[%s0 + $0x8] sm:$0xff]
    %vm27 = vcmask 261120
    %v28 = vsel %vm27, %v25, 0.0
    %29 = vadd.xlane.f32.xlu0 %v28
    %v30 = vpop.xlane.xlu0 %29
    %v31 = vsel %vm27, %v26, 0.0
    %32 = vadd.xlane.f32.xlu0 %v31
    %v33 = vpop.xlane.xlu0 %32
    %v34 = vrcp.pop 32.0
    %v35 = vmul.f32 %v30, %v34
    %v36 = vmul.f32 %v33, %v34
    %v37 = vsub.f32 %v25, %v35
    %v38 = vsub.f32 %v26, %v36
    %v39 = vmul.f32 %v37, %v37
    %v40 = vmul.f32 %v38, %v38
    %v41 = vsel %vm27, %v39, 0.0
    %42 = vadd.xlane.f32.xlu0 %v41
    %v43 = vpop.xlane.xlu0 %42
    %v44 = vsel %vm27, %v40, 0.0
    %45 = vadd.xlane.f32.xlu0 %v44
    %v46 = vpop.xlane.xlu0 %45
    %v47 = vmul.f32 %v43, %v34
    %v48 = vmul.f32 %v46, %v34
    %v49 = vadd.f32 %v47, 1e-05
    %v50 = vadd.f32 %v48, 1e-05
    %v51 = vrsqrt.pop %v49
    %v52 = vrsqrt.pop %v50
    %v53 = vmul.f32 %v37, %v51
    %v54 = vmul.f32 %v38, %v52
    %v55 = vld [vmem:[%s3] sm:$0x1]
    %v57 = vlaneseq
    %v58 = vshrl.u32 %v57, 7
    %v59 = vsub.s32 0, %v58
    %v60 = vrot.slane %v55, %v59
    %v62 = vmul.f32 %v53, %v60
    %v63 = vmul.f32 %v54, %v60
    %v64 = vld [vmem:[%s4] sm:$0x1]
    %v66 = vlaneseq
    %v67 = vshrl.u32 %v66, 7
    %v68 = vsub.s32 0, %v67
    %v69 = vrot.slane %v64, %v68
    %v71 = vadd.f32 %v62, %v69
    %v72 = vadd.f32 %v63, %v69
    %v73 = vpack.c.bf16 %v72, %v71
    %74 = vst.msk [vmem:[#allocation2] sm:$0xff] %vm27, %v73
  $region25: #{gpt_forward.11} parent=0 // pred_fallthru
    _
  %v75 = vld [vmem:[#allocation2] sm:$0xff]
  %v76 = vld [vmem:[%s1] sm:$0xf]
  %v77 = vld [vmem:[%s1 + $0x4] sm:$0xf]
  %v78 = vld [vmem:[%s1 + $0x8] sm:$0xf]
  %v79 = vld [vmem:[%s1 + $0xc] sm:$0xf]
  %v80 = vld [vmem:[%s2] sm:$0x1]
  %v82 = vlaneseq
  %v83 = vshrl.u32 %v82, 7
  %v84 = vsub.s32 0, %v83
  %v85 = vrot.slane %v80, %v84
  %v91 = vunpack.c.l.b16 %v76
  %v92 = vunpack.c.l.b16 %v77
  %v93 = vunpack.c.l.b16 %v78
  %v94 = vunpack.c.l.b16 %v79
  %v95 = vpack.c.b16 %v92, %v91
  %v96 = vpack.c.b16 %v94, %v93
  %vm99 = vcmask 261120
  %v101 = vsel %vm99, %v75, 0
  %103 = vmatprep.subr.bf16.mxu0 0
  %104 = vmatpush1.bf16.msra.mxu0 %v95
  %105 = vmatprep.subr.bf16.mxu0 0
  %106 = vmatpush1.bf16.msra.mxu0 %v96
  %107 = vmatprep.subr.bf16.mxu0 0
  %108 = vmatpush1.bf16.msra.mxu0 0
  %109 = vmatprep.subr.bf16.mxu0 0
  %110 = vmatpush1.bf16.msra.mxu0 0
  %111 = vmatprep.subr.bf16.mxu0 0
  %112 = vmatpush1.bf16.msra.mxu0 0
  %113 = vmatprep.subr.bf16.mxu0 0
  %114 = vmatpush1.bf16.msra.mxu0 0
  %115 = vmatprep.subr.bf16.mxu0 0
  %116 = vmatpush1.bf16.msra.mxu0 0
  %117 = vmatprep.subr.bf16.mxu0 0
  %118 = vmatpush1.bf16.msra.mxu0 0
  %119 = vmatprep.subr.bf16.mxu0 0
  %120 = vmatpush1.bf16.msra.mxu0 0
  %121 = vmatprep.subr.bf16.mxu0 0
  %122 = vmatpush1.bf16.msra.mxu0 0
  %123 = vmatprep.subr.bf16.mxu0 0
  %124 = vmatpush1.bf16.msra.mxu0 0
  %125 = vmatprep.subr.bf16.mxu0 0
  %126 = vmatpush1.bf16.msra.mxu0 0
  %127 = vmatprep.subr.bf16.mxu0 0
  %128 = vmatpush1.bf16.msra.mxu0 0
  %129 = vmatprep.subr.bf16.mxu0 0
  %130 = vmatpush1.bf16.msra.mxu0 0
  %131 = vmatprep.subr.bf16.mxu0 0
  %132 = vmatpush1.bf16.msra.mxu0 0
  %133 = vmatprep.subr.bf16.mxu0 0
  %134 = vmatpush1.bf16.msra.mxu0 0
  %135 = vmatprep.mubr.bf16.mxu0 0
  %136 = vmatmul.mubr.bf16.gmra.mrb[0].mxu0 %v101
  %v137 = vpop.f32.mrb[0].mxu0
  %v138 = vadd.f32 %v85, %v137
  %v139 = vpop.f32.mrb[0].mxu0
  %v140 = vpop.f32.mrb[0].mxu0
  %v141 = vadd.f32 %v85, %v140
  %v142 = vpop.f32.mrb[0].mxu0
  %143 = vdwg.mxu0
  %vm144 = vcmask 785408
  %145 = vst.msk [vmem:[%s5] sm:$0xff] %vm144, %v138
  %146 = vst.msk [vmem:[%s5 + $0x8] sm:$0xff] %vm144, %v141
  // Predicated region
  $region26: #{gpt_forward.11} parent=0 // pred_check
    _
  $region27: #{gpt_forward.11} parent=0 // pred_check_branch
    %148 = sbr.rel (0) target = $region29
  $region28: #{gpt_forward.11} parent=0 // pred_region
    _
  $region29: #{gpt_forward.11} parent=0 // pred_fallthru
    _
  // Predicated region
  $region30: #{gpt_forward.11} parent=0 // pred_check
    _
  $region31: #{gpt_forward.11} parent=0 // pred_check_branch
    %150 = sbr.rel (0) target = $region33
  $region32: #{gpt_forward.11} parent=0 // pred_region
    _
  $region33: #{gpt_forward.11} parent=0 // pred_fallthru
    _

// kernel: gpt_forward.15
$region0: #{gpt_forward.15}
  #allocation0 [shape = 'u32[]', space=smem, size = 0x4, offset = 0x4, fixed_abs, tag = 'smem constant byte address 0x4 - core index']
  #allocation1 [shape = 'u32[144,128]{1,0:T(1,128)}', space=vmem, size = 0x12000, scoped, tag = 'internal scratch']
  %s0 = inlined_call_operand.vmem [shape: f32[16,128], index: 0, kind: input, shape index: {}]
  %s1 = inlined_call_operand.vmem [shape: bf16[128,32], index: 1, kind: input, shape index: {}]
  %s2 = inlined_call_operand.vmem [shape: f32[1,32], index: 2, kind: input, shape index: {}]
  %s3 = inlined_call_operand.vmem [shape: f32[16,32], index: 3, kind: input, shape index: {}]
  %s4 = inlined_call_operand.vmem [shape: f32[16,32], index: 4, kind: output, shape index: {}]
  %s5 = sld [smem:[#allocation0]]
  $region26: #{gpt_forward.15} parent=0
    _
  %s7 = ssub.s32 1, %s5
  %s8 = scalar_select 0, %s7, %s5
  // Predicated region
  $region2: #{gpt_forward.15} parent=0 // pred_check
    _
  $region3: #{gpt_forward.15} parent=0 // pred_check_branch
    %10 = sbr.rel (0) target = $region5
  $region4: #{gpt_forward.15} parent=0 // pred_region
    _
  $region5: #{gpt_forward.15} parent=0 // pred_fallthru
    _
  // Predicated region
  $region6: #{gpt_forward.15} parent=0 // pred_check
    _
  $region7: #{gpt_forward.15} parent=0 // pred_check_branch
    %12 = sbr.rel (0) target = $region9
  $region8: #{gpt_forward.15} parent=0 // pred_region
    _
  $region9: #{gpt_forward.15} parent=0 // pred_fallthru
    _
  // Predicated region
  $region10: #{gpt_forward.15} parent=0 // pred_check
    _
  $region11: #{gpt_forward.15} parent=0 // pred_check_branch
    %14 = sbr.rel (0) target = $region13
  $region12: #{gpt_forward.15} parent=0 // pred_region
    _
  $region13: #{gpt_forward.15} parent=0 // pred_fallthru
    _
  // Predicated region
  $region14: #{gpt_forward.15} parent=0 // pred_check
    _
  $region15: #{gpt_forward.15} parent=0 // pred_check_branch
    %16 = sbr.rel (0) target = $region17
  $region16: #{gpt_forward.15} parent=0 // pred_region
    _
  $region17: #{gpt_forward.15} parent=0 // pred_fallthru
    _
  %v18 = vld [vmem:[%s0] sm:$0xff]
  %v19 = vld [vmem:[%s0 + $0x8] sm:$0xff]
  %v20 = vpack.c.bf16 %v19, %v18
  %v21 = vld [vmem:[%s1] sm:$0xf]
  %v22 = vld [vmem:[%s1 + $0x4] sm:$0xf]
  %v23 = vld [vmem:[%s1 + $0x8] sm:$0xf]
  %v24 = vld [vmem:[%s1 + $0xc] sm:$0xf]
  %v25 = vld [vmem:[%s1 + $0x10] sm:$0xf]
  %v26 = vld [vmem:[%s1 + $0x14] sm:$0xf]
  %v27 = vld [vmem:[%s1 + $0x18] sm:$0xf]
  %v28 = vld [vmem:[%s1 + $0x1c] sm:$0xf]
  %v29 = vld [vmem:[%s1 + $0x20] sm:$0xf]
  %v30 = vld [vmem:[%s1 + $0x24] sm:$0xf]
  %v31 = vld [vmem:[%s1 + $0x28] sm:$0xf]
  %v32 = vld [vmem:[%s1 + $0x2c] sm:$0xf]
  %v33 = vld [vmem:[%s1 + $0x30] sm:$0xf]
  %v34 = vld [vmem:[%s1 + $0x34] sm:$0xf]
  %v35 = vld [vmem:[%s1 + $0x38] sm:$0xf]
  %v36 = vld [vmem:[%s1 + $0x3c] sm:$0xf]
  %v37 = vld [vmem:[%s2] sm:$0x1]
  %v39 = vlaneseq
  %v40 = vshrl.u32 %v39, 7
  %v41 = vsub.s32 0, %v40
  %v42 = vrot.slane %v37, %v41
  %v60 = vunpack.c.l.b16 %v21
  %v61 = vunpack.c.l.b16 %v22
  %v62 = vunpack.c.l.b16 %v23
  %v63 = vunpack.c.l.b16 %v24
  %v64 = vunpack.c.l.b16 %v25
  %v65 = vunpack.c.l.b16 %v26
  %v66 = vunpack.c.l.b16 %v27
  %v67 = vunpack.c.l.b16 %v28
  %v68 = vunpack.c.l.b16 %v29
  %v69 = vunpack.c.l.b16 %v30
  %v70 = vunpack.c.l.b16 %v31
  %v71 = vunpack.c.l.b16 %v32
  %v72 = vunpack.c.l.b16 %v33
  %v73 = vunpack.c.l.b16 %v34
  %v74 = vunpack.c.l.b16 %v35
  %v75 = vunpack.c.l.b16 %v36
  %v76 = vpack.c.b16 %v61, %v60
  %v77 = vpack.c.b16 %v63, %v62
  %v78 = vpack.c.b16 %v65, %v64
  %v79 = vpack.c.b16 %v67, %v66
  %v80 = vpack.c.b16 %v69, %v68
  %v81 = vpack.c.b16 %v71, %v70
  %v82 = vpack.c.b16 %v73, %v72
  %v83 = vpack.c.b16 %v75, %v74
  %92 = vmatprep.subr.bf16.mxu0 0
  %93 = vmatpush1.bf16.msra.mxu0 %v76
  %94 = vmatprep.subr.bf16.mxu0 0
  %95 = vmatpush1.bf16.msra.mxu0 %v77
  %96 = vmatprep.subr.bf16.mxu0 0
  %97 = vmatpush1.bf16.msra.mxu0 %v78
  %98 = vmatprep.subr.bf16.mxu0 0
  %99 = vmatpush1.bf16.msra.mxu0 %v79
  %100 = vmatprep.subr.bf16.mxu0 0
  %101 = vmatpush1.bf16.msra.mxu0 %v80
  %102 = vmatprep.subr.bf16.mxu0 0
  %103 = vmatpush1.bf16.msra.mxu0 %v81
  %104 = vmatprep.subr.bf16.mxu0 0
  %105 = vmatpush1.bf16.msra.mxu0 %v82
  %106 = vmatprep.subr.bf16.mxu0 0
  %107 = vmatpush1.bf16.msra.mxu0 %v83
  %108 = vmatprep.subr.bf16.mxu0 0
  %109 = vmatpush1.bf16.msra.mxu0 0
  %110 = vmatprep.subr.bf16.mxu0 0
  %111 = vmatpush1.bf16.msra.mxu0 0
  %112 = vmatprep.subr.bf16.mxu0 0
  %113 = vmatpush1.bf16.msra.mxu0 0
  %114 = vmatprep.subr.bf16.mxu0 0
  %115 = vmatpush1.bf16.msra.mxu0 0
  %116 = vmatprep.subr.bf16.mxu0 0
  %117 = vmatpush1.bf16.msra.mxu0 0
  %118 = vmatprep.subr.bf16.mxu0 0
  %119 = vmatpush1.bf16.msra.mxu0 0
  %120 = vmatprep.subr.bf16.mxu0 0
  %121 = vmatpush1.bf16.msra.mxu0 0
  %122 = vmatprep.subr.bf16.mxu0 0
  %123 = vmatpush1.bf16.msra.mxu0 0
  %124 = vmatprep.mubr.bf16.mxu0 0
  %125 = vmatmul.mubr.bf16.gmra.mrb[0].mxu0 %v20
  %v126 = vpop.f32.mrb[0].mxu0
  %v127 = vadd.f32 %v42, %v126
  %v128 = vpop.f32.mrb[0].mxu0
  %v129 = vpop.f32.mrb[0].mxu0
  %v130 = vadd.f32 %v42, %v129
  %v131 = vpop.f32.mrb[0].mxu0
  %132 = vdwg.mxu0
  %v133 = vld [vmem:[%s3] sm:$0xff]
  %v134 = vld [vmem:[%s3 + $0x8] sm:$0xff]
  %v135 = vadd.f32 %v127, %v133
  %v136 = vadd.f32 %v130, %v134
  %vm137 = vcmask 261120
  %138 = vst.msk [vmem:[%s4] sm:$0xff] %vm137, %v135
  %139 = vst.msk [vmem:[%s4 + $0x8] sm:$0xff] %vm137, %v136
  // Predicated region
  $region18: #{gpt_forward.15} parent=0 // pred_check
    _
  $region19: #{gpt_forward.15} parent=0 // pred_check_branch
    %141 = sbr.rel (0) target = $region21
  $region20: #{gpt_forward.15} parent=0 // pred_region
    _
  $region21: #{gpt_forward.15} parent=0 // pred_fallthru
    _
  // Predicated region
  $region22: #{gpt_forward.15} parent=0 // pred_check
    _
  $region23: #{gpt_forward.15} parent=0 // pred_check_branch
    %143 = sbr.rel (0) target = $region25
  $region24: #{gpt_forward.15} parent=0 // pred_region
    _
  $region25: #{gpt_forward.15} parent=0 // pred_fallthru
    _

// kernel: gpt_forward.21
$region0: #{gpt_forward.21}
  #allocation0 [shape = 'u32[]', space=smem, size = 0x4, offset = 0x4, fixed_abs, tag = 'smem constant byte address 0x4 - core index']
  #allocation1 [shape = 'u32[144,128]{1,0:T(1,128)}', space=vmem, size = 0x12000, scoped, tag = 'internal scratch']
  #allocation2 [shape = 'bf16[16,32]{1,0:T(16,128)(2,1)}', space=vmem, size = 0x1000, scoped, tag = 'scratch operand']
  %s0 = inlined_call_operand.vmem [shape: f32[16,32], index: 0, kind: input, shape index: {}]
  %s1 = inlined_call_operand.vmem [shape: bf16[256,32], index: 1, kind: input, shape index: {}]
  %s2 = inlined_call_operand.vmem [shape: f32[1,256], index: 2, kind: input, shape index: {}]
  %s3 = inlined_call_operand.vmem [shape: f32[1,32], index: 3, kind: input, shape index: {}]
  %s4 = inlined_call_operand.vmem [shape: f32[1,32], index: 4, kind: input, shape index: {}]
  %s5 = inlined_call_operand.hbm [shape: f32[16,256], index: 5, kind: output, shape index: {}]
  %s6 = sld [smem:[#allocation0]]
  $region34: #{gpt_forward.21} parent=0
    _
  %s8 = ssub.s32 1, %s6
  %s9 = scalar_select 0, %s8, %s6
  $region1: #{gpt_forward.21} parent=0
    #allocation3 [shape = 'u8[16384]{0}', space=vmem, size = 0x4000, scoped, tag = 'output window, operand 0, single buffered']
    #allocation4 [shape = 's32[1]{0}', space=sflag, size = 0x4, scoped, tag = 'scoped memory for gpt_forward.21']
    %10 = vsyncpa [#allocation4], 0
    // Predicated region
    $region2: #{gpt_forward.21} parent=1 // pred_check
      _
    $region3: #{gpt_forward.21} parent=1 // pred_check_branch
      %12 = sbr.rel (0) target = $region5
    $region4: #{gpt_forward.21} parent=1 // pred_region
      _
    $region5: #{gpt_forward.21} parent=1 // pred_fallthru
      _
    // Predicated region
    $region6: #{gpt_forward.21} parent=1 // pred_check
      _
    $region7: #{gpt_forward.21} parent=1 // pred_check_branch
      %14 = sbr.rel (0) target = $region9
    $region8: #{gpt_forward.21} parent=1 // pred_region
      _
    $region9: #{gpt_forward.21} parent=1 // pred_fallthru
      _
    // Predicated region
    $region10: #{gpt_forward.21} parent=1 // pred_check
      _
    $region11: #{gpt_forward.21} parent=1 // pred_check_branch
      %16 = sbr.rel (0) target = $region13
    $region12: #{gpt_forward.21} parent=1 // pred_region
      _
    $region13: #{gpt_forward.21} parent=1 // pred_fallthru
      _
    // Predicated region
    $region14: #{gpt_forward.21} parent=1 // pred_check
      _
    $region15: #{gpt_forward.21} parent=1 // pred_check_branch
      %18 = sbr.rel (0) target = $region17
    $region16: #{gpt_forward.21} parent=1 // pred_region
      _
    $region17: #{gpt_forward.21} parent=1 // pred_fallthru
      _
    // Predicated region
    $region18: #{gpt_forward.21} parent=1 // pred_check
      _
    $region19: #{gpt_forward.21} parent=1 // pred_check_branch
      %20 = sbr.rel (0) target = $region21
    $region20: #{gpt_forward.21} parent=1 // pred_region
      _
    $region21: #{gpt_forward.21} parent=1 // pred_fallthru
      _
    %p22 = scmp.eq.s32.totalorder 0, 0
    // Predicated region
    $region22: #{gpt_forward.21} parent=1 // pred_check
      %p23 = pneg %p22
    $region23: #{gpt_forward.21} parent=1 // pred_check_branch
      %25 = sbr.rel (%p23) target = $region25
    $region24: #{gpt_forward.21} parent=1 // pred_region
      %v26 = vld [vmem:[%s0] sm:$0xff]
      %v27 = vld [vmem:[%s0 + $0x8] sm:$0xff]
      %vm28 = vcmask 261120
      %v29 = vsel %vm28, %v26, 0.0
      %30 = vadd.xlane.f32.xlu0 %v29
      %v31 = vpop.xlane.xlu0 %30
      %v32 = vsel %vm28, %v27, 0.0
      %33 = vadd.xlane.f32.xlu0 %v32
      %v34 = vpop.xlane.xlu0 %33
      %v35 = vrcp.pop 32.0
      %v36 = vmul.f32 %v31, %v35
      %v37 = vmul.f32 %v34, %v35
      %v38 = vsub.f32 %v26, %v36
      %v39 = vsub.f32 %v27, %v37
      %v40 = vmul.f32 %v38, %v38
      %v41 = vmul.f32 %v39, %v39
      %v42 = vsel %vm28, %v40, 0.0
      %43 = vadd.xlane.f32.xlu0 %v42
      %v44 = vpop.xlane.xlu0 %43
      %v45 = vsel %vm28, %v41, 0.0
      %46 = vadd.xlane.f32.xlu0 %v45
      %v47 = vpop.xlane.xlu0 %46
      %v48 = vmul.f32 %v44, %v35
      %v49 = vmul.f32 %v47, %v35
      %v50 = vadd.f32 %v48, 1e-05
      %v51 = vadd.f32 %v49, 1e-05
      %v52 = vrsqrt.pop %v50
      %v53 = vrsqrt.pop %v51
      %v54 = vmul.f32 %v38, %v52
      %v55 = vmul.f32 %v39, %v53
      %v56 = vld [vmem:[%s3] sm:$0x1]
      %v58 = vlaneseq
      %v59 = vshrl.u32 %v58, 7
      %v60 = vsub.s32 0, %v59
      %v61 = vrot.slane %v56, %v60
      %v63 = vmul.f32 %v54, %v61
      %v64 = vmul.f32 %v55, %v61
      %v65 = vld [vmem:[%s4] sm:$0x1]
      %v67 = vlaneseq
      %v68 = vshrl.u32 %v67, 7
      %v69 = vsub.s32 0, %v68
      %v70 = vrot.slane %v65, %v69
      %v72 = vadd.f32 %v63, %v70
      %v73 = vadd.f32 %v64, %v70
      %v74 = vpack.c.bf16 %v73, %v72
      %75 = vst.msk [vmem:[#allocation2] sm:$0xff] %vm28, %v74
    $region25: #{gpt_forward.21} parent=1 // pred_fallthru
      _
    %v76 = vld [vmem:[#allocation2] sm:$0xff]
    %v77 = vld [vmem:[%s1] sm:$0xf]
    %v78 = vld [vmem:[%s1 + $0x4] sm:$0xf]
    %v79 = vld [vmem:[%s1 + $0x8] sm:$0xf]
    %v80 = vld [vmem:[%s1 + $0xc] sm:$0xf]
    %v81 = vld [vmem:[%s1 + $0x10] sm:$0xf]
    %v82 = vld [vmem:[%s1 + $0x14] sm:$0xf]
    %v83 = vld [vmem:[%s1 + $0x18] sm:$0xf]
    %v84 = vld [vmem:[%s1 + $0x1c] sm:$0xf]
    %v85 = vld [vmem:[%s1 + $0x20] sm:$0xf]
    %v86 = vld [vmem:[%s1 + $0x24] sm:$0xf]
    %v87 = vld [vmem:[%s1 + $0x28] sm:$0xf]
    %v88 = vld [vmem:[%s1 + $0x2c] sm:$0xf]
    %v89 = vld [vmem:[%s1 + $0x30] sm:$0xf]
    %v90 = vld [vmem:[%s1 + $0x34] sm:$0xf]
    %v91 = vld [vmem:[%s1 + $0x38] sm:$0xf]
    %v92 = vld [vmem:[%s1 + $0x3c] sm:$0xf]
    %v93 = vld [vmem:[%s1 + $0x40] sm:$0xf]
    %v94 = vld [vmem:[%s1 + $0x44] sm:$0xf]
    %v95 = vld [vmem:[%s1 + $0x48] sm:$0xf]
    %v96 = vld [vmem:[%s1 + $0x4c] sm:$0xf]
    %v97 = vld [vmem:[%s1 + $0x50] sm:$0xf]
    %v98 = vld [vmem:[%s1 + $0x54] sm:$0xf]
    %v99 = vld [vmem:[%s1 + $0x58] sm:$0xf]
    %v100 = vld [vmem:[%s1 + $0x5c] sm:$0xf]
    %v101 = vld [vmem:[%s1 + $0x60] sm:$0xf]
    %v102 = vld [vmem:[%s1 + $0x64] sm:$0xf]
    %v103 = vld [vmem:[%s1 + $0x68] sm:$0xf]
    %v104 = vld [vmem:[%s1 + $0x6c] sm:$0xf]
    %v105 = vld [vmem:[%s1 + $0x70] sm:$0xf]
    %v106 = vld [vmem:[%s1 + $0x74] sm:$0xf]
    %v107 = vld [vmem:[%s1 + $0x78] sm:$0xf]
    %v108 = vld [vmem:[%s1 + $0x7c] sm:$0xf]
    %v109 = vld [vmem:[%s2] sm:$0x3]
    %v111 = vlaneseq
    %v112 = vshrl.u32 %v111, 7
    %v113 = vsub.s32 0, %v112
    %v114 = vrot.slane %v109, %v113
    %v115 = vlaneseq
    %v116 = vshrl.u32 %v115, 7
    %v117 = vsub.s32 1, %v116
    %v118 = vrot.slane %v109, %v117
    %v153 = vunpack.c.l.b16 %v77
    %v154 = vunpack.c.l.b16 %v78
    %v155 = vunpack.c.l.b16 %v79
    %v156 = vunpack.c.l.b16 %v80
    %v157 = vunpack.c.l.b16 %v81
    %v158 = vunpack.c.l.b16 %v82
    %v159 = vunpack.c.l.b16 %v83
    %v160 = vunpack.c.l.b16 %v84
    %v161 = vunpack.c.l.b16 %v85
    %v162 = vunpack.c.l.b16 %v86
    %v163 = vunpack.c.l.b16 %v87
    %v164 = vunpack.c.l.b16 %v88
    %v165 = vunpack.c.l.b16 %v89
    %v166 = vunpack.c.l.b16 %v90
    %v167 = vunpack.c.l.b16 %v91
    %v168 = vunpack.c.l.b16 %v92
    %v169 = vunpack.c.l.b16 %v93
    %v170 = vunpack.c.l.b16 %v94
    %v171 = vunpack.c.l.b16 %v95
    %v172 = vunpack.c.l.b16 %v96
    %v173 = vunpack.c.l.b16 %v97
    %v174 = vunpack.c.l.b16 %v98
    %v175 = vunpack.c.l.b16 %v99
    %v176 = vunpack.c.l.b16 %v100
    %v177 = vunpack.c.l.b16 %v101
    %v178 = vunpack.c.l.b16 %v102
    %v179 = vunpack.c.l.b16 %v103
    %v180 = vunpack.c.l.b16 %v104
    %v181 = vunpack.c.l.b16 %v105
    %v182 = vunpack.c.l.b16 %v106
    %v183 = vunpack.c.l.b16 %v107
    %v184 = vunpack.c.l.b16 %v108
    %v185 = vpack.c.b16 %v154, %v153
    %v186 = vpack.c.b16 %v156, %v155
    %v187 = vpack.c.b16 %v158, %v157
    %v188 = vpack.c.b16 %v160, %v159
    %v189 = vpack.c.b16 %v162, %v161
    %v190 = vpack.c.b16 %v164, %v163
    %v191 = vpack.c.b16 %v166, %v165
    %v192 = vpack.c.b16 %v168, %v167
    %v193 = vpack.c.b16 %v170, %v169
    %v194 = vpack.c.b16 %v172, %v171
    %v195 = vpack.c.b16 %v174, %v173
    %v196 = vpack.c.b16 %v176, %v175
    %v197 = vpack.c.b16 %v178, %v177
    %v198 = vpack.c.b16 %v180, %v179
    %v199 = vpack.c.b16 %v182, %v181
    %v200 = vpack.c.b16 %v184, %v183
    %vm201 = vcmask 261120
    %v203 = vsel %vm201, %v76, 0
    %v206 = vsel %vm201, %v185, 0
    %v209 = vsel %vm201, %v186, 0
    %v212 = vsel %vm201, %v187, 0
    %v215 = vsel %vm201, %v188, 0
    %v218 = vsel %vm201, %v189, 0
    %v221 = vsel %vm201, %v190, 0
    %v224 = vsel %vm201, %v191, 0
    %v227 = vsel %vm201, %v192, 0
    %v230 = vsel %vm201, %v193, 0
    %v233 = vsel %vm201, %v194, 0
    %v236 = vsel %vm201, %v195, 0
    %v239 = vsel %vm201, %v196, 0
    %v242 = vsel %vm201, %v197, 0
    %v245 = vsel %vm201, %v198, 0
    %v248 = vsel %vm201, %v199, 0
    %v251 = vsel %vm201, %v200, 0
    %253 = vmatprep.subr.bf16.mxu0 0
    %254 = vmatpush1.bf16.xpose.msra.mxu0 %v206
    %255 = vmatprep.subr.bf16.mxu0 0
    %256 = vmatpush1.bf16.xpose.msra.mxu0 %v209
    %257 = vmatprep.subr.bf16.mxu0 0
    %258 = vmatpush1.bf16.xpose.msra.mxu0 %v212
    %259 = vmatprep.subr.bf16.mxu0 0
    %260 = vmatpush1.bf16.xpose.msra.mxu0 %v215
    %261 = vmatprep.subr.bf16.mxu0 0
    %262 = vmatpush1.bf16.xpose.msra.mxu0 %v218
    %263 = vmatprep.subr.bf16.mxu0 0
    %264 = vmatpush1.bf16.xpose.msra.mxu0 %v221
    %265 = vmatprep.subr.bf16.mxu0 0
    %266 = vmatpush1.bf16.xpose.msra.mxu0 %v224
    %267 = vmatprep.subr.bf16.mxu0 0
    %268 = vmatpush1.bf16.xpose.msra.mxu0 %v227
    %269 = vmatprep.subr.bf16.mxu0 0
    %270 = vmatpush1.bf16.xpose.msra.mxu0 %v230
    %271 = vmatprep.subr.bf16.mxu0 0
    %272 = vmatpush1.bf16.xpose.msra.mxu0 %v233
    %273 = vmatprep.subr.bf16.mxu0 0
    %274 = vmatpush1.bf16.xpose.msra.mxu0 %v236
    %275 = vmatprep.subr.bf16.mxu0 0
    %276 = vmatpush1.bf16.xpose.msra.mxu0 %v239
    %277 = vmatprep.subr.bf16.mxu0 0
    %278 = vmatpush1.bf16.xpose.msra.mxu0 %v242
    %279 = vmatprep.subr.bf16.mxu0 0
    %280 = vmatpush1.bf16.xpose.msra.mxu0 %v245
    %281 = vmatprep.subr.bf16.mxu0 0
    %282 = vmatpush1.bf16.xpose.msra.mxu0 %v248
    %283 = vmatprep.subr.bf16.mxu0 0
    %284 = vmatpush1.bf16.xpose.msra.mxu0 %v251
    %285 = vmatprep.mubr.bf16.mxu0 0
    %286 = vmatmul.mubr.bf16.gmra.mrb[0].mxu0 %v203
    %v287 = vpop.f32.mrb[0].mxu0
    %v288 = vadd.f32 %v114, %v287
    %v289 = vpop.f32.mrb[0].mxu0
    %v290 = vadd.f32 %v118, %v289
    %v291 = vpop.f32.mrb[0].mxu0
    %v292 = vadd.f32 %v114, %v291
    %v293 = vpop.f32.mrb[0].mxu0
    %v294 = vadd.f32 %v118, %v293
    %295 = vdwg.mxu0
    %296 = vst [vmem:[#allocation3] sm:$0xff] %v288
    %297 = vst [vmem:[#allocation3 + $0x8] sm:$0xff] %v290
    %298 = vst [vmem:[#allocation3 + $0x10] sm:$0xff] %v292
    %299 = vst [vmem:[#allocation3 + $0x18] sm:$0xff] %v294
    // Predicated region
    $region26: #{gpt_forward.21} parent=1 // pred_check
      _
    $region27: #{gpt_forward.21} parent=1 // pred_check_branch
      %301 = sbr.rel (0) target = $region29
    $region28: #{gpt_forward.21} parent=1 // pred_region
      %s303 = ssub.s32 512, 512
      %304 = vsyncadd [#allocation4], %s303
      %s305 = sshll.u32 [#allocation3], 4
      %s306 = int_to_ptr.vmem [resolvable:$true] %s305
      %311 = dma.vmem_to_hbm [thread:$0]  %s306, 512, %s5, [#allocation4], 256, 256, 16
    $region29: #{gpt_forward.21} parent=1 // pred_fallthru
      _
    // Predicated region
    $region30: #{gpt_forward.21} parent=1 // pred_check
      _
    $region31: #{gpt_forward.21} parent=1 // pred_check_branch
      %313 = sbr.rel (0) target = $region33
    $region32: #{gpt_forward.21} parent=1 // pred_region
      %314 = dma.done [#allocation4], 512
    $region33: #{gpt_forward.21} parent=1 // pred_fallthru
      _
    %315 = vsyncpa [#allocation4], 1

// kernel: gpt_forward.12
$region0: #{gpt_forward.12}
  #allocation0 [shape = 'u32[]', space=smem, size = 0x4, offset = 0x4, fixed_abs, tag = 'smem constant byte address 0x4 - core index']
  #allocation1 [shape = 'u32[144,128]{1,0:T(1,128)}', space=vmem, size = 0x12000, scoped, tag = 'internal scratch']
  #allocation2 [shape = 'f32[8,8,1]{2,1,0:T(8,128)}', space=vmem, size = 0x8000, scoped, tag = 'scratch operand']
  #allocation3 [shape = 'f32[8,8,1]{2,1,0:T(8,128)}', space=vmem, size = 0x8000, scoped, tag = 'scratch operand']
  #allocation4 [shape = 'f32[8,8,8]{2,1,0:T(8,128)}', space=vmem, size = 0x8000, scoped, tag = 'scratch operand']
  %s0 = inlined_call_operand.vmem [shape: f32[8,8,8], index: 0, kind: input, shape index: {}]
  %s1 = inlined_call_operand.vmem [shape: f32[8,8,8], index: 1, kind: input, shape index: {}]
  %s2 = inlined_call_operand.vmem [shape: f32[8,8,8], index: 2, kind: input, shape index: {}]
  %s3 = inlined_call_operand.vmem [shape: f32[8,8,8], index: 3, kind: output, shape index: {}]
  %s4 = sld [smem:[#allocation0]]
  $region38: #{gpt_forward.12} parent=0
    _
  %s6 = ssub.s32 1, %s4
  %s7 = scalar_select 0, %s6, %s4
  // Predicated region
  $region2: #{gpt_forward.12} parent=0 // pred_check
    _
  $region3: #{gpt_forward.12} parent=0 // pred_check_branch
    %9 = sbr.rel (0) target = $region5
  $region4: #{gpt_forward.12} parent=0 // pred_region
    _
  $region5: #{gpt_forward.12} parent=0 // pred_fallthru
    _
  // Predicated region
  $region6: #{gpt_forward.12} parent=0 // pred_check
    _
  $region7: #{gpt_forward.12} parent=0 // pred_check_branch
    %11 = sbr.rel (0) target = $region9
  $region8: #{gpt_forward.12} parent=0 // pred_region
    _
  $region9: #{gpt_forward.12} parent=0 // pred_fallthru
    _
  // Predicated region
  $region10: #{gpt_forward.12} parent=0 // pred_check
    _
  $region11: #{gpt_forward.12} parent=0 // pred_check_branch
    %13 = sbr.rel (0) target = $region13
  $region12: #{gpt_forward.12} parent=0 // pred_region
    _
  $region13: #{gpt_forward.12} parent=0 // pred_fallthru
    _
  %p15 = scmp.eq.s32.totalorder 0, 0
  // Predicated region
  $region14: #{gpt_forward.12} parent=0 // pred_check
    %p16 = pneg %p15
  $region15: #{gpt_forward.12} parent=0 // pred_check_branch
    %18 = sbr.rel (%p16) target = $region17
  $region16: #{gpt_forward.12} parent=0 // pred_region
    %vm19 = vcmask 7168
    %20 = vst.msk [vmem:[#allocation2] sm:$0xff] %vm19, -inf
    %21 = vst.msk [vmem:[#allocation2 + $0x8] sm:$0xff] %vm19, -inf
    %22 = vst.msk [vmem:[#allocation2 + $0x10] sm:$0xff] %vm19, -inf
    %23 = vst.msk [vmem:[#allocation2 + $0x18] sm:$0xff] %vm19, -inf
    %24 = vst.msk [vmem:[#allocation2 + $0x20] sm:$0xff] %vm19, -inf
    %25 = vst.msk [vmem:[#allocation2 + $0x28] sm:$0xff] %vm19, -inf
    %26 = vst.msk [vmem:[#allocation2 + $0x30] sm:$0xff] %vm19, -inf
    %27 = vst.msk [vmem:[#allocation2 + $0x38] sm:$0xff] %vm19, -inf
    %28 = vst.msk [vmem:[#allocation3] sm:$0xff] %vm19, 0.0
    %29 = vst.msk [vmem:[#allocation3 + $0x8] sm:$0xff] %vm19, 0.0
    %30 = vst.msk [vmem:[#allocation3 + $0x10] sm:$0xff] %vm19, 0.0
    %31 = vst.msk [vmem:[#allocation3 + $0x18] sm:$0xff] %vm19, 0.0
    %32 = vst.msk [vmem:[#allocation3 + $0x20] sm:$0xff] %vm19, 0.0
    %33 = vst.msk [vmem:[#allocation3 + $0x28] sm:$0xff] %vm19, 0.0
    %34 = vst.msk [vmem:[#allocation3 + $0x30] sm:$0xff] %vm19, 0.0
    %35 = vst.msk [vmem:[#allocation3 + $0x38] sm:$0xff] %vm19, 0.0
    %vm36 = vcmask 64512
    %37 = vst.msk [vmem:[#allocation4] sm:$0xff] %vm36, 0.0
    %38 = vst.msk [vmem:[#allocation4 + $0x8] sm:$0xff] %vm36, 0.0
    %39 = vst.msk [vmem:[#allocation4 + $0x10] sm:$0xff] %vm36, 0.0
    %40 = vst.msk [vmem:[#allocation4 + $0x18] sm:$0xff] %vm36, 0.0
    %41 = vst.msk [vmem:[#allocation4 + $0x20] sm:$0xff] %vm36, 0.0
    %42 = vst.msk [vmem:[#allocation4 + $0x28] sm:$0xff] %vm36, 0.0
    %43 = vst.msk [vmem:[#allocation4 + $0x30] sm:$0xff] %vm36, 0.0
    %44 = vst.msk [vmem:[#allocation4 + $0x38] sm:$0xff] %vm36, 0.0
  $region17: #{gpt_forward.12} parent=0 // pred_fallthru
    _
  %p45 = scmp.lt.s32.totalorder 0, 0
  // Predicated region
  $region18: #{gpt_forward.12} parent=0 // pred_check
    %p46 = pneg %p45
  $region19: #{gpt_forward.12} parent=0 // pred_check_branch
    %48 = sbr.rel (%p46) target = $region21
  $region20: #{gpt_forward.12} parent=0 // pred_region
    %v49 = vld [vmem:[%s0] sm:$0xff]
    %v50 = vld [vmem:[%s0 + $0x8] sm:$0xff]
    %v51 = vld [vmem:[%s0 + $0x10] sm:$0xff]
    %v52 = vld [vmem:[%s0 + $0x18] sm:$0xff]
    %v53 = vld [vmem:[%s0 + $0x20] sm:$0xff]
    %v54 = vld [vmem:[%s0 + $0x28] sm:$0xff]
    %v55 = vld [vmem:[%s0 + $0x30] sm:$0xff]
    %v56 = vld [vmem:[%s0 + $0x38] sm:$0xff]
    %v57 = vpack.c.bf16 %v49, %v49
    %v58 = vpack.c.bf16 %v50, %v50
    %v59 = vpack.c.bf16 %v51, %v51
    %v60 = vpack.c.bf16 %v52, %v52
    %v61 = vpack.c.bf16 %v53, %v53
    %v62 = vpack.c.bf16 %v54, %v54
    %v63 = vpack.c.bf16 %v55, %v55
    %v64 = vpack.c.bf16 %v56, %v56
    %v65 = vld [vmem:[%s1] sm:$0xff]
    %v66 = vld [vmem:[%s1 + $0x8] sm:$0xff]
    %v67 = vld [vmem:[%s1 + $0x10] sm:$0xff]
    %v68 = vld [vmem:[%s1 + $0x18] sm:$0xff]
    %v69 = vld [vmem:[%s1 + $0x20] sm:$0xff]
    %v70 = vld [vmem:[%s1 + $0x28] sm:$0xff]
    %v71 = vld [vmem:[%s1 + $0x30] sm:$0xff]
    %v72 = vld [vmem:[%s1 + $0x38] sm:$0xff]
    %v73 = vpack.c.bf16 %v65, %v65
    %v74 = vpack.c.bf16 %v66, %v66
    %v75 = vpack.c.bf16 %v67, %v67
    %v76 = vpack.c.bf16 %v68, %v68
    %v77 = vpack.c.bf16 %v69, %v69
    %v78 = vpack.c.bf16 %v70, %v70
    %v79 = vpack.c.bf16 %v71, %v71
    %v80 = vpack.c.bf16 %v72, %v72
    %vm81 = vcmask 64512
    %v83 = vsel %vm81, %v57, 0
    %v86 = vsel %vm81, %v73, 0
    %88 = vmatprep.subr.bf16.mxu0 0
    %89 = vmatpush1.bf16.xpose.msra.mxu0 %v86
    %90 = vmatprep.subr.bf16.mxu0 0
    %91 = vmatpush1.bf16.xpose.msra.mxu0 0
    %92 = vmatprep.subr.bf16.mxu0 0
    %93 = vmatpush1.bf16.xpose.msra.mxu0 0
    %94 = vmatprep.subr.bf16.mxu0 0
    %95 = vmatpush1.bf16.xpose.msra.mxu0 0
    %96 = vmatprep.subr.bf16.mxu0 0
    %97 = vmatpush1.bf16.xpose.msra.mxu0 0
    %98 = vmatprep.subr.bf16.mxu0 0
    %99 = vmatpush1.bf16.xpose.msra.mxu0 0
    %100 = vmatprep.subr.bf16.mxu0 0
    %101 = vmatpush1.bf16.xpose.msra.mxu0 0
    %102 = vmatprep.subr.bf16.mxu0 0
    %103 = vmatpush1.bf16.xpose.msra.mxu0 0
    %104 = vmatprep.subr.bf16.mxu0 0
    %105 = vmatpush1.bf16.xpose.msra.mxu0 0
    %106 = vmatprep.subr.bf16.mxu0 0
    %107 = vmatpush1.bf16.xpose.msra.mxu0 0
    %108 = vmatprep.subr.bf16.mxu0 0
    %109 = vmatpush1.bf16.xpose.msra.mxu0 0
    %110 = vmatprep.subr.bf16.mxu0 0
    %111 = vmatpush1.bf16.xpose.msra.mxu0 0
    %112 = vmatprep.subr.bf16.mxu0 0
    %113 = vmatpush1.bf16.xpose.msra.mxu0 0
    %114 = vmatprep.subr.bf16.mxu0 0
    %115 = vmatpush1.bf16.xpose.msra.mxu0 0
    %116 = vmatprep.subr.bf16.mxu0 0
    %117 = vmatpush1.bf16.xpose.msra.mxu0 0
    %118 = vmatprep.subr.bf16.mxu0 0
    %119 = vmatpush1.bf16.xpose.msra.mxu0 0
    %120 = vmatprep.mubr.bf16.mxu0 0
    %121 = vmatmul.mubr.bf16.gmra.mrb[0].mxu0 %v83
    %v122 = vpop.f32.mrb[0].mxu0
    %v123 = vadd.f32 0.0, %v122
    %v124 = vpop.f32.mrb[0].mxu0
    %v125 = vpop.f32.mrb[0].mxu0
    %v126 = vpop.f32.mrb[0].mxu0
    %127 = vdwg.mxu0
    %v129 = vsel %vm81, %v58, 0
    %v132 = vsel %vm81, %v74, 0
    %134 = vmatprep.subr.bf16.mxu0 0
    %135 = vmatpush1.bf16.xpose.msra.mxu0 %v132
    %136 = vmatprep.subr.bf16.mxu0 0
    %137 = vmatpush1.bf16.xpose.msra.mxu0 0
    %138 = vmatprep.subr.bf16.mxu0 0
    %139 = vmatpush1.bf16.xpose.msra.mxu0 0
    %140 = vmatprep.subr.bf16.mxu0 0
    %141 = vmatpush1.bf16.xpose.msra.mxu0 0
    %142 = vmatprep.subr.bf16.mxu0 0
    %143 = vmatpush1.bf16.xpose.msra.mxu0 0
    %144 = vmatprep.subr.bf16.mxu0 0
    %145 = vmatpush1.bf16.xpose.msra.mxu0 0
    %146 = vmatprep.subr.bf16.mxu0 0
    %147 = vmatpush1.bf16.xpose.msra.mxu0 0
    %148 = vmatprep.subr.bf16.mxu0 0
    %149 = vmatpush1.bf16.xpose.msra.mxu0 0
    %150 = vmatprep.subr.bf16.mxu0 0
    %151 = vmatpush1.bf16.xpose.msra.mxu0 0
    %152 = vmatprep.subr.bf16.mxu0 0
    %153 = vmatpush1.bf16.xpose.msra.mxu0 0
    %154 = vmatprep.subr.bf16.mxu0 0
    %155 = vmatpush1.bf16.xpose.msra.mxu0 0
    %156 = vmatprep.subr.bf16.mxu0 0
    %157 = vmatpush1.bf16.xpose.msra.mxu0 0
    %158 = vmatprep.subr.bf16.mxu0 0
    %159 = vmatpush1.bf16.xpose.msra.mxu0 0
    %160 = vmatprep.subr.bf16.mxu0 0
    %161 = vmatpush1.bf16.xpose.msra.mxu0 0
    %162 = vmatprep.subr.bf16.mxu0 0
    %163 = vmatpush1.bf16.xpose.msra.mxu0 0
    %164 = vmatprep.subr.bf16.mxu0 0
    %165 = vmatpush1.bf16.xpose.msra.mxu0 0
    %166 = vmatprep.mubr.bf16.mxu0 0
    %167 = vmatmul.mubr.bf16.gmra.mrb[0].mxu0 %v129
    %v168 = vpop.f32.mrb[0].mxu0
    %v169 = vadd.f32 0.0, %v168
    %v170 = vpop.f32.mrb[0].mxu0
    %v171 = vpop.f32.mrb[0].mxu0
    %v172 = vpop.f32.mrb[0].mxu0
    %173 = vdwg.mxu0
    %v175 = vsel %vm81, %v59, 0
    %v178 = vsel %vm81, %v75, 0
    %180 = vmatprep.subr.bf16.mxu0 0
    %181 = vmatpush1.bf16.xpose.msra.mxu0 %v178
    %182 = vmatprep.subr.bf16.mxu0 0
    %183 = vmatpush1.bf16.xpose.msra.mxu0 0
    %184 = vmatprep.subr.bf16.mxu0 0
    %185 = vmatpush1.bf16.xpose.msra.mxu0 0
    %186 = vmatprep.subr.bf16.mxu0 0
    %187 = vmatpush1.bf16.xpose.msra.mxu0 0
    %188 = vmatprep.subr.bf16.mxu0 0
    %189 = vmatpush1.bf16.xpose.msra.mxu0 0
    %190 = vmatprep.subr.bf16.mxu0 0
    %191 = vmatpush1.bf16.xpose.msra.mxu0 0
    %192 = vmatprep.subr.bf16.mxu0 0
    %193 = vmatpush1.bf16.xpose.msra.mxu0 0
    %194 = vmatprep.subr.bf16.mxu0 0
    %195 = vmatpush1.bf16.xpose.msra.mxu0 0
    %196 = vmatprep.subr.bf16.mxu0 0
    %197 = vmatpush1.bf16.xpose.msra.mxu0 0
    %198 = vmatprep.subr.bf16.mxu0 0
    %199 = vmatpush1.bf16.xpose.msra.mxu0 0
    %200 = vmatprep.subr.bf16.mxu0 0
    %201 = vmatpush1.bf16.xpose.msra.mxu0 0
    %202 = vmatprep.subr.bf16.mxu0 0
    %203 = vmatpush1.bf16.xpose.msra.mxu0 0
    %204 = vmatprep.subr.bf16.mxu0 0
    %205 = vmatpush1.bf16.xpose.msra.mxu0 0
    %206 = vmatprep.subr.bf16.mxu0 0
    %207 = vmatpush1.bf16.xpose.msra.mxu0 0
    %208 = vmatprep.subr.bf16.mxu0 0
    %209 = vmatpush1.bf16.xpose.msra.mxu0 0
    %210 = vmatprep.subr.bf16.mxu0 0
    %211 = vmatpush1.bf16.xpose.msra.mxu0 0
    %212 = vmatprep.mubr.bf16.mxu0 0
    %213 = vmatmul.mubr.bf16.gmra.mrb[0].mxu0 %v175
    %v214 = vpop.f32.mrb[0].mxu0
    %v215 = vadd.f32 0.0, %v214
    %v216 = vpop.f32.mrb[0].mxu0
    %v217 = vpop.f32.mrb[0].mxu0
    %v218 = vpop.f32.mrb[0].mxu0
    %219 = vdwg.mxu0
    %v221 = vsel %vm81, %v60, 0
    %v224 = vsel %vm81, %v76, 0
    %226 = vmatprep.subr.bf16.mxu0 0
    %227 = vmatpush1.bf16.xpose.msra.mxu0 %v224
    %228 = vmatprep.subr.bf16.mxu0 0
    %229 = vmatpush1.bf16.xpose.msra.mxu0 0
    %230 = vmatprep.subr.bf16.mxu0 0
    %231 = vmatpush1.bf16.xpose.msra.mxu0 0
    %232 = vmatprep.subr.bf16.mxu0 0
    %233 = vmatpush1.bf16.xpose.msra.mxu0 0
    %234 = vmatprep.subr.bf16.mxu0 0
    %235 = vmatpush1.bf16.xpose.msra.mxu0 0
    %236 = vmatprep.subr.bf16.mxu0 0
    %237 = vmatpush1.bf16.xpose.msra.mxu0 0
    %238 = vmatprep.subr.bf16.mxu0 0
    %239 = vmatpush1.bf16.xpose.msra.mxu0 0
    %240 = vmatprep.subr.bf16.mxu0 0
    %241 = vmatpush1.bf16.xpose.msra.mxu0 0
    %242 = vmatprep.subr.bf16.mxu0 0
    %243 = vmatpush1.bf16.xpose.msra.mxu0 0
    %244 = vmatprep.subr.bf16.mxu0 0
    %245 = vmatpush1.bf16.xpose.msra.mxu0 0
    %246 = vmatprep.subr.bf16.mxu0 0
    %247 = vmatpush1.bf16.xpose.msra.mxu0 0
    %248 = vmatprep.subr.bf16.mxu0 0
    %249 = vmatpush1.bf16.xpose.msra.mxu0 0
    %250 = vmatprep.subr.bf16.mxu0 0
    %251 = vmatpush1.bf16.xpose.msra.mxu0 0
    %252 = vmatprep.subr.bf16.mxu0 0
    %253 = vmatpush1.bf16.xpose.msra.mxu0 0
    %254 = vmatprep.subr.bf16.mxu0 0
    %255 = vmatpush1.bf16.xpose.msra.mxu0 0
    %256 = vmatprep.subr.bf16.mxu0 0
    %257 = vmatpush1.bf16.xpose.msra.mxu0 0
    %258 = vmatprep.mubr.bf16.mxu0 0
    %259 = vmatmul.mubr.bf16.gmra.mrb[0].mxu0 %v221
    %v260 = vpop.f32.mrb[0].mxu0
    %v261 = vadd.f32 0.0, %v260
    %v262 = vpop.f32.mrb[0].mxu0
    %v263 = vpop.f32.mrb[0].mxu0
    %v264 = vpop.f32.mrb[0].mxu0
    %265 = vdwg.mxu0
    %v267 = vsel %vm81, %v61, 0
    %v270 = vsel %vm81, %v77, 0
    %272 = vmatprep.subr.bf16.mxu0 0
    %273 = vmatpush1.bf16.xpose.msra.mxu0 %v270
    %274 = vmatprep.subr.bf16.mxu0 0
    %275 = vmatpush1.bf16.xpose.msra.mxu0 0
    %276 = vmatprep.subr.bf16.mxu0 0
    %277 = vmatpush1.bf16.xpose.msra.mxu0 0
    %278 = vmatprep.subr.bf16.mxu0 0
    %279 = vmatpush1.bf16.xpose.msra.mxu0 0
    %280 = vmatprep.subr.bf16.mxu0 0
    %281 = vmatpush1.bf16.xpose.msra.mxu0 0
    %282 = vmatprep.subr.bf16.mxu0 0
    %283 = vmatpush1.bf16.xpose.msra.mxu0 0
    %284 = vmatprep.subr.bf16.mxu0 0
    %285 = vmatpush1.bf16.xpose.msra.mxu0 0
    %286 = vmatprep.subr.bf16.mxu0 0
    %287 = vmatpush1.bf16.xpose.msra.mxu0 0
    %288 = vmatprep.subr.bf16.mxu0 0
    %289 = vmatpush1.bf16.xpose.msra.mxu0 0
    %290 = vmatprep.subr.bf16.mxu0 0
    %291 = vmatpush1.bf16.xpose.msra.mxu0 0
    %292 = vmatprep.subr.bf16.mxu0 0
    %293 = vmatpush1.bf16.xpose.msra.mxu0 0
    %294 = vmatprep.subr.bf16.mxu0 0
    %295 = vmatpush1.bf16.xpose.msra.mxu0 0
    %296 = vmatprep.subr.bf16.mxu0 0
    %297 = vmatpush1.bf16.xpose.msra.mxu0 0
    %298 = vmatprep.subr.bf16.mxu0 0
    %299 = vmatpush1.bf16.xpose.msra.mxu0 0
    %300 = vmatprep.subr.bf16.mxu0 0
    %301 = vmatpush1.bf16.xpose.msra.mxu0 0
    %302 = vmatprep.subr.bf16.mxu0 0
    %303 = vmatpush1.bf16.xpose.msra.mxu0 0
    %304 = vmatprep.mubr.bf16.mxu0 0
    %305 = vmatmul.mubr.bf16.gmra.mrb[0].mxu0 %v267
    %v306 = vpop.f32.mrb[0].mxu0
    %v307 = vadd.f32 0.0, %v306
    %v308 = vpop.f32.mrb[0].mxu0
    %v309 = vpop.f32.mrb[0].mxu0
    %v310 = vpop.f32.mrb[0].mxu0
    %311 = vdwg.mxu0
    %v313 = vsel %vm81, %v62, 0
    %v316 = vsel %vm81, %v78, 0
    %318 = vmatprep.subr.bf16.mxu0 0
    %319 = vmatpush1.bf16.xpose.msra.mxu0 %v316
    %320 = vmatprep.subr.bf16.mxu0 0
    %321 = vmatpush1.bf16.xpose.msra.mxu0 0
    %322 = vmatprep.subr.bf16.mxu0 0
    %323 = vmatpush1.bf16.xpose.msra.mxu0 0
    %324 = vmatprep.subr.bf16.mxu0 0
    %325 = vmatpush1.bf16.xpose.msra.mxu0 0
    %326 = vmatprep.subr.bf16.mxu0 0
    %327 = vmatpush1.bf16.xpose.msra.mxu0 0
    %328 = vmatprep.subr.bf16.mxu0 0
    %329 = vmatpush1.bf16.xpose.msra.mxu0 0
    %330 = vmatprep.subr.bf16.mxu0 0
    %331 = vmatpush1.bf16.xpose.msra.mxu0 0
    %332 = vmatprep.subr.bf16.mxu0 0
    %333 = vmatpush1.bf16.xpose.msra.mxu0 0
    %334 = vmatprep.subr.bf16.mxu0 0
    %335 = vmatpush1.bf16.xpose.msra.mxu0 0
    %336 = vmatprep.subr.bf16.mxu0 0
    %337 = vmatpush1.bf16.xpose.msra.mxu0 0
    %338 = vmatprep.subr.bf16.mxu0 0
    %339 = vmatpush1.bf16.xpose.msra.mxu0 0
    %340 = vmatprep.subr.bf16.mxu0 0
    %341 = vmatpush1.bf16.xpose.msra.mxu0 0
    %342 = vmatprep.subr.bf16.mxu0 0
    %343 = vmatpush1.bf16.xpose.msra.mxu0 0
    %344 = vmatprep.subr.bf16.mxu0 0
    %345 = vmatpush1.bf16.xpose.msra.mxu0 0
    %346 = vmatprep.subr.bf16.mxu0 0
    %347 = vmatpush1.bf16.xpose.msra.mxu0 0
    %348 = vmatprep.subr.bf16.mxu0 0
    %349 = vmatpush1.bf16.xpose.msra.mxu0 0
    %350 = vmatprep.mubr.bf16.mxu0 0
    %351 = vmatmul.mubr.bf16.gmra.mrb[0].mxu0 %v313
    %v352 = vpop.f32.mrb[0].mxu0
    %v353 = vadd.f32 0.0, %v352
    %v354 = vpop.f32.mrb[0].mxu0
    %v355 = vpop.f32.mrb[0].mxu0
    %v356 = vpop.f32.mrb[0].mxu0
    %357 = vdwg.mxu0
    %v359 = vsel %vm81, %v63, 0
    %v362 = vsel %vm81, %v79, 0
    %364 = vmatprep.subr.bf16.mxu0 0
    %365 = vmatpush1.bf16.xpose.msra.mxu0 %v362
    %366 = vmatprep.subr.bf16.mxu0 0
    %367 = vmatpush1.bf16.xpose.msra.mxu0 0
    %368 = vmatprep.subr.bf16.mxu0 0
    %369 = vmatpush1.bf16.xpose.msra.mxu0 0
    %370 = vmatprep.subr.bf16.mxu0 0
    %371 = vmatpush1.bf16.xpose.msra.mxu0 0
    %372 = vmatprep.subr.bf16.mxu0 0
    %373 = vmatpush1.bf16.xpose.msra.mxu0 0
    %374 = vmatprep.subr.bf16.mxu0 0
    %375 = vmatpush1.bf16.xpose.msra.mxu0 0
    %376 = vmatprep.subr.bf16.mxu0 0
    %377 = vmatpush1.bf16.xpose.msra.mxu0 0
    %378 = vmatprep.subr.bf16.mxu0 0
    %379 = vmatpush1.bf16.xpose.msra.mxu0 0
    %380 = vmatprep.subr.bf16.mxu0 0
    %381 = vmatpush1.bf16.xpose.msra.mxu0 0
    %382 = vmatprep.subr.bf16.mxu0 0
    %383 = vmatpush1.bf16.xpose.msra.mxu0 0
    %384 = vmatprep.subr.bf16.mxu0 0
    %385 = vmatpush1.bf16.xpose.msra.mxu0 0
    %386 = vmatprep.subr.bf16.mxu0 0
    %387 = vmatpush1.bf16.xpose.msra.mxu0 0
    %388 = vmatprep.subr.bf16.mxu0 0
    %389 = vmatpush1.bf16.xpose.msra.mxu0 0
    %390 = vmatprep.subr.bf16.mxu0 0
    %391 = vmatpush1.bf16.xpose.msra.mxu0 0
    %392 = vmatprep.subr.bf16.mxu0 0
    %393 = vmatpush1.bf16.xpose.msra.mxu0 0
    %394 = vmatprep.subr.bf16.mxu0 0
    %395 = vmatpush1.bf16.xpose.msra.mxu0 0
    %396 = vmatprep.mubr.bf16.mxu0 0
    %397 = vmatmul.mubr.bf16.gmra.mrb[0].mxu0 %v359
    %v398 = vpop.f32.mrb[0].mxu0
    %v399 = vadd.f32 0.0, %v398
    %v400 = vpop.f32.mrb[0].mxu0
    %v401 = vpop.f32.mrb[0].mxu0
    %v402 = vpop.f32.mrb[0].mxu0
    %403 = vdwg.mxu0
    %v405 = vsel %vm81, %v64, 0
    %v408 = vsel %vm81, %v80, 0
    %410 = vmatprep.subr.bf16.mxu0 0
    %411 = vmatpush1.bf16.xpose.msra.mxu0 %v408
    %412 = vmatprep.subr.bf16.mxu0 0
    %413 = vmatpush1.bf16.xpose.msra.mxu0 0
    %414 = vmatprep.subr.bf16.mxu0 0
    %415 = vmatpush1.bf16.xpose.msra.mxu0 0
    %416 = vmatprep.subr.bf16.mxu0 0
    %417 = vmatpush1.bf16.xpose.msra.mxu0 0
    %418 = vmatprep.subr.bf16.mxu0 0
    %419 = vmatpush1.bf16.xpose.msra.mxu0 0
    %420 = vmatprep.subr.bf16.mxu0 0
    %421 = vmatpush1.bf16.xpose.msra.mxu0 0
    %422 = vmatprep.subr.bf16.mxu0 0
    %423 = vmatpush1.bf16.xpose.msra.mxu0 0
    %424 = vmatprep.subr.bf16.mxu0 0
    %425 = vmatpush1.bf16.xpose.msra.mxu0 0
    %426 = vmatprep.subr.bf16.mxu0 0
    %427 = vmatpush1.bf16.xpose.msra.mxu0 0
    %428 = vmatprep.subr.bf16.mxu0 0
    %429 = vmatpush1.bf16.xpose.msra.mxu0 0
    %430 = vmatprep.subr.bf16.mxu0 0
    %431 = vmatpush1.bf16.xpose.msra.mxu0 0
    %432 = vmatprep.subr.bf16.mxu0 0
    %433 = vmatpush1.bf16.xpose.msra.mxu0 0
    %434 = vmatprep.subr.bf16.mxu0 0
    %435 = vmatpush1.bf16.xpose.msra.mxu0 0
    %436 = vmatprep.subr.bf16.mxu0 0
    %437 = vmatpush1.bf16.xpose.msra.mxu0 0
    %438 = vmatprep.subr.bf16.mxu0 0
    %439 = vmatpush1.bf16.xpose.msra.mxu0 0
    %440 = vmatprep.subr.bf16.mxu0 0
    %441 = vmatpush1.bf16.xpose.msra.mxu0 0
    %442 = vmatprep.mubr.bf16.mxu0 0
    %443 = vmatmul.mubr.bf16.gmra.mrb[0].mxu0 %v405
    %v444 = vpop.f32.mrb[0].mxu0
    %v445 = vadd.f32 0.0, %v444
    %v446 = vpop.f32.mrb[0].mxu0
    %v447 = vpop.f32.mrb[0].mxu0
    %v448 = vpop.f32.mrb[0].mxu0
    %449 = vdwg.mxu0
    %v450 = vld [vmem:[#allocation2] sm:$0xff]
    %v451 = vld [vmem:[#allocation2 + $0x8] sm:$0xff]
    %v452 = vld [vmem:[#allocation2 + $0x10] sm:$0xff]
    %v453 = vld [vmem:[#allocation2 + $0x18] sm:$0xff]
    %v454 = vld [vmem:[#allocation2 + $0x20] sm:$0xff]
    %v455 = vld [vmem:[#allocation2 + $0x28] sm:$0xff]
    %v456 = vld [vmem:[#allocation2 + $0x30] sm:$0xff]
    %v457 = vld [vmem:[#allocation2 + $0x38] sm:$0xff]
    %v458 = vsel %vm81, %v123, -inf
    %459 = vmax.xlane.f32.xlu0 %v458
    %v460 = vpop.xlane.xlu0 %459
    %v461 = vsel %vm81, %v169, -inf
    %462 = vmax.xlane.f32.xlu0 %v461
    %v463 = vpop.xlane.xlu0 %462
    %v464 = vsel %vm81, %v215, -inf
    %465 = vmax.xlane.f32.xlu0 %v464
    %v466 = vpop.xlane.xlu0 %465
    %v467 = vsel %vm81, %v261, -inf
    %468 = vmax.xlane.f32.xlu0 %v467
    %v469 = vpop.xlane.xlu0 %468
    %v470 = vsel %vm81, %v307, -inf
    %471 = vmax.xlane.f32.xlu0 %v470
    %v472 = vpop.xlane.xlu0 %471
    %v473 = vsel %vm81, %v353, -inf
    %474 = vmax.xlane.f32.xlu0 %v473
    %v475 = vpop.xlane.xlu0 %474
    %v476 = vsel %vm81, %v399, -inf
    %477 = vmax.xlane.f32.xlu0 %v476
    %v478 = vpop.xlane.xlu0 %477
    %v479 = vsel %vm81, %v445, -inf
    %480 = vmax.xlane.f32.xlu0 %v479
    %v481 = vpop.xlane.xlu0 %480
    %v482 = vmax.f32 %v450, %v460
    %v483 = vmax.f32 %v451, %v463
    %v484 = vmax.f32 %v452, %v466
    %v485 = vmax.f32 %v453, %v469
    %v486 = vmax.f32 %v454, %v472
    %v487 = vmax.f32 %v455, %v475
    %v488 = vmax.f32 %v456, %v478
    %v489 = vmax.f32 %v457, %v481
    %v490 = vsub.f32 %v450, %v482
    %v491 = vsub.f32 %v451, %v483
    %v492 = vsub.f32 %v452, %v484
    %v493 = vsub.f32 %v453, %v485
    %v494 = vsub.f32 %v454, %v486
    %v495 = vsub.f32 %v455, %v487
    %v496 = vsub.f32 %v456, %v488
    %v497 = vsub.f32 %v457, %v489
    %v498 = vmul.f32 %v490, 1.442695
    %v499 = vpow.pop %v498
    %v500 = vmul.f32 %v491, 1.442695
    %v501 = vpow.pop %v500
    %v502 = vmul.f32 %v492, 1.442695
    %v503 = vpow.pop %v502
    %v504 = vmul.f32 %v493, 1.442695
    %v505 = vpow.pop %v504
    %v506 = vmul.f32 %v494, 1.442695
    %v507 = vpow.pop %v506
    %v508 = vmul.f32 %v495, 1.442695
    %v509 = vpow.pop %v508
    %v510 = vmul.f32 %v496, 1.442695
    %v511 = vpow.pop %v510
    %v512 = vmul.f32 %v497, 1.442695
    %v513 = vpow.pop %v512
    %515 = vset.pattern.permute.xlu0 0
    %516 = vperm.xlu0 %515, %v482
    %v517 = vpop.permute.xlu0 %516
    %520 = vset.pattern.permute.xlu0 0
    %521 = vperm.xlu0 %520, %v483
    %v522 = vpop.permute.xlu0 %521
    %525 = vset.pattern.permute.xlu0 0
    %526 = vperm.xlu0 %525, %v484
    %v527 = vpop.permute.xlu0 %526
    %530 = vset.pattern.permute.xlu0 0
    %531 = vperm.xlu0 %530, %v485
    %v532 = vpop.permute.xlu0 %531
    %535 = vset.pattern.permute.xlu0 0
    %536 = vperm.xlu0 %535, %v486
    %v537 = vpop.permute.xlu0 %536
    %540 = vset.pattern.permute.xlu0 0
    %541 = vperm.xlu0 %540, %v487
    %v542 = vpop.permute.xlu0 %541
    %545 = vset.pattern.permute.xlu0 0
    %546 = vperm.xlu0 %545, %v488
    %v547 = vpop.permute.xlu0 %546
    %550 = vset.pattern.permute.xlu0 0
    %551 = vperm.xlu0 %550, %v489
    %v552 = vpop.permute.xlu0 %551
    %v554 = vsub.f32 %v123, %v517
    %v555 = vsub.f32 %v169, %v522
    %v556 = vsub.f32 %v215, %v527
    %v557 = vsub.f32 %v261, %v532
    %v558 = vsub.f32 %v307, %v537
    %v559 = vsub.f32 %v353, %v542
    %v560 = vsub.f32 %v399, %v547
    %v561 = vsub.f32 %v445, %v552
    %v562 = vmul.f32 %v554, 1.442695
    %v563 = vpow.pop %v562
    %v564 = vmul.f32 %v555, 1.442695
    %v565 = vpow.pop %v564
    %v566 = vmul.f32 %v556, 1.442695
    %v567 = vpow.pop %v566
    %v568 = vmul.f32 %v557, 1.442695
    %v569 = vpow.pop %v568
    %v570 = vmul.f32 %v558, 1.442695
    %v571 = vpow.pop %v570
    %v572 = vmul.f32 %v559, 1.442695
    %v573 = vpow.pop %v572
    %v574 = vmul.f32 %v560, 1.442695
    %v575 = vpow.pop %v574
    %v576 = vmul.f32 %v561, 1.442695
    %v577 = vpow.pop %v576
    %v578 = vld [vmem:[#allocation3] sm:$0xff]
    %v579 = vld [vmem:[#allocation3 + $0x8] sm:$0xff]
    %v580 = vld [vmem:[#allocation3 + $0x10] sm:$0xff]
    %v581 = vld [vmem:[#allocation3 + $0x18] sm:$0xff]
    %v582 = vld [vmem:[#allocation3 + $0x20] sm:$0xff]
    %v583 = vld [vmem:[#allocation3 + $0x28] sm:$0xff]
    %v584 = vld [vmem:[#allocation3 + $0x30] sm:$0xff]
    %v585 = vld [vmem:[#allocation3 + $0x38] sm:$0xff]
    %v586 = vmul.f32 %v499, %v578
    %v587 = vmul.f32 %v501, %v579
    %v588 = vmul.f32 %v503, %v580
    %v589 = vmul.f32 %v505, %v581
    %v590 = vmul.f32 %v507, %v582
    %v591 = vmul.f32 %v509, %v583
    %v592 = vmul.f32 %v511, %v584
    %v593 = vmul.f32 %v513, %v585
    %v594 = vsel %vm81, %v563, 0.0
    %595 = vadd.xlane.f32.xlu0 %v594
    %v596 = vpop.xlane.xlu0 %595
    %v597 = vsel %vm81, %v565, 0.0
    %598 = vadd.xlane.f32.xlu0 %v597
    %v599 = vpop.xlane.xlu0 %598
    %v600 = vsel %vm81, %v567, 0.0
    %601 = vadd.xlane.f32.xlu0 %v600
    %v602 = vpop.xlane.xlu0 %601
    %v603 = vsel %vm81, %v569, 0.0
    %604 = vadd.xlane.f32.xlu0 %v603
    %v605 = vpop.xlane.xlu0 %604
    %v606 = vsel %vm81, %v571, 0.0
    %607 = vadd.xlane.f32.xlu0 %v606
    %v608 = vpop.xlane.xlu0 %607
    %v609 = vsel %vm81, %v573, 0.0
    %610 = vadd.xlane.f32.xlu0 %v609
    %v611 = vpop.xlane.xlu0 %610
    %v612 = vsel %vm81, %v575, 0.0
    %613 = vadd.xlane.f32.xlu0 %v612
    %v614 = vpop.xlane.xlu0 %613
    %v615 = vsel %vm81, %v577, 0.0
    %616 = vadd.xlane.f32.xlu0 %v615
    %v617 = vpop.xlane.xlu0 %616
    %v618 = vadd.f32 %v586, %v596
    %v619 = vadd.f32 %v587, %v599
    %v620 = vadd.f32 %v588, %v602
    %v621 = vadd.f32 %v589, %v605
    %v622 = vadd.f32 %v590, %v608
    %v623 = vadd.f32 %v591, %v611
    %v624 = vadd.f32 %v592, %v614
    %v625 = vadd.f32 %v593, %v617
    %vm626 = vcmask 7168
    %627 = vst.msk [vmem:[#allocation3] sm:$0xff] %vm626, %v618
    %628 = vst.msk [vmem:[#allocation3 + $0x8] sm:$0xff] %vm626, %v619
    %629 = vst.msk [vmem:[#allocation3 + $0x10] sm:$0xff] %vm626, %v620
    %630 = vst.msk [vmem:[#allocation3 + $0x18] sm:$0xff] %vm626, %v621
    %631 = vst.msk [vmem:[#allocation3 + $0x20] sm:$0xff] %vm626, %v622
    %632 = vst.msk [vmem:[#allocation3 + $0x28] sm:$0xff] %vm626, %v623
    %633 = vst.msk [vmem:[#allocation3 + $0x30] sm:$0xff] %vm626, %v624
    %634 = vst.msk [vmem:[#allocation3 + $0x38] sm:$0xff] %vm626, %v625
    %v635 = vpack.c.bf16 %v563, %v563
    %v636 = vpack.c.bf16 %v565, %v565
    %v637 = vpack.c.bf16 %v567, %v567
    %v638 = vpack.c.bf16 %v569, %v569
    %v639 = vpack.c.bf16 %v571, %v571
    %v640 = vpack.c.bf16 %v573, %v573
    %v641 = vpack.c.bf16 %v575, %v575
    %v642 = vpack.c.bf16 %v577, %v577
    %v643 = vld [vmem:[%s2] sm:$0xff]
    %v644 = vld [vmem:[%s2 + $0x8] sm:$0xff]
    %v645 = vld [vmem:[%s2 + $0x10] sm:$0xff]
    %v646 = vld [vmem:[%s2 + $0x18] sm:$0xff]
    %v647 = vld [vmem:[%s2 + $0x20] sm:$0xff]
    %v648 = vld [vmem:[%s2 + $0x28] sm:$0xff]
    %v649 = vld [vmem:[%s2 + $0x30] sm:$0xff]
    %v650 = vld [vmem:[%s2 + $0x38] sm:$0xff]
    %v651 = vpack.c.bf16 %v643, %v643
    %v652 = vpack.c.bf16 %v644, %v644
    %v653 = vpack.c.bf16 %v645, %v645
    %v654 = vpack.c.bf16 %v646, %v646
    %v655 = vpack.c.bf16 %v647, %v647
    %v656 = vpack.c.bf16 %v648, %v648
    %v657 = vpack.c.bf16 %v649, %v649
    %v658 = vpack.c.bf16 %v650, %v650
    %v660 = vsel %vm81, %v635, 0
    %vm662 = vcmask 1043456
    %v664 = vsel %vm662, %v651, 0
    %666 = vmatprep.subr.bf16.mxu0 0
    %667 = vmatpush1.bf16.msra.mxu0 %v664
    %668 = vmatprep.subr.bf16.mxu0 0
    %669 = vmatpush1.bf16.msra.mxu0 0
    %670 = vmatprep.subr.bf16.mxu0 0
    %671 = vmatpush1.bf16.msra.mxu0 0
    %672 = vmatprep.subr.bf16.mxu0 0
    %673 = vmatpush1.bf16.msra.mxu0 0
    %674 = vmatprep.subr.bf16.mxu0 0
    %675 = vmatpush1.bf16.msra.mxu0 0
    %676 = vmatprep.subr.bf16.mxu0 0
    %677 = vmatpush1.bf16.msra.mxu0 0
    %678 = vmatprep.subr.bf16.mxu0 0
    %679 = vmatpush1.bf16.msra.mxu0 0
    %680 = vmatprep.subr.bf16.mxu0 0
    %681 = vmatpush1.bf16.msra.mxu0 0
    %682 = vmatprep.subr.bf16.mxu0 0
    %683 = vmatpush1.bf16.msra.mxu0 0
    %684 = vmatprep.subr.bf16.mxu0 0
    %685 = vmatpush1.bf16.msra.mxu0 0
    %686 = vmatprep.subr.bf16.mxu0 0
    %687 = vmatpush1.bf16.msra.mxu0 0
    %688 = vmatprep.subr.bf16.mxu0 0
    %689 = vmatpush1.bf16.msra.mxu0 0
    %690 = vmatprep.subr.bf16.mxu0 0
    %691 = vmatpush1.bf16.msra.mxu0 0
    %692 = vmatprep.subr.bf16.mxu0 0
    %693 = vmatpush1.bf16.msra.mxu0 0
    %694 = vmatprep.subr.bf16.mxu0 0
    %695 = vmatpush1.bf16.msra.mxu0 0
    %696 = vmatprep.subr.bf16.mxu0 0
    %697 = vmatpush1.bf16.msra.mxu0 0
    %698 = vmatprep.mubr.bf16.mxu0 0
    %699 = vmatmul.mubr.bf16.gmra.mrb[0].mxu0 %v660
    %v700 = vpop.f32.mrb[0].mxu0
    %v701 = vadd.f32 0.0, %v700
    %v702 = vpop.f32.mrb[0].mxu0
    %v703 = vpop.f32.mrb[0].mxu0
    %v704 = vpop.f32.mrb[0].mxu0
    %705 = vdwg.mxu0
    %v707 = vsel %vm81, %v636, 0
    %v710 = vsel %vm662, %v652, 0
    %712 = vmatprep.subr.bf16.mxu0 0
    %713 = vmatpush1.bf16.msra.mxu0 %v710
    %714 = vmatprep.subr.bf16.mxu0 0
    %715 = vmatpush1.bf16.msra.mxu0 0
    %716 = vmatprep.subr.bf16.mxu0 0
    %717 = vmatpush1.bf16.msra.mxu0 0
    %718 = vmatprep.subr.bf16.mxu0 0
    %719 = vmatpush1.bf16.msra.mxu0 0
    %720 = vmatprep.subr.bf16.mxu0 0
    %721 = vmatpush1.bf16.msra.mxu0 0
    %722 = vmatprep.subr.bf16.mxu0 0
    %723 = vmatpush1.bf16.msra.mxu0 0
    %724 = vmatprep.subr.bf16.mxu0 0
    %725 = vmatpush1.bf16.msra.mxu0 0
    %726 = vmatprep.subr.bf16.mxu0 0
    %727 = vmatpush1.bf16.msra.mxu0 0
    %728 = vmatprep.subr.bf16.mxu0 0
    %729 = vmatpush1.bf16.msra.mxu0 0
    %730 = vmatprep.subr.bf16.mxu0 0
    %731 = vmatpush1.bf16.msra.mxu0 0
    %732 = vmatprep.subr.bf16.mxu0 0
    %733 = vmatpush1.bf16.msra.mxu0 0
    %734 = vmatprep.subr.bf16.mxu0 0
    %735 = vmatpush1.bf16.msra.mxu0 0
    %736 = vmatprep.subr.bf16.mxu0 0
    %737 = vmatpush1.bf16.msra.mxu0 0
    %738 = vmatprep.subr.bf16.mxu0 0
    %739 = vmatpush1.bf16.msra.mxu0 0
    %740 = vmatprep.subr.bf16.mxu0 0
    %741 = vmatpush1.bf16.msra.mxu0 0
    %742 = vmatprep.subr.bf16.mxu0 0
    %743 = vmatpush1.bf16.msra.mxu0 0
    %744 = vmatprep.mubr.bf16.mxu0 0
    %745 = vmatmul.mubr.bf16.gmra.mrb[0].mxu0 %v707
    %v746 = vpop.f32.mrb[0].mxu0
    %v747 = vadd.f32 0.0, %v746
    %v748 = vpop.f32.mrb[0].mxu0
    %v749 = vpop.f32.mrb[0].mxu0
    %v750 = vpop.f32.mrb[0].mxu0
    %751 = vdwg.mxu0
    %v753 = vsel %vm81, %v637, 0
    %v756 = vsel %vm662, %v653, 0
    %758 = vmatprep.subr.bf16.mxu0 0
    %759 = vmatpush1.bf16.msra.mxu0 %v756
    %760 = vmatprep.subr.bf16.mxu0 0
    %761 = vmatpush1.bf16.msra.mxu0 0
    %762 = vmatprep.subr.bf16.mxu0 0
    %763 = vmatpush1.bf16.msra.mxu0 0
    %764 = vmatprep.subr.bf16.mxu0 0
    %765 = vmatpush1.bf16.msra.mxu0 0
    %766 = vmatprep.subr.bf16.mxu0 0
    %767 = vmatpush1.bf16.msra.mxu0 0
    %768 = vmatprep.subr.bf16.mxu0 0
    %769 = vmatpush1.bf16.msra.mxu0 0
    %770 = vmatprep.subr.bf16.mxu0 0
    %771 = vmatpush1.bf16.msra.mxu0 0
    %772 = vmatprep.subr.bf16.mxu0 0
    %773 = vmatpush1.bf16.msra.mxu0 0
    %774 = vmatprep.subr.bf16.mxu0 0
    %775 = vmatpush1.bf16.msra.mxu0 0
    %776 = vmatprep.subr.bf16.mxu0 0
    %777 = vmatpush1.bf16.msra.mxu0 0
    %778 = vmatprep.subr.bf16.mxu0 0
    %779 = vmatpush1.bf16.msra.mxu0 0
    %780 = vmatprep.subr.bf16.mxu0 0
    %781 = vmatpush1.bf16.msra.mxu0 0
    %782 = vmatprep.subr.bf16.mxu0 0
    %783 = vmatpush1.bf16.msra.mxu0 0
    %784 = vmatprep.subr.bf16.mxu0 0
    %785 = vmatpush1.bf16.msra.mxu0 0
    %786 = vmatprep.subr.bf16.mxu0 0
    %787 = vmatpush1.bf16.msra.mxu0 0
    %788 = vmatprep.subr.bf16.mxu0 0
    %789 = vmatpush1.bf16.msra.mxu0 0
    %790 = vmatprep.mubr.bf16.mxu0 0
    %791 = vmatmul.mubr.bf16.gmra.mrb[0].mxu0 %v753
    %v792 = vpop.f32.mrb[0].mxu0
    %v793 = vadd.f32 0.0, %v792
    %v794 = vpop.f32.mrb[0].mxu0
    %v795 = vpop.f32.mrb[0].mxu0
    %v796 = vpop.f32.mrb[0].mxu0
    %797 = vdwg.mxu0
    %v799 = vsel %vm81, %v638, 0
    %v802 = vsel %vm662, %v654, 0
    %804 = vmatprep.subr.bf16.mxu0 0
    %805 = vmatpush1.bf16.msra.mxu0 %v802
    %806 = vmatprep.subr.bf16.mxu0 0
    %807 = vmatpush1.bf16.msra.mxu0 0
    %808 = vmatprep.subr.bf16.mxu0 0
    %809 = vmatpush1.bf16.msra.mxu0 0
    %810 = vmatprep.subr.bf16.mxu0 0
    %811 = vmatpush1.bf16.msra.mxu0 0
    %812 = vmatprep.subr.bf16.mxu0 0
    %813 = vmatpush1.bf16.msra.mxu0 0
    %814 = vmatprep.subr.bf16.mxu0 0
    %815 = vmatpush1.bf16.msra.mxu0 0
    %816 = vmatprep.subr.bf16.mxu0 0
    %817 = vmatpush1.bf16.msra.mxu0 0
    %818 = vmatprep.subr.bf16.mxu0 0
    %819 = vmatpush1.bf16.msra.mxu0 0
    %820 = vmatprep.subr.bf16.mxu0 0
    %821 = vmatpush1.bf16.msra.mxu0 0
    %822 = vmatprep.subr.bf16.mxu0 0
    %823 = vmatpush1.bf16.msra.mxu0 0
    %824 = vmatprep.subr.bf16.mxu0 0
    %825 = vmatpush1.bf16.msra.mxu0 0
    %826 = vmatprep.subr.bf16.mxu0 0
    %827 = vmatpush1.bf16.msra.mxu0 0
    %828 = vmatprep.subr.bf16.mxu0 0
    %829 = vmatpush1.bf16.msra.mxu0 0
    %830 = vmatprep.subr.bf16.mxu0 0
    %831 = vmatpush1.bf16.msra.mxu0 0
    %832 = vmatprep.subr.bf16.mxu0 0
    %833 = vmatpush1.bf16.msra.mxu0 0
    %834 = vmatprep.subr.bf16.mxu0 0
    %835 = vmatpush1.bf16.msra.mxu0 0
    %836 = vmatprep.mubr.bf16.mxu0 0
    %837 = vmatmul.mubr.bf16.gmra.mrb[0].mxu0 %v799
    %v838 = vpop.f32.mrb[0].mxu0
    %v839 = vadd.f32 0.0, %v838
    %v840 = vpop.f32.mrb[0].mxu0
    %v841 = vpop.f32.mrb[0].mxu0
    %v842 = vpop.f32.mrb[0].mxu0
    %843 = vdwg.mxu0
    %v845 = vsel %vm81, %v639, 0
    %v848 = vsel %vm662, %v655, 0
    %850 = vmatprep.subr.bf16.mxu0 0
    %851 = vmatpush1.bf16.msra.mxu0 %v848
    %852 = vmatprep.subr.bf16.mxu0 0
    %853 = vmatpush1.bf16.msra.mxu0 0
    %854 = vmatprep.subr.bf16.mxu0 0
    %855 = vmatpush1.bf16.msra.mxu0 0
    %856 = vmatprep.subr.bf16.mxu0 0
    %857 = vmatpush1.bf16.msra.mxu0 0
    %858 = vmatprep.subr.bf16.mxu0 0
    %859 = vmatpush1.bf16.msra.mxu0 0
    %860 = vmatprep.subr.bf16.mxu0 0
    %861 = vmatpush1.bf16.msra.mxu0 0
    %862 = vmatprep.subr.bf16.mxu0 0
    %863 = vmatpush1.bf16.msra.mxu0 0
    %864 = vmatprep.subr.bf16.mxu0 0
    %865 = vmatpush1.bf16.msra.mxu0 0
    %866 = vmatprep.subr.bf16.mxu0 0
    %867 = vmatpush1.bf16.msra.mxu0 0
    %868 = vmatprep.subr.bf16.mxu0 0
    %869 = vmatpush1.bf16.msra.mxu0 0
    %870 = vmatprep.subr.bf16.mxu0 0
    %871 = vmatpush1.bf16.msra.mxu0 0
    %872 = vmatprep.subr.bf16.mxu0 0
    %873 = vmatpush1.bf16.msra.mxu0 0
    %874 = vmatprep.subr.bf16.mxu0 0
    %875 = vmatpush1.bf16.msra.mxu0 0
    %876 = vmatprep.subr.bf16.mxu0 0
    %877 = vmatpush1.bf16.msra.mxu0 0
    %878 = vmatprep.subr.bf16.mxu0 0
    %879 = vmatpush1.bf16.msra.mxu0 0
    %880 = vmatprep.subr.bf16.mxu0 0
    %881 = vmatpush1.bf16.msra.mxu0 0
    %882 = vmatprep.mubr.bf16.mxu0 0
    %883 = vmatmul.mubr.bf16.gmra.mrb[0].mxu0 %v845
    %v884 = vpop.f32.mrb[0].mxu0
    %v885 = vadd.f32 0.0, %v884
    %v886 = vpop.f32.mrb[0].mxu0
    %v887 = vpop.f32.mrb[0].mxu0
    %v888 = vpop.f32.mrb[0].mxu0
    %889 = vdwg.mxu0
    %v891 = vsel %vm81, %v640, 0
    %v894 = vsel %vm662, %v656, 0
    %896 = vmatprep.subr.bf16.mxu0 0
    %897 = vmatpush1.bf16.msra.mxu0 %v894
    %898 = vmatprep.subr.bf16.mxu0 0
    %899 = vmatpush1.bf16.msra.mxu0 0
    %900 = vmatprep.subr.bf16.mxu0 0
    %901 = vmatpush1.bf16.msra.mxu0 0
    %902 = vmatprep.subr.bf16.mxu0 0
    %903 = vmatpush1.bf16.msra.mxu0 0
    %904 = vmatprep.subr.bf16.mxu0 0
    %905 = vmatpush1.bf16.msra.mxu0 0
    %906 = vmatprep.subr.bf16.mxu0 0
    %907 = vmatpush1.bf16.msra.mxu0 0
    %908 = vmatprep.subr.bf16.mxu0 0
    %909 = vmatpush1.bf16.msra.mxu0 0
    %910 = vmatprep.subr.bf16.mxu0 0
    %911 = vmatpush1.bf16.msra.mxu0 0
    %912 = vmatprep.subr.bf16.mxu0 0
    %913 = vmatpush1.bf16.msra.mxu0 0
    %914 = vmatprep.subr.bf16.mxu0 0
    %915 = vmatpush1.bf16.msra.mxu0 0
    %916 = vmatprep.subr.bf16.mxu0 0
    %917 = vmatpush1.bf16.msra.mxu0 0
    %918 = vmatprep.subr.bf16.mxu0 0
    %919 = vmatpush1.bf16.msra.mxu0 0
    %920 = vmatprep.subr.bf16.mxu0 0
    %921 = vmatpush1.bf16.msra.mxu0 0
    %922 = vmatprep.subr.bf16.mxu0 0
    %923 = vmatpush1.bf16.msra.mxu0 0
    %924 = vmatprep.subr.bf16.mxu0 0
    %925 = vmatpush1.bf16.msra.mxu0 0
    %926 = vmatprep.subr.bf16.mxu0 0
    %927 = vmatpush1.bf16.msra.mxu0 0
    %928 = vmatprep.mubr.bf16.mxu0 0
    %929 = vmatmul.mubr.bf16.gmra.mrb[0].mxu0 %v891
    %v930 = vpop.f32.mrb[0].mxu0
    %v931 = vadd.f32 0.0, %v930
    %v932 = vpop.f32.mrb[0].mxu0
    %v933 = vpop.f32.mrb[0].mxu0
    %v934 = vpop.f32.mrb[0].mxu0
    %935 = vdwg.mxu0
    %v937 = vsel %vm81, %v641, 0
    %v940 = vsel %vm662, %v657, 0
    %942 = vmatprep.subr.bf16.mxu0 0
    %943 = vmatpush1.bf16.msra.mxu0 %v940
    %944 = vmatprep.subr.bf16.mxu0 0
    %945 = vmatpush1.bf16.msra.mxu0 0
    %946 = vmatprep.subr.bf16.mxu0 0
    %947 = vmatpush1.bf16.msra.mxu0 0
    %948 = vmatprep.subr.bf16.mxu0 0
    %949 = vmatpush1.bf16.msra.mxu0 0
    %950 = vmatprep.subr.bf16.mxu0 0
    %951 = vmatpush1.bf16.msra.mxu0 0
    %952 = vmatprep.subr.bf16.mxu0 0
    %953 = vmatpush1.bf16.msra.mxu0 0
    %954 = vmatprep.subr.bf16.mxu0 0
    %955 = vmatpush1.bf16.msra.mxu0 0
    %956 = vmatprep.subr.bf16.mxu0 0
    %957 = vmatpush1.bf16.msra.mxu0 0
    %958 = vmatprep.subr.bf16.mxu0 0
    %959 = vmatpush1.bf16.msra.mxu0 0
    %960 = vmatprep.subr.bf16.mxu0 0
    %961 = vmatpush1.bf16.msra.mxu0 0
    %962 = vmatprep.subr.bf16.mxu0 0
    %963 = vmatpush1.bf16.msra.mxu0 0
    %964 = vmatprep.subr.bf16.mxu0 0
    %965 = vmatpush1.bf16.msra.mxu0 0
    %966 = vmatprep.subr.bf16.mxu0 0
    %967 = vmatpush1.bf16.msra.mxu0 0
    %968 = vmatprep.subr.bf16.mxu0 0
    %969 = vmatpush1.bf16.msra.mxu0 0
    %970 = vmatprep.subr.bf16.mxu0 0
    %971 = vmatpush1.bf16.msra.mxu0 0
    %972 = vmatprep.subr.bf16.mxu0 0
    %973 = vmatpush1.bf16.msra.mxu0 0
    %974 = vmatprep.mubr.bf16.mxu0 0
    %975 = vmatmul.mubr.bf16.gmra.mrb[0].mxu0 %v937
    %v976 = vpop.f32.mrb[0].mxu0
    %v977 = vadd.f32 0.0, %v976
    %v978 = vpop.f32.mrb[0].mxu0
    %v979 = vpop.f32.mrb[0].mxu0
    %v980 = vpop.f32.mrb[0].mxu0
    %981 = vdwg.mxu0
    %v983 = vsel %vm81, %v642, 0
    %v986 = vsel %vm662, %v658, 0
    %988 = vmatprep.subr.bf16.mxu0 0
    %989 = vmatpush1.bf16.msra.mxu0 %v986
    %990 = vmatprep.subr.bf16.mxu0 0
    %991 = vmatpush1.bf16.msra.mxu0 0
    %992 = vmatprep.subr.bf16.mxu0 0
    %993 = vmatpush1.bf16.msra.mxu0 0
    %994 = vmatprep.subr.bf16.mxu0 0
    %995 = vmatpush1.bf16.msra.mxu0 0
    %996 = vmatprep.subr.bf16.mxu0 0
    %997 = vmatpush1.bf16.msra.mxu0 0
    %998 = vmatprep.subr.bf16.mxu0 0
    %999 = vmatpush1.bf16.msra.mxu0 0
    %1000 = vmatprep.subr.bf16.mxu0 0
    %1001 = vmatpush1.bf16.msra.mxu0 0
    %1002 = vmatprep.subr.bf16.mxu0 0
    %1003 = vmatpush1.bf16.msra.mxu0 0
    %1004 = vmatprep.subr.bf16.mxu0 0
    %1005 = vmatpush1.bf16.msra.mxu0 0
    %1006 = vmatprep.subr.bf16.mxu0 0
    %1007 = vmatpush1.bf16.msra.mxu0 0
    %1008 = vmatprep.subr.bf16.mxu0 0
    %1009 = vmatpush1.bf16.msra.mxu0 0
    %1010 = vmatprep.subr.bf16.mxu0 0
    %1011 = vmatpush1.bf16.msra.mxu0 0
    %1012 = vmatprep.subr.bf16.mxu0 0
    %1013 = vmatpush1.bf16.msra.mxu0 0
    %1014 = vmatprep.subr.bf16.mxu0 0
    %1015 = vmatpush1.bf16.msra.mxu0 0
    %1016 = vmatprep.subr.bf16.mxu0 0
    %1017 = vmatpush1.bf16.msra.mxu0 0
    %1018 = vmatprep.subr.bf16.mxu0 0
    %1019 = vmatpush1.bf16.msra.mxu0 0
    %1020 = vmatprep.mubr.bf16.mxu0 0
    %1021 = vmatmul.mubr.bf16.gmra.mrb[0].mxu0 %v983
    %v1022 = vpop.f32.mrb[0].mxu0
    %v1023 = vadd.f32 0.0, %v1022
    %v1024 = vpop.f32.mrb[0].mxu0
    %v1025 = vpop.f32.mrb[0].mxu0
    %v1026 = vpop.f32.mrb[0].mxu0
    %1027 = vdwg.mxu0
    %v1028 = vld [vmem:[#allocation4] sm:$0xff]
    %v1029 = vld [vmem:[#allocation4 + $0x8] sm:$0xff]
    %v1030 = vld [vmem:[#allocation4 + $0x10] sm:$0xff]
    %v1031 = vld [vmem:[#allocation4 + $0x18] sm:$0xff]
    %v1032 = vld [vmem:[#allocation4 + $0x20] sm:$0xff]
    %v1033 = vld [vmem:[#allocation4 + $0x28] sm:$0xff]
    %v1034 = vld [vmem:[#allocation4 + $0x30] sm:$0xff]
    %v1035 = vld [vmem:[#allocation4 + $0x38] sm:$0xff]
    %1037 = vset.pattern.permute.xlu0 0
    %1038 = vperm.xlu0 %1037, %v499
    %v1039 = vpop.permute.xlu0 %1038
    %1042 = vset.pattern.permute.xlu0 0
    %1043 = vperm.xlu0 %1042, %v501
    %v1044 = vpop.permute.xlu0 %1043
    %1047 = vset.pattern.permute.xlu0 0
    %1048 = vperm.xlu0 %1047, %v503
    %v1049 = vpop.permute.xlu0 %1048
    %1052 = vset.pattern.permute.xlu0 0
    %1053 = vperm.xlu0 %1052, %v505
    %v1054 = vpop.permute.xlu0 %1053
    %1057 = vset.pattern.permute.xlu0 0
    %1058 = vperm.xlu0 %1057, %v507
    %v1059 = vpop.permute.xlu0 %1058
    %1062 = vset.pattern.permute.xlu0 0
    %1063 = vperm.xlu0 %1062, %v509
    %v1064 = vpop.permute.xlu0 %1063
    %1067 = vset.pattern.permute.xlu0 0
    %1068 = vperm.xlu0 %1067, %v511
    %v1069 = vpop.permute.xlu0 %1068
    %1072 = vset.pattern.permute.xlu0 0
    %1073 = vperm.xlu0 %1072, %v513
    %v1074 = vpop.permute.xlu0 %1073
    %v1076 = vmul.f32 %v1039, %v1028
    %v1077 = vmul.f32 %v1044, %v1029
    %v1078 = vmul.f32 %v1049, %v1030
    %v1079 = vmul.f32 %v1054, %v1031
    %v1080 = vmul.f32 %v1059, %v1032
    %v1081 = vmul.f32 %v1064, %v1033
    %v1082 = vmul.f32 %v1069, %v1034
    %v1083 = vmul.f32 %v1074, %v1035
    %v1084 = vadd.f32 %v1076, %v701
    %v1085 = vadd.f32 %v1077, %v747
    %v1086 = vadd.f32 %v1078, %v793
    %v1087 = vadd.f32 %v1079, %v839
    %v1088 = vadd.f32 %v1080, %v885
    %v1089 = vadd.f32 %v1081, %v931
    %v1090 = vadd.f32 %v1082, %v977
    %v1091 = vadd.f32 %v1083, %v1023
    %1092 = vst.msk [vmem:[#allocation4] sm:$0xff] %vm81, %v1084
    %1093 = vst.msk [vmem:[#allocation4 + $0x8] sm:$0xff] %vm81, %v1085
    %1094 = vst.msk [vmem:[#allocation4 + $0x10] sm:$0xff] %vm81, %v1086
    %1095 = vst.msk [vmem:[#allocation4 + $0x18] sm:$0xff] %vm81, %v1087
    %1096 = vst.msk [vmem:[#allocation4 + $0x20] sm:$0xff] %vm81, %v1088
    %1097 = vst.msk [vmem:[#allocation4 + $0x28] sm:$0xff] %vm81, %v1089
    %1098 = vst.msk [vmem:[#allocation4 + $0x30] sm:$0xff] %vm81, %v1090
    %1099 = vst.msk [vmem:[#allocation4 + $0x38] sm:$0xff] %vm81, %v1091
    %1100 = vst.msk [vmem:[#allocation2] sm:$0xff] %vm626, %v482
    %1101 = vst.msk [vmem:[#allocation2 + $0x8] sm:$0xff] %vm626, %v483
    %1102 = vst.msk [vmem:[#allocation2 + $0x10] sm:$0xff] %vm626, %v484
    %1103 = vst.msk [vmem:[#allocation2 + $0x18] sm:$0xff] %vm626, %v485
    %1104 = vst.msk [vmem:[#allocation2 + $0x20] sm:$0xff] %vm626, %v486
    %1105 = vst.msk [vmem:[#allocation2 + $0x28] sm:$0xff] %vm626, %v487
    %1106 = vst.msk [vmem:[#allocation2 + $0x30] sm:$0xff] %vm626, %v488
    %1107 = vst.msk [vmem:[#allocation2 + $0x38] sm:$0xff] %vm626, %v489
  $region21: #{gpt_forward.12} parent=0 // pred_fallthru
    _
  %p1108 = scmp.eq.s32.totalorder 0, 0
  // Predicated region
  $region22: #{gpt_forward.12} parent=0 // pred_check
    %p1109 = pneg %p1108
  $region23: #{gpt_forward.12} parent=0 // pred_check_branch
    %1111 = sbr.rel (%p1109) target = $region25
  $region24: #{gpt_forward.12} parent=0 // pred_region
    %v1112 = vld [vmem:[%s0] sm:$0xff]
    %v1113 = vld [vmem:[%s0 + $0x8] sm:$0xff]
    %v1114 = vld [vmem:[%s0 + $0x10] sm:$0xff]
    %v1115 = vld [vmem:[%s0 + $0x18] sm:$0xff]
    %v1116 = vld [vmem:[%s0 + $0x20] sm:$0xff]
    %v1117 = vld [vmem:[%s0 + $0x28] sm:$0xff]
    %v1118 = vld [vmem:[%s0 + $0x30] sm:$0xff]
    %v1119 = vld [vmem:[%s0 + $0x38] sm:$0xff]
    %v1120 = vpack.c.bf16 %v1112, %v1112
    %v1121 = vpack.c.bf16 %v1113, %v1113
    %v1122 = vpack.c.bf16 %v1114, %v1114
    %v1123 = vpack.c.bf16 %v1115, %v1115
    %v1124 = vpack.c.bf16 %v1116, %v1116
    %v1125 = vpack.c.bf16 %v1117, %v1117
    %v1126 = vpack.c.bf16 %v1118, %v1118
    %v1127 = vpack.c.bf16 %v1119, %v1119
    %v1128 = vld [vmem:[%s1] sm:$0xff]
    %v1129 = vld [vmem:[%s1 + $0x8] sm:$0xff]
    %v1130 = vld [vmem:[%s1 + $0x10] sm:$0xff]
    %v1131 = vld [vmem:[%s1 + $0x18] sm:$0xff]
    %v1132 = vld [vmem:[%s1 + $0x20] sm:$0xff]
    %v1133 = vld [vmem:[%s1 + $0x28] sm:$0xff]
    %v1134 = vld [vmem:[%s1 + $0x30] sm:$0xff]
    %v1135 = vld [vmem:[%s1 + $0x38] sm:$0xff]
    %v1136 = vpack.c.bf16 %v1128, %v1128
    %v1137 = vpack.c.bf16 %v1129, %v1129
    %v1138 = vpack.c.bf16 %v1130, %v1130
    %v1139 = vpack.c.bf16 %v1131, %v1131
    %v1140 = vpack.c.bf16 %v1132, %v1132
    %v1141 = vpack.c.bf16 %v1133, %v1133
    %v1142 = vpack.c.bf16 %v1134, %v1134
    %v1143 = vpack.c.bf16 %v1135, %v1135
    %vm1144 = vcmask 64512
    %v1146 = vsel %vm1144, %v1120, 0
    %v1149 = vsel %vm1144, %v1136, 0
    %1151 = vmatprep.subr.bf16.mxu0 0
    %1152 = vmatpush1.bf16.xpose.msra.mxu0 %v1149
    %1153 = vmatprep.subr.bf16.mxu0 0
    %1154 = vmatpush1.bf16.xpose.msra.mxu0 0
    %1155 = vmatprep.subr.bf16.mxu0 0
    %1156 = vmatpush1.bf16.xpose.msra.mxu0 0
    %1157 = vmatprep.subr.bf16.mxu0 0
    %1158 = vmatpush1.bf16.xpose.msra.mxu0 0
    %1159 = vmatprep.subr.bf16.mxu0 0
    %1160 = vmatpush1.bf16.xpose.msra.mxu0 0
    %1161 = vmatprep.subr.bf16.mxu0 0
    %1162 = vmatpush1.bf16.xpose.msra.mxu0 0
    %1163 = vmatprep.subr.bf16.mxu0 0
    %1164 = vmatpush1.bf16.xpose.msra.mxu0 0
    %1165 = vmatprep.subr.bf16.mxu0 0
    %1166 = vmatpush1.bf16.xpose.msra.mxu0 0
    %1167 = vmatprep.subr.bf16.mxu0 0
    %1168 = vmatpush1.bf16.xpose.msra.mxu0 0
    %1169 = vmatprep.subr.bf16.mxu0 0
    %1170 = vmatpush1.bf16.xpose.msra.mxu0 0
    %1171 = vmatprep.subr.bf16.mxu0 0
    %1172 = vmatpush1.bf16.xpose.msra.mxu0 0
    %1173 = vmatprep.subr.bf16.mxu0 0
    %1174 = vmatpush1.bf16.xpose.msra.mxu0 0
    %1175 = vmatprep.subr.bf16.mxu0 0
    %1176 = vmatpush1.bf16.xpose.msra.mxu0 0
    %1177 = vmatprep.subr.bf16.mxu0 0
    %1178 = vmatpush1.bf16.xpose.msra.mxu0 0
    %1179 = vmatprep.subr.bf16.mxu0 0
    %1180 = vmatpush1.bf16.xpose.msra.mxu0 0
    %1181 = vmatprep.subr.bf16.mxu0 0
    %1182 = vmatpush1.bf16.xpose.msra.mxu0 0
    %1183 = vmatprep.mubr.bf16.mxu0 0
    %1184 = vmatmul.mubr.bf16.gmra.mrb[0].mxu0 %v1146
    %v1185 = vpop.f32.mrb[0].mxu0
    %v1186 = vadd.f32 0.0, %v1185
    %v1187 = vpop.f32.mrb[0].mxu0
    %v1188 = vpop.f32.mrb[0].mxu0
    %v1189 = vpop.f32.mrb[0].mxu0
    %1190 = vdwg.mxu0
    %v1192 = vsel %vm1144, %v1121, 0
    %v1195 = vsel %vm1144, %v1137, 0
    %1197 = vmatprep.subr.bf16.mxu0 0
    %1198 = vmatpush1.bf16.xpose.msra.mxu0 %v1195
    %1199 = vmatprep.subr.bf16.mxu0 0
    %1200 = vmatpush1.bf16.xpose.msra.mxu0 0
    %1201 = vmatprep.subr.bf16.mxu0 0
    %1202 = vmatpush1.bf16.xpose.msra.mxu0 0
    %1203 = vmatprep.subr.bf16.mxu0 0
    %1204 = vmatpush1.bf16.xpose.msra.mxu0 0
    %1205 = vmatprep.subr.bf16.mxu0 0
    %1206 = vmatpush1.bf16.xpose.msra.mxu0 0
    %1207 = vmatprep.subr.bf16.mxu0 0
    %1208 = vmatpush1.bf16.xpose.msra.mxu0 0
    %1209 = vmatprep.subr.bf16.mxu0 0
    %1210 = vmatpush1.bf16.xpose.msra.mxu0 0
    %1211 = vmatprep.subr.bf16.mxu0 0
    %1212 = vmatpush1.bf16.xpose.msra.mxu0 0
    %1213 = vmatprep.subr.bf16.mxu0 0
    %1214 = vmatpush1.bf16.xpose.msra.mxu0 0
    %1215 = vmatprep.subr.bf16.mxu0 0
    %1216 = vmatpush1.bf16.xpose.msra.mxu0 0
    %1217 = vmatprep.subr.bf16.mxu0 0
    %1218 = vmatpush1.bf16.xpose.msra.mxu0 0
    %1219 = vmatprep.subr.bf16.mxu0 0
    %1220 = vmatpush1.bf16.xpose.msra.mxu0 0
    %1221 = vmatprep.subr.bf16.mxu0 0
    %1222 = vmatpush1.bf16.xpose.msra.mxu0 0
    %1223 = vmatprep.subr.bf16.mxu0 0
    %1224 = vmatpush1.bf16.xpose.msra.mxu0 0
    %1225 = vmatprep.subr.bf16.mxu0 0
    %1226 = vmatpush1.bf16.xpose.msra.mxu0 0
    %1227 = vmatprep.subr.bf16.mxu0 0
    %1228 = vmatpush1.bf16.xpose.msra.mxu0 0
    %1229 = vmatprep.mubr.bf16.mxu0 0
    %1230 = vmatmul.mubr.bf16.gmra.mrb[0].mxu0 %v1192
    %v1231 = vpop.f32.mrb[0].mxu0
    %v1232 = vadd.f32 0.0, %v1231
    %v1233 = vpop.f32.mrb[0].mxu0
    %v1234 = vpop.f32.mrb[0].mxu0
    %v1235 = vpop.f32.mrb[0].mxu0
    %1236 = vdwg.mxu0
    %v1238 = vsel %vm1144, %v1122, 0
    %v1241 = vsel %vm1144, %v1138, 0
    %1243 = vmatprep.subr.bf16.mxu0 0
    %1244 = vmatpush1.bf16.xpose.msra.mxu0 %v1241
    %1245 = vmatprep.subr.bf16.mxu0 0
    %1246 = vmatpush1.bf16.xpose.msra.mxu0 0
    %1247 = vmatprep.subr.bf16.mxu0 0
    %1248 = vmatpush1.bf16.xpose.msra.mxu0 0
    %1249 = vmatprep.subr.bf16.mxu0 0
    %1250 = vmatpush1.bf16.xpose.msra.mxu0 0
    %1251 = vmatprep.subr.bf16.mxu0 0
    %1252 = vmatpush1.bf16.xpose.msra.mxu0 0
    %1253 = vmatprep.subr.bf16.mxu0 0
    %1254 = vmatpush1.bf16.xpose.msra.mxu0 0
    %1255 = vmatprep.subr.bf16.mxu0 0
    %1256 = vmatpush1.bf16.xpose.msra.mxu0 0
    %1257 = vmatprep.subr.bf16.mxu0 0
    %1258 = vmatpush1.bf16.xpose.msra.mxu0 0
    %1259 = vmatprep.subr.bf16.mxu0 0
    %1260 = vmatpush1.bf16.xpose.msra.mxu0 0
    %1261 = vmatprep.subr.bf16.mxu0 0
    %1262 = vmatpush1.bf16.xpose.msra.mxu0 0
    %1263 = vmatprep.subr.bf16.mxu0 0
    %1264 = vmatpush1.bf16.xpose.msra.mxu0 0
    %1265 = vmatprep.subr.bf16.mxu0 0
    %1266 = vmatpush1.bf16.xpose.msra.mxu0 0
    %1267 = vmatprep.subr.bf16.mxu0 0
    %1268 = vmatpush1.bf16.xpose.msra.mxu0 0
    %1269 = vmatprep.subr.bf16.mxu0 0
    %1270 = vmatpush1.bf16.xpose.msra.mxu0 0
    %1271 = vmatprep.subr.bf16.mxu0 0
    %1272 = vmatpush1.bf16.xpose.msra.mxu0 0
    %1273 = vmatprep.subr.bf16.mxu0 0
    %1274 = vmatpush1.bf16.xpose.msra.mxu0 0
    %1275 = vmatprep.mubr.bf16.mxu0 0
    %1276 = vmatmul.mubr.bf16.gmra.mrb[0].mxu0 %v1238
    %v1277 = vpop.f32.mrb[0].mxu0
    %v1278 = vadd.f32 0.0, %v1277
    %v1279 = vpop.f32.mrb[0].mxu0
    %v1280 = vpop.f32.mrb[0].mxu0
    %v1281 = vpop.f32.mrb[0].mxu0
    %1282 = vdwg.mxu0
    %v1284 = vsel %vm1144, %v1123, 0
    %v1287 = vsel %vm1144, %v1139, 0
    %1289 = vmatprep.subr.bf16.mxu0 0
    %1290 = vmatpush1.bf16.xpose.msra.mxu0 %v1287
    %1291 = vmatprep.subr.bf16.mxu0 0
    %1292 = vmatpush1.bf16.xpose.msra.mxu0 0
    %1293 = vmatprep.subr.bf16.mxu0 0
    %1294 = vmatpush1.bf16.xpose.msra.mxu0 0
    %1295 = vmatprep.subr.bf16.mxu0 0
    %1296 = vmatpush1.bf16.xpose.msra.mxu0 0
    %1297 = vmatprep.subr.bf16.mxu0 0
    %1298 = vmatpush1.bf16.xpose.msra.mxu0 0
    %1299 = vmatprep.subr.bf16.mxu0 0
    %1300 = vmatpush1.bf16.xpose.msra.mxu0 0
    %1301 = vmatprep.subr.bf16.mxu0 0
    %1302 = vmatpush1.bf16.xpose.msra.mxu0 0
    %1303 = vmatprep.subr.bf16.mxu0 0
    %1304 = vmatpush1.bf16.xpose.msra.mxu0 0
    %1305 = vmatprep.subr.bf16.mxu0 0
    %1306 = vmatpush1.bf16.xpose.msra.mxu0 0
    %1307 = vmatprep.subr.bf16.mxu0 0
    %1308 = vmatpush1.bf16.xpose.msra.mxu0 0
    %1309 = vmatprep.subr.bf16.mxu0 0
    %1310 = vmatpush1.bf16.xpose.msra.mxu0 0
    %1311 = vmatprep.subr.bf16.mxu0 0
    %1312 = vmatpush1.bf16.xpose.msra.mxu0 0
    %1313 = vmatprep.subr.bf16.mxu0 0
    %1314 = vmatpush1.bf16.xpose.msra.mxu0 0
    %1315 = vmatprep.subr.bf16.mxu0 0
    %1316 = vmatpush1.bf16.xpose.msra.mxu0 0
    %1317 = vmatprep.subr.bf16.mxu0 0
    %1318 = vmatpush1.bf16.xpose.msra.mxu0 0
    %1319 = vmatprep.subr.bf16.mxu0 0
    %1320 = vmatpush1.bf16.xpose.msra.mxu0 0
    %1321 = vmatprep.mubr.bf16.mxu0 0
    %1322 = vmatmul.mubr.bf16.gmra.mrb[0].mxu0 %v1284
    %v1323 = vpop.f32.mrb[0].mxu0
    %v1324 = vadd.f32 0.0, %v1323
    %v1325 = vpop.f32.mrb[0].mxu0
    %v1326 = vpop.f32.mrb[0].mxu0
    %v1327 = vpop.f32.mrb[0].mxu0
    %1328 = vdwg.mxu0
    %v1330 = vsel %vm1144, %v1124, 0
    %v1333 = vsel %vm1144, %v1140, 0
    %1335 = vmatprep.subr.bf16.mxu0 0
    %1336 = vmatpush1.bf16.xpose.msra.mxu0 %v1333
    %1337 = vmatprep.subr.bf16.mxu0 0
    %1338 = vmatpush1.bf16.xpose.msra.mxu0 0
    %1339 = vmatprep.subr.bf16.mxu0 0
    %1340 = vmatpush1.bf16.xpose.msra.mxu0 0
    %1341 = vmatprep.subr.bf16.mxu0 0
    %1342 = vmatpush1.bf16.xpose.msra.mxu0 0
    %1343 = vmatprep.subr.bf16.mxu0 0
    %1344 = vmatpush1.bf16.xpose.msra.mxu0 0
    %1345 = vmatprep.subr.bf16.mxu0 0
    %1346 = vmatpush1.bf16.xpose.msra.mxu0 0
    %1347 = vmatprep.subr.bf16.mxu0 0
    %1348 = vmatpush1.bf16.xpose.msra.mxu0 0
    %1349 = vmatprep.subr.bf16.mxu0 0
    %1350 = vmatpush1.bf16.xpose.msra.mxu0 0
    %1351 = vmatprep.subr.bf16.mxu0 0
    %1352 = vmatpush1.bf16.xpose.msra.mxu0 0
    %1353 = vmatprep.subr.bf16.mxu0 0
    %1354 = vmatpush1.bf16.xpose.msra.mxu0 0
    %1355 = vmatprep.subr.bf16.mxu0 0
    %1356 = vmatpush1.bf16.xpose.msra.mxu0 0
    %1357 = vmatprep.subr.bf16.mxu0 0
    %1358 = vmatpush1.bf16.xpose.msra.mxu0 0
    %1359 = vmatprep.subr.bf16.mxu0 0
    %1360 = vmatpush1.bf16.xpose.msra.mxu0 0
    %1361 = vmatprep.subr.bf16.mxu0 0
    %1362 = vmatpush1.bf16.xpose.msra.mxu0 0
    %1363 = vmatprep.subr.bf16.mxu0 0
    %1364 = vmatpush1.bf16.xpose.msra.mxu0 0
    %1365 = vmatprep.subr.bf16.mxu0 0
    %1366 = vmatpush1.bf16.xpose.msra.mxu0 0
    %1367 = vmatprep.mubr.bf16.mxu0 0
    %1368 = vmatmul.mubr.bf16.gmra.mrb[0].mxu0 %v1330
    %v1369 = vpop.f32.mrb[0].mxu0
    %v1370 = vadd.f32 0.0, %v1369
    %v1371 = vpop.f32.mrb[0].mxu0
    %v1372 = vpop.f32.mrb[0].mxu0
    %v1373 = vpop.f32.mrb[0].mxu0
    %1374 = vdwg.mxu0
    %v1376 = vsel %vm1144, %v1125, 0
    %v1379 = vsel %vm1144, %v1141, 0
    %1381 = vmatprep.subr.bf16.mxu0 0
    %1382 = vmatpush1.bf16.xpose.msra.mxu0 %v1379
    %1383 = vmatprep.subr.bf16.mxu0 0
    %1384 = vmatpush1.bf16.xpose.msra.mxu0 0
    %1385 = vmatprep.subr.bf16.mxu0 0
    %1386 = vmatpush1.bf16.xpose.msra.mxu0 0
    %1387 = vmatprep.subr.bf16.mxu0 0
    %1388 = vmatpush1.bf16.xpose.msra.mxu0 0
    %1389 = vmatprep.subr.bf16.mxu0 0
    %1390 = vmatpush1.bf16.xpose.msra.mxu0 0
    %1391 = vmatprep.subr.bf16.mxu0 0
    %1392 = vmatpush1.bf16.xpose.msra.mxu0 0
    %1393 = vmatprep.subr.bf16.mxu0 0
    %1394 = vmatpush1.bf16.xpose.msra.mxu0 0
    %1395 = vmatprep.subr.bf16.mxu0 0
    %1396 = vmatpush1.bf16.xpose.msra.mxu0 0
    %1397 = vmatprep.subr.bf16.mxu0 0
    %1398 = vmatpush1.bf16.xpose.msra.mxu0 0
    %1399 = vmatprep.subr.bf16.mxu0 0
    %1400 = vmatpush1.bf16.xpose.msra.mxu0 0
    %1401 = vmatprep.subr.bf16.mxu0 0
    %1402 = vmatpush1.bf16.xpose.msra.mxu0 0
    %1403 = vmatprep.subr.bf16.mxu0 0
    %1404 = vmatpush1.bf16.xpose.msra.mxu0 0
    %1405 = vmatprep.subr.bf16.mxu0 0
    %1406 = vmatpush1.bf16.xpose.msra.mxu0 0
    %1407 = vmatprep.subr.bf16.mxu0 0
    %1408 = vmatpush1.bf16.xpose.msra.mxu0 0
    %1409 = vmatprep.subr.bf16.mxu0 0
    %1410 = vmatpush1.bf16.xpose.msra.mxu0 0
    %1411 = vmatprep.subr.bf16.mxu0 0
    %1412 = vmatpush1.bf16.xpose.msra.mxu0 0
    %1413 = vmatprep.mubr.bf16.mxu0 0
    %1414 = vmatmul.mubr.bf16.gmra.mrb[0].mxu0 %v1376
    %v1415 = vpop.f32.mrb[0].mxu0
    %v1416 = vadd.f32 0.0, %v1415
    %v1417 = vpop.f32.mrb[0].mxu0
    %v1418 = vpop.f32.mrb[0].mxu0
    %v1419 = vpop.f32.mrb[0].mxu0
    %1420 = vdwg.mxu0
    %v1422 = vsel %vm1144, %v1126, 0
    %v1425 = vsel %vm1144, %v1142, 0
    %1427 = vmatprep.subr.bf16.mxu0 0
    %1428 = vmatpush1.bf16.xpose.msra.mxu0 %v1425
    %1429 = vmatprep.subr.bf16.mxu0 0
    %1430 = vmatpush1.bf16.xpose.msra.mxu0 0
    %1431 = vmatprep.subr.bf16.mxu0 0
    %1432 = vmatpush1.bf16.xpose.msra.mxu0 0
    %1433 = vmatprep.subr.bf16.mxu0 0
    %1434 = vmatpush1.bf16.xpose.msra.mxu0 0
    %1435 = vmatprep.subr.bf16.mxu0 0
    %1436 = vmatpush1.bf16.xpose.msra.mxu0 0
    %1437 = vmatprep.subr.bf16.mxu0 0
    %1438 = vmatpush1.bf16.xpose.msra.mxu0 0
    %1439 = vmatprep.subr.bf16.mxu0 0
    %1440 = vmatpush1.bf16.xpose.msra.mxu0 0
    %1441 = vmatprep.subr.bf16.mxu0 0
    %1442 = vmatpush1.bf16.xpose.msra.mxu0 0
    %1443 = vmatprep.subr.bf16.mxu0 0
    %1444 = vmatpush1.bf16.xpose.msra.mxu0 0
    %1445 = vmatprep.subr.bf16.mxu0 0
    %1446 = vmatpush1.bf16.xpose.msra.mxu0 0
    %1447 = vmatprep.subr.bf16.mxu0 0
    %1448 = vmatpush1.bf16.xpose.msra.mxu0 0
    %1449 = vmatprep.subr.bf16.mxu0 0
    %1450 = vmatpush1.bf16.xpose.msra.mxu0 0
    %1451 = vmatprep.subr.bf16.mxu0 0
    %1452 = vmatpush1.bf16.xpose.msra.mxu0 0
    %1453 = vmatprep.subr.bf16.mxu0 0
    %1454 = vmatpush1.bf16.xpose.msra.mxu0 0
    %1455 = vmatprep.subr.bf16.mxu0 0
    %1456 = vmatpush1.bf16.xpose.msra.mxu0 0
    %1457 = vmatprep.subr.bf16.mxu0 0
    %1458 = vmatpush1.bf16.xpose.msra.mxu0 0
    %1459 = vmatprep.mubr.bf16.mxu0 0
    %1460 = vmatmul.mubr.bf16.gmra.mrb[0].mxu0 %v1422
    %v1461 = vpop.f32.mrb[0].mxu0
    %v1462 = vadd.f32 0.0, %v1461
    %v1463 = vpop.f32.mrb[0].mxu0
    %v1464 = vpop.f32.mrb[0].mxu0
    %v1465 = vpop.f32.mrb[0].mxu0
    %1466 = vdwg.mxu0
    %v1468 = vsel %vm1144, %v1127, 0
    %v1471 = vsel %vm1144, %v1143, 0
    %1473 = vmatprep.subr.bf16.mxu0 0
    %1474 = vmatpush1.bf16.xpose.msra.mxu0 %v1471
    %1475 = vmatprep.subr.bf16.mxu0 0
    %1476 = vmatpush1.bf16.xpose.msra.mxu0 0
    %1477 = vmatprep.subr.bf16.mxu0 0
    %1478 = vmatpush1.bf16.xpose.msra.mxu0 0
    %1479 = vmatprep.subr.bf16.mxu0 0
    %1480 = vmatpush1.bf16.xpose.msra.mxu0 0
    %1481 = vmatprep.subr.bf16.mxu0 0
    %1482 = vmatpush1.bf16.xpose.msra.mxu0 0
    %1483 = vmatprep.subr.bf16.mxu0 0
    %1484 = vmatpush1.bf16.xpose.msra.mxu0 0
    %1485 = vmatprep.subr.bf16.mxu0 0
    %1486 = vmatpush1.bf16.xpose.msra.mxu0 0
    %1487 = vmatprep.subr.bf16.mxu0 0
    %1488 = vmatpush1.bf16.xpose.msra.mxu0 0
    %1489 = vmatprep.subr.bf16.mxu0 0
    %1490 = vmatpush1.bf16.xpose.msra.mxu0 0
    %1491 = vmatprep.subr.bf16.mxu0 0
    %1492 = vmatpush1.bf16.xpose.msra.mxu0 0
    %1493 = vmatprep.subr.bf16.mxu0 0
    %1494 = vmatpush1.bf16.xpose.msra.mxu0 0
    %1495 = vmatprep.subr.bf16.mxu0 0
    %1496 = vmatpush1.bf16.xpose.msra.mxu0 0
    %1497 = vmatprep.subr.bf16.mxu0 0
    %1498 = vmatpush1.bf16.xpose.msra.mxu0 0
    %1499 = vmatprep.subr.bf16.mxu0 0
    %1500 = vmatpush1.bf16.xpose.msra.mxu0 0
    %1501 = vmatprep.subr.bf16.mxu0 0
    %1502 = vmatpush1.bf16.xpose.msra.mxu0 0
    %1503 = vmatprep.subr.bf16.mxu0 0
    %1504 = vmatpush1.bf16.xpose.msra.mxu0 0
    %1505 = vmatprep.mubr.bf16.mxu0 0
    %1506 = vmatmul.mubr.bf16.gmra.mrb[0].mxu0 %v1468
    %v1507 = vpop.f32.mrb[0].mxu0
    %v1508 = vadd.f32 0.0, %v1507
    %v1509 = vpop.f32.mrb[0].mxu0
    %v1510 = vpop.f32.mrb[0].mxu0
    %v1511 = vpop.f32.mrb[0].mxu0
    %1512 = vdwg.mxu0
    %v1513 = vlaneseq
    %v1514 = vshrl.u32 %v1513, 7
    %v1515 = vlaneseq
    %v1516 = vand.u32 %v1515, 127
    %vm1517 = vcmp.le.s32.totalorder %v1516, %v1514
    %v1518 = vsel %vm1517, %v1186, -1e+30
    %v1519 = vsel %vm1517, %v1232, -1e+30
    %v1520 = vsel %vm1517, %v1278, -1e+30
    %v1521 = vsel %vm1517, %v1324, -1e+30
    %v1522 = vsel %vm1517, %v1370, -1e+30
    %v1523 = vsel %vm1517, %v1416, -1e+30
    %v1524 = vsel %vm1517, %v1462, -1e+30
    %v1525 = vsel %vm1517, %v1508, -1e+30
    %v1526 = vld [vmem:[#allocation2] sm:$0xff]
    %v1527 = vld [vmem:[#allocation2 + $0x8] sm:$0xff]
    %v1528 = vld [vmem:[#allocation2 + $0x10] sm:$0xff]
    %v1529 = vld [vmem:[#allocation2 + $0x18] sm:$0xff]
    %v1530 = vld [vmem:[#allocation2 + $0x20] sm:$0xff]
    %v1531 = vld [vmem:[#allocation2 + $0x28] sm:$0xff]
    %v1532 = vld [vmem:[#allocation2 + $0x30] sm:$0xff]
    %v1533 = vld [vmem:[#allocation2 + $0x38] sm:$0xff]
    %v1534 = vsel %vm1144, %v1518, -inf
    %1535 = vmax.xlane.f32.xlu0 %v1534
    %v1536 = vpop.xlane.xlu0 %1535
    %v1537 = vsel %vm1144, %v1519, -inf
    %1538 = vmax.xlane.f32.xlu0 %v1537
    %v1539 = vpop.xlane.xlu0 %1538
    %v1540 = vsel %vm1144, %v1520, -inf
    %1541 = vmax.xlane.f32.xlu0 %v1540
    %v1542 = vpop.xlane.xlu0 %1541
    %v1543 = vsel %vm1144, %v1521, -inf
    %1544 = vmax.xlane.f32.xlu0 %v1543
    %v1545 = vpop.xlane.xlu0 %1544
    %v1546 = vsel %vm1144, %v1522, -inf
    %1547 = vmax.xlane.f32.xlu0 %v1546
    %v1548 = vpop.xlane.xlu0 %1547
    %v1549 = vsel %vm1144, %v1523, -inf
    %1550 = vmax.xlane.f32.xlu0 %v1549
    %v1551 = vpop.xlane.xlu0 %1550
    %v1552 = vsel %vm1144, %v1524, -inf
    %1553 = vmax.xlane.f32.xlu0 %v1552
    %v1554 = vpop.xlane.xlu0 %1553
    %v1555 = vsel %vm1144, %v1525, -inf
    %1556 = vmax.xlane.f32.xlu0 %v1555
    %v1557 = vpop.xlane.xlu0 %1556
    %v1558 = vmax.f32 %v1526, %v1536
    %v1559 = vmax.f32 %v1527, %v1539
    %v1560 = vmax.f32 %v1528, %v1542
    %v1561 = vmax.f32 %v1529, %v1545
    %v1562 = vmax.f32 %v1530, %v1548
    %v1563 = vmax.f32 %v1531, %v1551
    %v1564 = vmax.f32 %v1532, %v1554
    %v1565 = vmax.f32 %v1533, %v1557
    %v1566 = vsub.f32 %v1526, %v1558
    %v1567 = vsub.f32 %v1527, %v1559
    %v1568 = vsub.f32 %v1528, %v1560
    %v1569 = vsub.f32 %v1529, %v1561
    %v1570 = vsub.f32 %v1530, %v1562
    %v1571 = vsub.f32 %v1531, %v1563
    %v1572 = vsub.f32 %v1532, %v1564
    %v1573 = vsub.f32 %v1533, %v1565
    %v1574 = vmul.f32 %v1566, 1.442695
    %v1575 = vpow.pop %v1574
    %v1576 = vmul.f32 %v1567, 1.442695
    %v1577 = vpow.pop %v1576
    %v1578 = vmul.f32 %v1568, 1.442695
    %v1579 = vpow.pop %v1578
    %v1580 = vmul.f32 %v1569, 1.442695
    %v1581 = vpow.pop %v1580
    %v1582 = vmul.f32 %v1570, 1.442695
    %v1583 = vpow.pop %v1582
    %v1584 = vmul.f32 %v1571, 1.442695
    %v1585 = vpow.pop %v1584
    %v1586 = vmul.f32 %v1572, 1.442695
    %v1587 = vpow.pop %v1586
    %v1588 = vmul.f32 %v1573, 1.442695
    %v1589 = vpow.pop %v1588
    %1591 = vset.pattern.permute.xlu0 0
    %1592 = vperm.xlu0 %1591, %v1558
    %v1593 = vpop.permute.xlu0 %1592
    %1596 = vset.pattern.permute.xlu0 0
    %1597 = vperm.xlu0 %1596, %v1559
    %v1598 = vpop.permute.xlu0 %1597
    %1601 = vset.pattern.permute.xlu0 0
    %1602 = vperm.xlu0 %1601, %v1560
    %v1603 = vpop.permute.xlu0 %1602
    %1606 = vset.pattern.permute.xlu0 0
    %1607 = vperm.xlu0 %1606, %v1561
    %v1608 = vpop.permute.xlu0 %1607
    %1611 = vset.pattern.permute.xlu0 0
    %1612 = vperm.xlu0 %1611, %v1562
    %v1613 = vpop.permute.xlu0 %1612
    %1616 = vset.pattern.permute.xlu0 0
    %1617 = vperm.xlu0 %1616, %v1563
    %v1618 = vpop.permute.xlu0 %1617
    %1621 = vset.pattern.permute.xlu0 0
    %1622 = vperm.xlu0 %1621, %v1564
    %v1623 = vpop.permute.xlu0 %1622
    %1626 = vset.pattern.permute.xlu0 0
    %1627 = vperm.xlu0 %1626, %v1565
    %v1628 = vpop.permute.xlu0 %1627
    %v1630 = vsub.f32 %v1518, %v1593
    %v1631 = vsub.f32 %v1519, %v1598
    %v1632 = vsub.f32 %v1520, %v1603
    %v1633 = vsub.f32 %v1521, %v1608
    %v1634 = vsub.f32 %v1522, %v1613
    %v1635 = vsub.f32 %v1523, %v1618
    %v1636 = vsub.f32 %v1524, %v1623
    %v1637 = vsub.f32 %v1525, %v1628
    %v1638 = vmul.f32 %v1630, 1.442695
    %v1639 = vpow.pop %v1638
    %v1640 = vmul.f32 %v1631, 1.442695
    %v1641 = vpow.pop %v1640
    %v1642 = vmul.f32 %v1632, 1.442695
    %v1643 = vpow.pop %v1642
    %v1644 = vmul.f32 %v1633, 1.442695
    %v1645 = vpow.pop %v1644
    %v1646 = vmul.f32 %v1634, 1.442695
    %v1647 = vpow.pop %v1646
    %v1648 = vmul.f32 %v1635, 1.442695
    %v1649 = vpow.pop %v1648
    %v1650 = vmul.f32 %v1636, 1.442695
    %v1651 = vpow.pop %v1650
    %v1652 = vmul.f32 %v1637, 1.442695
    %v1653 = vpow.pop %v1652
    %v1654 = vld [vmem:[#allocation3] sm:$0xff]
    %v1655 = vld [vmem:[#allocation3 + $0x8] sm:$0xff]
    %v1656 = vld [vmem:[#allocation3 + $0x10] sm:$0xff]
    %v1657 = vld [vmem:[#allocation3 + $0x18] sm:$0xff]
    %v1658 = vld [vmem:[#allocation3 + $0x20] sm:$0xff]
    %v1659 = vld [vmem:[#allocation3 + $0x28] sm:$0xff]
    %v1660 = vld [vmem:[#allocation3 + $0x30] sm:$0xff]
    %v1661 = vld [vmem:[#allocation3 + $0x38] sm:$0xff]
    %v1662 = vmul.f32 %v1575, %v1654
    %v1663 = vmul.f32 %v1577, %v1655
    %v1664 = vmul.f32 %v1579, %v1656
    %v1665 = vmul.f32 %v1581, %v1657
    %v1666 = vmul.f32 %v1583, %v1658
    %v1667 = vmul.f32 %v1585, %v1659
    %v1668 = vmul.f32 %v1587, %v1660
    %v1669 = vmul.f32 %v1589, %v1661
    %v1670 = vsel %vm1144, %v1639, 0.0
    %1671 = vadd.xlane.f32.xlu0 %v1670
    %v1672 = vpop.xlane.xlu0 %1671
    %v1673 = vsel %vm1144, %v1641, 0.0
    %1674 = vadd.xlane.f32.xlu0 %v1673
    %v1675 = vpop.xlane.xlu0 %1674
    %v1676 = vsel %vm1144, %v1643, 0.0
    %1677 = vadd.xlane.f32.xlu0 %v1676
    %v1678 = vpop.xlane.xlu0 %1677
    %v1679 = vsel %vm1144, %v1645, 0.0
    %1680 = vadd.xlane.f32.xlu0 %v1679
    %v1681 = vpop.xlane.xlu0 %1680
    %v1682 = vsel %vm1144, %v1647, 0.0
    %1683 = vadd.xlane.f32.xlu0 %v1682
    %v1684 = vpop.xlane.xlu0 %1683
    %v1685 = vsel %vm1144, %v1649, 0.0
    %1686 = vadd.xlane.f32.xlu0 %v1685
    %v1687 = vpop.xlane.xlu0 %1686
    %v1688 = vsel %vm1144, %v1651, 0.0
    %1689 = vadd.xlane.f32.xlu0 %v1688
    %v1690 = vpop.xlane.xlu0 %1689
    %v1691 = vsel %vm1144, %v1653, 0.0
    %1692 = vadd.xlane.f32.xlu0 %v1691
    %v1693 = vpop.xlane.xlu0 %1692
    %v1694 = vadd.f32 %v1662, %v1672
    %v1695 = vadd.f32 %v1663, %v1675
    %v1696 = vadd.f32 %v1664, %v1678
    %v1697 = vadd.f32 %v1665, %v1681
    %v1698 = vadd.f32 %v1666, %v1684
    %v1699 = vadd.f32 %v1667, %v1687
    %v1700 = vadd.f32 %v1668, %v1690
    %v1701 = vadd.f32 %v1669, %v1693
    %vm1702 = vcmask 7168
    %1703 = vst.msk [vmem:[#allocation3] sm:$0xff] %vm1702, %v1694
    %1704 = vst.msk [vmem:[#allocation3 + $0x8] sm:$0xff] %vm1702, %v1695
    %1705 = vst.msk [vmem:[#allocation3 + $0x10] sm:$0xff] %vm1702, %v1696
    %1706 = vst.msk [vmem:[#allocation3 + $0x18] sm:$0xff] %vm1702, %v1697
    %1707 = vst.msk [vmem:[#allocation3 + $0x20] sm:$0xff] %vm1702, %v1698
    %1708 = vst.msk [vmem:[#allocation3 + $0x28] sm:$0xff] %vm1702, %v1699
    %1709 = vst.msk [vmem:[#allocation3 + $0x30] sm:$0xff] %vm1702, %v1700
    %1710 = vst.msk [vmem:[#allocation3 + $0x38] sm:$0xff] %vm1702, %v1701
    %v1711 = vpack.c.bf16 %v1639, %v1639
    %v1712 = vpack.c.bf16 %v1641, %v1641
    %v1713 = vpack.c.bf16 %v1643, %v1643
    %v1714 = vpack.c.bf16 %v1645, %v1645
    %v1715 = vpack.c.bf16 %v1647, %v1647
    %v1716 = vpack.c.bf16 %v1649, %v1649
    %v1717 = vpack.c.bf16 %v1651, %v1651
    %v1718 = vpack.c.bf16 %v1653, %v1653
    %v1719 = vld [vmem:[%s2] sm:$0xff]
    %v1720 = vld [vmem:[%s2 + $0x8] sm:$0xff]
    %v1721 = vld [vmem:[%s2 + $0x10] sm:$0xff]
    %v1722 = vld [vmem:[%s2 + $0x18] sm:$0xff]
    %v1723 = vld [vmem:[%s2 + $0x20] sm:$0xff]
    %v1724 = vld [vmem:[%s2 + $0x28] sm:$0xff]
    %v1725 = vld [vmem:[%s2 + $0x30] sm:$0xff]
    %v1726 = vld [vmem:[%s2 + $0x38] sm:$0xff]
    %v1727 = vpack.c.bf16 %v1719, %v1719
    %v1728 = vpack.c.bf16 %v1720, %v1720
    %v1729 = vpack.c.bf16 %v1721, %v1721
    %v1730 = vpack.c.bf16 %v1722, %v1722
    %v1731 = vpack.c.bf16 %v1723, %v1723
    %v1732 = vpack.c.bf16 %v1724, %v1724
    %v1733 = vpack.c.bf16 %v1725, %v1725
    %v1734 = vpack.c.bf16 %v1726, %v1726
    %v1736 = vsel %vm1144, %v1711, 0
    %vm1738 = vcmask 1043456
    %v1740 = vsel %vm1738, %v1727, 0
    %1742 = vmatprep.subr.bf16.mxu0 0
    %1743 = vmatpush1.bf16.msra.mxu0 %v1740
    %1744 = vmatprep.subr.bf16.mxu0 0
    %1745 = vmatpush1.bf16.msra.mxu0 0
    %1746 = vmatprep.subr.bf16.mxu0 0
    %1747 = vmatpush1.bf16.msra.mxu0 0
    %1748 = vmatprep.subr.bf16.mxu0 0
    %1749 = vmatpush1.bf16.msra.mxu0 0
    %1750 = vmatprep.subr.bf16.mxu0 0
    %1751 = vmatpush1.bf16.msra.mxu0 0
    %1752 = vmatprep.subr.bf16.mxu0 0
    %1753 = vmatpush1.bf16.msra.mxu0 0
    %1754 = vmatprep.subr.bf16.mxu0 0
    %1755 = vmatpush1.bf16.msra.mxu0 0
    %1756 = vmatprep.subr.bf16.mxu0 0
    %1757 = vmatpush1.bf16.msra.mxu0 0
    %1758 = vmatprep.subr.bf16.mxu0 0
    %1759 = vmatpush1.bf16.msra.mxu0 0
    %1760 = vmatprep.subr.bf16.mxu0 0
    %1761 = vmatpush1.bf16.msra.mxu0 0
    %1762 = vmatprep.subr.bf16.mxu0 0
    %1763 = vmatpush1.bf16.msra.mxu0 0
    %1764 = vmatprep.subr.bf16.mxu0 0
    %1765 = vmatpush1.bf16.msra.mxu0 0
    %1766 = vmatprep.subr.bf16.mxu0 0
    %1767 = vmatpush1.bf16.msra.mxu0 0
    %1768 = vmatprep.subr.bf16.mxu0 0
    %1769 = vmatpush1.bf16.msra.mxu0 0
    %1770 = vmatprep.subr.bf16.mxu0 0
    %1771 = vmatpush1.bf16.msra.mxu0 0
    %1772 = vmatprep.subr.bf16.mxu0 0
    %1773 = vmatpush1.bf16.msra.mxu0 0
    %1774 = vmatprep.mubr.bf16.mxu0 0
    %1775 = vmatmul.mubr.bf16.gmra.mrb[0].mxu0 %v1736
    %v1776 = vpop.f32.mrb[0].mxu0
    %v1777 = vadd.f32 0.0, %v1776
    %v1778 = vpop.f32.mrb[0].mxu0
    %v1779 = vpop.f32.mrb[0].mxu0
    %v1780 = vpop.f32.mrb[0].mxu0
    %1781 = vdwg.mxu0
    %v1783 = vsel %vm1144, %v1712, 0
    %v1786 = vsel %vm1738, %v1728, 0
    %1788 = vmatprep.subr.bf16.mxu0 0
    %1789 = vmatpush1.bf16.msra.mxu0 %v1786
    %1790 = vmatprep.subr.bf16.mxu0 0
    %1791 = vmatpush1.bf16.msra.mxu0 0
    %1792 = vmatprep.subr.bf16.mxu0 0
    %1793 = vmatpush1.bf16.msra.mxu0 0
    %1794 = vmatprep.subr.bf16.mxu0 0
    %1795 = vmatpush1.bf16.msra.mxu0 0
    %1796 = vmatprep.subr.bf16.mxu0 0
    %1797 = vmatpush1.bf16.msra.mxu0 0
    %1798 = vmatprep.subr.bf16.mxu0 0
    %1799 = vmatpush1.bf16.msra.mxu0 0
    %1800 = vmatprep.subr.bf16.mxu0 0
    %1801 = vmatpush1.bf16.msra.mxu0 0
    %1802 = vmatprep.subr.bf16.mxu0 0
    %1803 = vmatpush1.bf16.msra.mxu0 0
    %1804 = vmatprep.subr.bf16.mxu0 0
    %1805 = vmatpush1.bf16.msra.mxu0 0
    %1806 = vmatprep.subr.bf16.mxu0 0
    %1807 = vmatpush1.bf16.msra.mxu0 0
    %1808 = vmatprep.subr.bf16.mxu0 0
    %1809 = vmatpush1.bf16.msra.mxu0 0
    %1810 = vmatprep.subr.bf16.mxu0 0
    %1811 = vmatpush1.bf16.msra.mxu0 0
    %1812 = vmatprep.subr.bf16.mxu0 0
    %1813 = vmatpush1.bf16.msra.mxu0 0
    %1814 = vmatprep.subr.bf16.mxu0 0
    %1815 = vmatpush1.bf16.msra.mxu0 0
    %1816 = vmatprep.subr.bf16.mxu0 0
    %1817 = vmatpush1.bf16.msra.mxu0 0
    %1818 = vmatprep.subr.bf16.mxu0 0
    %1819 = vmatpush1.bf16.msra.mxu0 0
    %1820 = vmatprep.mubr.bf16.mxu0 0
    %1821 = vmatmul.mubr.bf16.gmra.mrb[0].mxu0 %v1783
    %v1822 = vpop.f32.mrb[0].mxu0
    %v1823 = vadd.f32 0.0, %v1822
    %v1824 = vpop.f32.mrb[0].mxu0
    %v1825 = vpop.f32.mrb[0].mxu0
    %v1826 = vpop.f32.mrb[0].mxu0
    %1827 = vdwg.mxu0
    %v1829 = vsel %vm1144, %v1713, 0
    %v1832 = vsel %vm1738, %v1729, 0
    %1834 = vmatprep.subr.bf16.mxu0 0
    %1835 = vmatpush1.bf16.msra.mxu0 %v1832
    %1836 = vmatprep.subr.bf16.mxu0 0
    %1837 = vmatpush1.bf16.msra.mxu0 0
    %1838 = vmatprep.subr.bf16.mxu0 0
    %1839 = vmatpush1.bf16.msra.mxu0 0
    %1840 = vmatprep.subr.bf16.mxu0 0
    %1841 = vmatpush1.bf16.msra.mxu0 0
    %1842 = vmatprep.subr.bf16.mxu0 0
    %1843 = vmatpush1.bf16.msra.mxu0 0
    %1844 = vmatprep.subr.bf16.mxu0 0
    %1845 = vmatpush1.bf16.msra.mxu0 0
    %1846 = vmatprep.subr.bf16.mxu0 0
    %1847 = vmatpush1.bf16.msra.mxu0 0
    %1848 = vmatprep.subr.bf16.mxu0 0
    %1849 = vmatpush1.bf16.msra.mxu0 0
    %1850 = vmatprep.subr.bf16.mxu0 0
    %1851 = vmatpush1.bf16.msra.mxu0 0
    %1852 = vmatprep.subr.bf16.mxu0 0
    %1853 = vmatpush1.bf16.msra.mxu0 0
    %1854 = vmatprep.subr.bf16.mxu0 0
    %1855 = vmatpush1.bf16.msra.mxu0 0
    %1856 = vmatprep.subr.bf16.mxu0 0
    %1857 = vmatpush1.bf16.msra.mxu0 0
    %1858 = vmatprep.subr.bf16.mxu0 0
    %1859 = vmatpush1.bf16.msra.mxu0 0
    %1860 = vmatprep.subr.bf16.mxu0 0
    %1861 = vmatpush1.bf16.msra.mxu0 0
    %1862 = vmatprep.subr.bf16.mxu0 0
    %1863 = vmatpush1.bf16.msra.mxu0 0
    %1864 = vmatprep.subr.bf16.mxu0 0
    %1865 = vmatpush1.bf16.msra.mxu0 0
    %1866 = vmatprep.mubr.bf16.mxu0 0
    %1867 = vmatmul.mubr.bf16.gmra.mrb[0].mxu0 %v1829
    %v1868 = vpop.f32.mrb[0].mxu0
    %v1869 = vadd.f32 0.0, %v1868
    %v1870 = vpop.f32.mrb[0].mxu0
    %v1871 = vpop.f32.mrb[0].mxu0
    %v1872 = vpop.f32.mrb[0].mxu0
    %1873 = vdwg.mxu0
    %v1875 = vsel %vm1144, %v1714, 0
    %v1878 = vsel %vm1738, %v1730, 0
    %1880 = vmatprep.subr.bf16.mxu0 0
    %1881 = vmatpush1.bf16.msra.mxu0 %v1878
    %1882 = vmatprep.subr.bf16.mxu0 0
    %1883 = vmatpush1.bf16.msra.mxu0 0
    %1884 = vmatprep.subr.bf16.mxu0 0
    %1885 = vmatpush1.bf16.msra.mxu0 0
    %1886 = vmatprep.subr.bf16.mxu0 0
    %1887 = vmatpush1.bf16.msra.mxu0 0
    %1888 = vmatprep.subr.bf16.mxu0 0
    %1889 = vmatpush1.bf16.msra.mxu0 0
    %1890 = vmatprep.subr.bf16.mxu0 0
    %1891 = vmatpush1.bf16.msra.mxu0 0
    %1892 = vmatprep.subr.bf16.mxu0 0
    %1893 = vmatpush1.bf16.msra.mxu0 0
    %1894 = vmatprep.subr.bf16.mxu0 0
    %1895 = vmatpush1.bf16.msra.mxu0 0
    %1896 = vmatprep.subr.bf16.mxu0 0
    %1897 = vmatpush1.bf16.msra.mxu0 0
    %1898 = vmatprep.subr.bf16.mxu0 0
    %1899 = vmatpush1.bf16.msra.mxu0 0
    %1900 = vmatprep.subr.bf16.mxu0 0
    %1901 = vmatpush1.bf16.msra.mxu0 0
    %1902 = vmatprep.subr.bf16.mxu0 0
    %1903 = vmatpush1.bf16.msra.mxu0 0
    %1904 = vmatprep.subr.bf16.mxu0 0
    %1905 = vmatpush1.bf16.msra.mxu0 0
    %1906 = vmatprep.subr.bf16.mxu0 0
    %1907 = vmatpush1.bf16.msra.mxu0 0
    %1908 = vmatprep.subr.bf16.mxu0 0
    %1909 = vmatpush1.bf16.msra.mxu0 0
    %1910 = vmatprep.subr.bf16.mxu0 0
    %1911 = vmatpush1.bf16.msra.mxu0 0
    %1912 = vmatprep.mubr.bf16.mxu0 0
    %1913 = vmatmul.mubr.bf16.gmra.mrb[0].mxu0 %v1875
    %v1914 = vpop.f32.mrb[0].mxu0
    %v1915 = vadd.f32 0.0, %v1914
    %v1916 = vpop.f32.mrb[0].mxu0
    %v1917 = vpop.f32.mrb[0].mxu0
    %v1918 = vpop.f32.mrb[0].mxu0
    %1919 = vdwg.mxu0
    %v1921 = vsel %vm1144, %v1715, 0
    %v1924 = vsel %vm1738, %v1731, 0
    %1926 = vmatprep.subr.bf16.mxu0 0
    %1927 = vmatpush1.bf16.msra.mxu0 %v1924
    %1928 = vmatprep.subr.bf16.mxu0 0
    %1929 = vmatpush1.bf16.msra.mxu0 0
    %1930 = vmatprep.subr.bf16.mxu0 0
    %1931 = vmatpush1.bf16.msra.mxu0 0
    %1932 = vmatprep.subr.bf16.mxu0 0
    %1933 = vmatpush1.bf16.msra.mxu0 0
    %1934 = vmatprep.subr.bf16.mxu0 0
    %1935 = vmatpush1.bf16.msra.mxu0 0
    %1936 = vmatprep.subr.bf16.mxu0 0
    %1937 = vmatpush1.bf16.msra.mxu0 0
    %1938 = vmatprep.subr.bf16.mxu0 0
    %1939 = vmatpush1.bf16.msra.mxu0 0
    %1940 = vmatprep.subr.bf16.mxu0 0
    %1941 = vmatpush1.bf16.msra.mxu0 0
    %1942 = vmatprep.subr.bf16.mxu0 0
    %1943 = vmatpush1.bf16.msra.mxu0 0
    %1944 = vmatprep.subr.bf16.mxu0 0
    %1945 = vmatpush1.bf16.msra.mxu0 0
    %1946 = vmatprep.subr.bf16.mxu0 0
    %1947 = vmatpush1.bf16.msra.mxu0 0
    %1948 = vmatprep.subr.bf16.mxu0 0
    %1949 = vmatpush1.bf16.msra.mxu0 0
    %1950 = vmatprep.subr.bf16.mxu0 0
    %1951 = vmatpush1.bf16.msra.mxu0 0
    %1952 = vmatprep.subr.bf16.mxu0 0
    %1953 = vmatpush1.bf16.msra.mxu0 0
    %1954 = vmatprep.subr.bf16.mxu0 0
    %1955 = vmatpush1.bf16.msra.mxu0 0
    %1956 = vmatprep.subr.bf16.mxu0 0
    %1957 = vmatpush1.bf16.msra.mxu0 0
    %1958 = vmatprep.mubr.bf16.mxu0 0
    %1959 = vmatmul.mubr.bf16.gmra.mrb[0].mxu0 %v1921
    %v1960 = vpop.f32.mrb[0].mxu0
    %v1961 = vadd.f32 0.0, %v1960
    %v1962 = vpop.f32.mrb[0].mxu0
    %v1963 = vpop.f32.mrb[0].mxu0
    %v1964 = vpop.f32.mrb[0].mxu0
    %1965 = vdwg.mxu0
    %v1967 = vsel %vm1144, %v1716, 0
    %v1970 = vsel %vm1738, %v1732, 0
    %1972 = vmatprep.subr.bf16.mxu0 0
    %1973 = vmatpush1.bf16.msra.mxu0 %v1970
    %1974 = vmatprep.subr.bf16.mxu0 0
    %1975 = vmatpush1.bf16.msra.mxu0 0
    %1976 = vmatprep.subr.bf16.mxu0 0
    %1977 = vmatpush1.bf16.msra.mxu0 0
    %1978 = vmatprep.subr.bf16.mxu0 0
    %1979 = vmatpush1.bf16.msra.mxu0 0
    %1980 = vmatprep.subr.bf16.mxu0 0
    %1981 = vmatpush1.bf16.msra.mxu0 0
    %1982 = vmatprep.subr.bf16.mxu0 0
    %1983 = vmatpush1.bf16.msra.mxu0 0
    %1984 = vmatprep.subr.bf16.mxu0 0
    %1985 = vmatpush1.bf16.msra.mxu0 0
    %1986 = vmatprep.subr.bf16.mxu0 0
    %1987 = vmatpush1.bf16.msra.mxu0 0
    %1988 = vmatprep.subr.bf16.mxu0 0
    %1989 = vmatpush1.bf16.msra.mxu0 0
    %1990 = vmatprep.subr.bf16.mxu0 0
    %1991 = vmatpush1.bf16.msra.mxu0 0
    %1992 = vmatprep.subr.bf16.mxu0 0
    %1993 = vmatpush1.bf16.msra.mxu0 0
    %1994 = vmatprep.subr.bf16.mxu0 0
    %1995 = vmatpush1.bf16.msra.mxu0 0
    %1996 = vmatprep.subr.bf16.mxu0 0
    %1997 = vmatpush1.bf16.msra.mxu0 0
    %1998 = vmatprep.subr.bf16.mxu0 0
    %1999 = vmatpush1.bf16.msra.mxu0 0
    %2000 = vmatprep.subr.bf16.mxu0 0
    %2001 = vmatpush1.bf16.msra.mxu0 0
    %2002 = vmatprep.subr.bf16.mxu0 0
    %2003 = vmatpush1.bf16.msra.mxu0 0
    %2004 = vmatprep.mubr.bf16.mxu0 0
    %2005 = vmatmul.mubr.bf16.gmra.mrb[0].mxu0 %v1967
    %v2006 = vpop.f32.mrb[0].mxu0
    %v2007 = vadd.f32 0.0, %v2006
    %v2008 = vpop.f32.mrb[0].mxu0
    %v2009 = vpop.f32.mrb[0].mxu0
    %v2010 = vpop.f32.mrb[0].mxu0
    %2011 = vdwg.mxu0
    %v2013 = vsel %vm1144, %v1717, 0
    %v2016 = vsel %vm1738, %v1733, 0
    %2018 = vmatprep.subr.bf16.mxu0 0
    %2019 = vmatpush1.bf16.msra.mxu0 %v2016
    %2020 = vmatprep.subr.bf16.mxu0 0
    %2021 = vmatpush1.bf16.msra.mxu0 0
    %2022 = vmatprep.subr.bf16.mxu0 0
    %2023 = vmatpush1.bf16.msra.mxu0 0
    %2024 = vmatprep.subr.bf16.mxu0 0
    %2025 = vmatpush1.bf16.msra.mxu0 0
    %2026 = vmatprep.subr.bf16.mxu0 0
    %2027 = vmatpush1.bf16.msra.mxu0 0
    %2028 = vmatprep.subr.bf16.mxu0 0
    %2029 = vmatpush1.bf16.msra.mxu0 0
    %2030 = vmatprep.subr.bf16.mxu0 0
    %2031 = vmatpush1.bf16.msra.mxu0 0
    %2032 = vmatprep.subr.bf16.mxu0 0
    %2033 = vmatpush1.bf16.msra.mxu0 0
    %2034 = vmatprep.subr.bf16.mxu0 0
    %2035 = vmatpush1.bf16.msra.mxu0 0
    %2036 = vmatprep.subr.bf16.mxu0 0
    %2037 = vmatpush1.bf16.msra.mxu0 0
    %2038 = vmatprep.subr.bf16.mxu0 0
    %2039 = vmatpush1.bf16.msra.mxu0 0
    %2040 = vmatprep.subr.bf16.mxu0 0
    %2041 = vmatpush1.bf16.msra.mxu0 0
    %2042 = vmatprep.subr.bf16.mxu0 0
    %2043 = vmatpush1.bf16.msra.mxu0 0
    %2044 = vmatprep.subr.bf16.mxu0 0
    %2045 = vmatpush1.bf16.msra.mxu0 0
    %2046 = vmatprep.subr.bf16.mxu0 0
    %2047 = vmatpush1.bf16.msra.mxu0 0
    %2048 = vmatprep.subr.bf16.mxu0 0
    %2049 = vmatpush1.bf16.msra.mxu0 0
    %2050 = vmatprep.mubr.bf16.mxu0 0
    %2051 = vmatmul.mubr.bf16.gmra.mrb[0].mxu0 %v2013
    %v2052 = vpop.f32.mrb[0].mxu0
    %v2053 = vadd.f32 0.0, %v2052
    %v2054 = vpop.f32.mrb[0].mxu0
    %v2055 = vpop.f32.mrb[0].mxu0
    %v2056 = vpop.f32.mrb[0].mxu0
    %2057 = vdwg.mxu0
    %v2059 = vsel %vm1144, %v1718, 0
    %v2062 = vsel %vm1738, %v1734, 0
    %2064 = vmatprep.subr.bf16.mxu0 0
    %2065 = vmatpush1.bf16.msra.mxu0 %v2062
    %2066 = vmatprep.subr.bf16.mxu0 0
    %2067 = vmatpush1.bf16.msra.mxu0 0
    %2068 = vmatprep.subr.bf16.mxu0 0
    %2069 = vmatpush1.bf16.msra.mxu0 0
    %2070 = vmatprep.subr.bf16.mxu0 0
    %2071 = vmatpush1.bf16.msra.mxu0 0
    %2072 = vmatprep.subr.bf16.mxu0 0
    %2073 = vmatpush1.bf16.msra.mxu0 0
    %2074 = vmatprep.subr.bf16.mxu0 0
    %2075 = vmatpush1.bf16.msra.mxu0 0
    %2076 = vmatprep.subr.bf16.mxu0 0
    %2077 = vmatpush1.bf16.msra.mxu0 0
    %2078 = vmatprep.subr.bf16.mxu0 0
    %2079 = vmatpush1.bf16.msra.mxu0 0
    %2080 = vmatprep.subr.bf16.mxu0 0
    %2081 = vmatpush1.bf16.msra.mxu0 0
    %2082 = vmatprep.subr.bf16.mxu0 0
    %2083 = vmatpush1.bf16.msra.mxu0 0
    %2084 = vmatprep.subr.bf16.mxu0 0
    %2085 = vmatpush1.bf16.msra.mxu0 0
    %2086 = vmatprep.subr.bf16.mxu0 0
    %2087 = vmatpush1.bf16.msra.mxu0 0
    %2088 = vmatprep.subr.bf16.mxu0 0
    %2089 = vmatpush1.bf16.msra.mxu0 0
    %2090 = vmatprep.subr.bf16.mxu0 0
    %2091 = vmatpush1.bf16.msra.mxu0 0
    %2092 = vmatprep.subr.bf16.mxu0 0
    %2093 = vmatpush1.bf16.msra.mxu0 0
    %2094 = vmatprep.subr.bf16.mxu0 0
    %2095 = vmatpush1.bf16.msra.mxu0 0
    %2096 = vmatprep.mubr.bf16.mxu0 0
    %2097 = vmatmul.mubr.bf16.gmra.mrb[0].mxu0 %v2059
    %v2098 = vpop.f32.mrb[0].mxu0
    %v2099 = vadd.f32 0.0, %v2098
    %v2100 = vpop.f32.mrb[0].mxu0
    %v2101 = vpop.f32.mrb[0].mxu0
    %v2102 = vpop.f32.mrb[0].mxu0
    %2103 = vdwg.mxu0
    %v2104 = vld [vmem:[#allocation4] sm:$0xff]
    %v2105 = vld [vmem:[#allocation4 + $0x8] sm:$0xff]
    %v2106 = vld [vmem:[#allocation4 + $0x10] sm:$0xff]
    %v2107 = vld [vmem:[#allocation4 + $0x18] sm:$0xff]
    %v2108 = vld [vmem:[#allocation4 + $0x20] sm:$0xff]
    %v2109 = vld [vmem:[#allocation4 + $0x28] sm:$0xff]
    %v2110 = vld [vmem:[#allocation4 + $0x30] sm:$0xff]
    %v2111 = vld [vmem:[#allocation4 + $0x38] sm:$0xff]
    %2113 = vset.pattern.permute.xlu0 0
    %2114 = vperm.xlu0 %2113, %v1575
    %v2115 = vpop.permute.xlu0 %2114
    %2118 = vset.pattern.permute.xlu0 0
    %2119 = vperm.xlu0 %2118, %v1577
    %v2120 = vpop.permute.xlu0 %2119
    %2123 = vset.pattern.permute.xlu0 0
    %2124 = vperm.xlu0 %2123, %v1579
    %v2125 = vpop.permute.xlu0 %2124
    %2128 = vset.pattern.permute.xlu0 0
    %2129 = vperm.xlu0 %2128, %v1581
    %v2130 = vpop.permute.xlu0 %2129
    %2133 = vset.pattern.permute.xlu0 0
    %2134 = vperm.xlu0 %2133, %v1583
    %v2135 = vpop.permute.xlu0 %2134
    %2138 = vset.pattern.permute.xlu0 0
    %2139 = vperm.xlu0 %2138, %v1585
    %v2140 = vpop.permute.xlu0 %2139
    %2143 = vset.pattern.permute.xlu0 0
    %2144 = vperm.xlu0 %2143, %v1587
    %v2145 = vpop.permute.xlu0 %2144
    %2148 = vset.pattern.permute.xlu0 0
    %2149 = vperm.xlu0 %2148, %v1589
    %v2150 = vpop.permute.xlu0 %2149
    %v2152 = vmul.f32 %v2115, %v2104
    %v2153 = vmul.f32 %v2120, %v2105
    %v2154 = vmul.f32 %v2125, %v2106
    %v2155 = vmul.f32 %v2130, %v2107
    %v2156 = vmul.f32 %v2135, %v2108
    %v2157 = vmul.f32 %v2140, %v2109
    %v2158 = vmul.f32 %v2145, %v2110
    %v2159 = vmul.f32 %v2150, %v2111
    %v2160 = vadd.f32 %v2152, %v1777
    %v2161 = vadd.f32 %v2153, %v1823
    %v2162 = vadd.f32 %v2154, %v1869
    %v2163 = vadd.f32 %v2155, %v1915
    %v2164 = vadd.f32 %v2156, %v1961
    %v2165 = vadd.f32 %v2157, %v2007
    %v2166 = vadd.f32 %v2158, %v2053
    %v2167 = vadd.f32 %v2159, %v2099
    %2168 = vst.msk [vmem:[#allocation4] sm:$0xff] %vm1144, %v2160
    %2169 = vst.msk [vmem:[#allocation4 + $0x8] sm:$0xff] %vm1144, %v2161
    %2170 = vst.msk [vmem:[#allocation4 + $0x10] sm:$0xff] %vm1144, %v2162
    %2171 = vst.msk [vmem:[#allocation4 + $0x18] sm:$0xff] %vm1144, %v2163
    %2172 = vst.msk [vmem:[#allocation4 + $0x20] sm:$0xff] %vm1144, %v2164
    %2173 = vst.msk [vmem:[#allocation4 + $0x28] sm:$0xff] %vm1144, %v2165
    %2174 = vst.msk [vmem:[#allocation4 + $0x30] sm:$0xff] %vm1144, %v2166
    %2175 = vst.msk [vmem:[#allocation4 + $0x38] sm:$0xff] %vm1144, %v2167
    %2176 = vst.msk [vmem:[#allocation2] sm:$0xff] %vm1702, %v1558
    %2177 = vst.msk [vmem:[#allocation2 + $0x8] sm:$0xff] %vm1702, %v1559
    %2178 = vst.msk [vmem:[#allocation2 + $0x10] sm:$0xff] %vm1702, %v1560
    %2179 = vst.msk [vmem:[#allocation2 + $0x18] sm:$0xff] %vm1702, %v1561
    %2180 = vst.msk [vmem:[#allocation2 + $0x20] sm:$0xff] %vm1702, %v1562
    %2181 = vst.msk [vmem:[#allocation2 + $0x28] sm:$0xff] %vm1702, %v1563
    %2182 = vst.msk [vmem:[#allocation2 + $0x30] sm:$0xff] %vm1702, %v1564
    %2183 = vst.msk [vmem:[#allocation2 + $0x38] sm:$0xff] %vm1702, %v1565
  $region25: #{gpt_forward.12} parent=0 // pred_fallthru
    _
  // Predicated region
  $region26: #{gpt_forward.12} parent=0 // pred_check
    %p2184 = pneg %p15
  $region27: #{gpt_forward.12} parent=0 // pred_check_branch
    %2186 = sbr.rel (%p2184) target = $region29
  $region28: #{gpt_forward.12} parent=0 // pred_region
    %v2187 = vld [vmem:[#allocation4] sm:$0xff]
    %v2188 = vld [vmem:[#allocation4 + $0x8] sm:$0xff]
    %v2189 = vld [vmem:[#allocation4 + $0x10] sm:$0xff]
    %v2190 = vld [vmem:[#allocation4 + $0x18] sm:$0xff]
    %v2191 = vld [vmem:[#allocation4 + $0x20] sm:$0xff]
    %v2192 = vld [vmem:[#allocation4 + $0x28] sm:$0xff]
    %v2193 = vld [vmem:[#allocation4 + $0x30] sm:$0xff]
    %v2194 = vld [vmem:[#allocation4 + $0x38] sm:$0xff]
    %v2195 = vld [vmem:[#allocation3] sm:$0xff]
    %v2196 = vld [vmem:[#allocation3 + $0x8] sm:$0xff]
    %v2197 = vld [vmem:[#allocation3 + $0x10] sm:$0xff]
    %v2198 = vld [vmem:[#allocation3 + $0x18] sm:$0xff]
    %v2199 = vld [vmem:[#allocation3 + $0x20] sm:$0xff]
    %v2200 = vld [vmem:[#allocation3 + $0x28] sm:$0xff]
    %v2201 = vld [vmem:[#allocation3 + $0x30] sm:$0xff]
    %v2202 = vld [vmem:[#allocation3 + $0x38] sm:$0xff]
    %2204 = vset.pattern.permute.xlu0 0
    %2205 = vperm.xlu0 %2204, %v2195
    %v2206 = vpop.permute.xlu0 %2205
    %2209 = vset.pattern.permute.xlu0 0
    %2210 = vperm.xlu0 %2209, %v2196
    %v2211 = vpop.permute.xlu0 %2210
    %2214 = vset.pattern.permute.xlu0 0
    %2215 = vperm.xlu0 %2214, %v2197
    %v2216 = vpop.permute.xlu0 %2215
    %2219 = vset.pattern.permute.xlu0 0
    %2220 = vperm.xlu0 %2219, %v2198
    %v2221 = vpop.permute.xlu0 %2220
    %2224 = vset.pattern.permute.xlu0 0
    %2225 = vperm.xlu0 %2224, %v2199
    %v2226 = vpop.permute.xlu0 %2225
    %2229 = vset.pattern.permute.xlu0 0
    %2230 = vperm.xlu0 %2229, %v2200
    %v2231 = vpop.permute.xlu0 %2230
    %2234 = vset.pattern.permute.xlu0 0
    %2235 = vperm.xlu0 %2234, %v2201
    %v2236 = vpop.permute.xlu0 %2235
    %2239 = vset.pattern.permute.xlu0 0
    %2240 = vperm.xlu0 %2239, %v2202
    %v2241 = vpop.permute.xlu0 %2240
    %v2243 = vrcp.pop %v2206
    %v2244 = vmul.f32 %v2187, %v2243
    %v2245 = vrcp.pop %v2211
    %v2246 = vmul.f32 %v2188, %v2245
    %v2247 = vrcp.pop %v2216
    %v2248 = vmul.f32 %v2189, %v2247
    %v2249 = vrcp.pop %v2221
    %v2250 = vmul.f32 %v2190, %v2249
    %v2251 = vrcp.pop %v2226
    %v2252 = vmul.f32 %v2191, %v2251
    %v2253 = vrcp.pop %v2231
    %v2254 = vmul.f32 %v2192, %v2253
    %v2255 = vrcp.pop %v2236
    %v2256 = vmul.f32 %v2193, %v2255
    %v2257 = vrcp.pop %v2241
    %v2258 = vmul.f32 %v2194, %v2257
    %vm2259 = vcmask 64512
    %2260 = vst.msk [vmem:[%s3] sm:$0xff] %vm2259, %v2244
    %2261 = vst.msk [vmem:[%s3 + $0x8] sm:$0xff] %vm2259, %v2246
    %2262 = vst.msk [vmem:[%s3 + $0x10] sm:$0xff] %vm2259, %v2248
    %2263 = vst.msk [vmem:[%s3 + $0x18] sm:$0xff] %vm2259, %v2250
    %2264 = vst.msk [vmem:[%s3 + $0x20] sm:$0xff] %vm2259, %v2252
    %2265 = vst.msk [vmem:[%s3 + $0x28] sm:$0xff] %vm2259, %v2254
    %2266 = vst.msk [vmem:[%s3 + $0x30] sm:$0xff] %vm2259, %v2256
    %2267 = vst.msk [vmem:[%s3 + $0x38] sm:$0xff] %vm2259, %v2258
  $region29: #{gpt_forward.12} parent=0 // pred_fallthru
    _
  // Predicated region
  $region30: #{gpt_forward.12} parent=0 // pred_check
    _
  $region31: #{gpt_forward.12} parent=0 // pred_check_branch
    %2269 = sbr.rel (0) target = $region33
  $region32: #{gpt_forward.12} parent=0 // pred_region
    _
  $region33: #{gpt_forward.12} parent=0 // pred_fallthru
    _
  // Predicated region
  $region34: #{gpt_forward.12} parent=0 // pred_check
    _
  $region35: #{gpt_forward.12} parent=0 // pred_check_branch
    %2271 = sbr.rel (0) target = $region37
  $region36: #{gpt_forward.12} parent=0 // pred_region
    _
  $region37: #{gpt_forward.12} parent=0 // pred_fallthru
    _

</llo_original>
